<compile_context>
chip_gen: v6e
topology: v6e:2x2x1
jax: 0.10.0
libtpu: 0.0.40
codegen_flags: <defaults>
</compile_context>

<pallas_src>
import math

import numpy as np
import jax
import jax.numpy as jnp
from jax import lax
from jax.experimental import pallas as pl
from jax.experimental.pallas import tpu as pltpu

KS = 3          # kernel_size
EPS = 1e-5      # BatchNorm3d default eps

# Abramowitz & Stegun 7.1.26 erf constants (|err| <= 1.5e-7, well inside the 2e-4 tolerance).
_A1, _A2, _A3, _A4, _A5 = 0.254829592, -0.284496736, 1.421413741, -1.453152027, 1.061405429
_PE = 0.3275911
_INV_SQRT2 = 0.7071067811865476


def _gelu_erf(x):
    """nn.GELU() (erf form). exp on the EUP; the 1/(1+p|u|) uses the approximate EUP
    reciprocal + ONE Newton refinement (rel err ~6e-8) so the divide stays off the VPU
    without endangering the 2e-4 tolerance."""
    u = x * _INV_SQRT2
    sgn = jnp.where(u >= 0.0, 1.0, -1.0)
    au = jnp.abs(u)
    den = 1.0 + _PE * au
    t = pl.reciprocal(den, approx=True)          # EUP vrcp (free slot)
    t = t * (2.0 - den * t)                      # one Newton step -> effectively exact
    poly = ((((_A5 * t + _A4) * t + _A3) * t + _A2) * t + _A1) * t
    erf_u = sgn * (1.0 - poly * jnp.exp(-(u * u)))
    return 0.5 * x * (1.0 + erf_u)


def _build_tap_weights(w_pt, w):
    """PyTorch conv weight (Cout, Cin, 3, 3, 3) -> (9, W*C, W*C): one small matrix per (kd, kh).

    bw[kd*3+kh][(w_in*C + ci), (w_out*C + co)] = w_pt[co, ci, kd, kh, kw]
      with kw = w_in - w_out + 1 in {0,1,2}; out-of-range kw taps are zero entries
      (implements 'same' padding in W).  'same' padding in D and H is handled by the
      zero halo rows of the padded activation slab the kernel reads from.
    """
    c = w_pt.shape[1]
    wi = jnp.arange(w, dtype=jnp.int32)
    mats = []
    for kd in range(KS):
        for kh in range(KS):
            acc = jnp.zeros((w * c, w * c), jnp.float32)
            for kw in range(KS):
                sel = (wi[:, None] == wi[None, :] + (kw - 1)).astype(jnp.float32)   # (Win, Wout)
                wm = w_pt[:, :, kd, kh, kw].T.astype(jnp.float32)                   # (Cin, Cout)
                acc = acc + jnp.kron(sel, wm)
            mats.append(acc)
    return jnp.stack(mats, axis=0)


def hsi_conv3d_block(x_ncdhw, w1_pt, w2_pt, g1, b1, g2, b2):
    """Forward of HSI_Conv3dBlock (training-mode BN).  x_ncdhw: (N, C, D, H, W) f32."""
    n, c, d, h, w = x_ncdhw.shape
    dp, hp_ = d + 2, h + 2          # D/H padded by one on each side
    wc = w * c                      # lane width of the slab (64 for the demo)
    rp = n * dp * hp_               # rows of the padded slab
    rv = rp - 2 * hp_ - 2           # rows produced by the 9 shifted matmuls (incl. junk rows)
    halo = hp_ + 1                  # leading / trailing halo rows of the slab
    cnt = float(n * d * h * w)      # BN element count per channel
    inv_cnt = 1.0 / cnt

    # ---- layout plumbing (wrapper-side, cheap XLA): NCDHW -> channel-last, zero-pad D & H,
    #      flatten to rows=(n, d_pad, h_pad), lanes=(w, c) ----
    x_cl = jnp.transpose(x_ncdhw, (0, 2, 3, 4, 1)).astype(jnp.float32)
    xp = jnp.pad(x_cl, ((0, 0), (1, 1), (1, 1), (0, 0), (0, 0))).reshape(rp, wc)

    # ---- small per-(kd, kh) tap weights (~147 KB per conv instead of ~3 MB banded) ----
    bw1 = _build_tap_weights(w1_pt, w)
    bw2 = _build_tap_weights(w2_pt, w)

    # gamma / beta tiled over W so they broadcast directly on the (rows, W*C) layout
    g1r, b1r, g2r, b2r = (jnp.tile(jnp.asarray(p, jnp.float32), w).reshape(1, wc)
                          for p in (g1, b1, g2, b2))

    # valid-row mask for the shifted-matmul output (zeros the junk rows between H/D groups)
    r0 = np.arange(rv)
    mask_np = (((r0 % hp_) < h) & (((r0 // hp_) % dp) < d)).astype(np.float32)
    mask = jnp.asarray(mask_np).reshape(rv, 1)

    # channel group-sum + broadcast matrix: G[i, j] = (i % C == j % C)
    li = np.arange(wc)
    gsum = jnp.asarray((li[:, None] % c == li[None, :] % c).astype(np.float32))

    # static row offsets of the 9 (kd, kh) taps into the padded slab
    offs = tuple(kd * hp_ + kh for kd in range(KS) for kh in range(KS))

    def kernel(xp_ref, bw1_ref, bw2_ref, g1_ref, b1_ref, g2_ref, b2_ref,
               mask_ref, gsum_ref, out_ref, act_scr):
        mask_v = mask_ref[...]                                       # (Rv, 1)

        def conv(src_ref, bw_ref):
            # 9 shifted (Rv, WC) x (WC, WC) matmuls; f32 operands + f32 accumulate
            # (same precision configuration that already passed the 2e-4 check).
            acc = jnp.dot(src_ref[pl.ds(offs[0], rv), :], bw_ref[0],
                          preferred_element_type=jnp.float32)
            for t in range(1, KS * KS):
                acc = acc + jnp.dot(src_ref[pl.ds(offs[t], rv), :], bw_ref[t],
                                    preferred_element_type=jnp.float32)
            return acc

        def bn_scale_shift(v, g_ref, bt_ref):
            # masked sublane reductions (XLU/VPU) -- the MXU stays dedicated to the convs
            vm = v * mask_v                                          # junk rows -> 0
            colsum = jnp.sum(vm, axis=0, keepdims=True)              # (1, WC)
            colsq = jnp.sum(vm * v, axis=0, keepdims=True)           # (1, WC)
            # tiny K=WC channel fold + broadcast; two independent dots, no serialized chain
            ch_sum = jnp.dot(colsum, gsum_ref[...], preferred_element_type=jnp.float32)
            ch_sq = jnp.dot(colsq, gsum_ref[...], preferred_element_type=jnp.float32)
            mean = ch_sum * inv_cnt
            var = jnp.maximum(ch_sq * inv_cnt - mean * mean, 0.0)    # biased var (train mode)
            scale = g_ref[...] * lax.rsqrt(var + EPS)
            shift = bt_ref[...] - mean * scale
            return scale, shift

        # residual base / fully-defined output; halo rows are stripped by the wrapper
        out_ref[...] = xp_ref[...]

        # ---- conv1 -> BN1 (batch stats) -> GELU ----
        y = conv(xp_ref, bw1_ref)
        s1, t1 = bn_scale_shift(y, g1_ref, b1_ref)
        a = _gelu_erf(y * s1 + t1)

        # stage conv2's input: ONE full-width shifted store.  Junk rows of `a` are masked to
        # zero, so interior values land at padded position (d+1, h+1) and every halo row of
        # the slab stays zero; only the head/tail halo blocks need explicit zeroing.
        zeros_halo = jnp.zeros((halo, wc), jnp.float32)
        act_scr[pl.ds(0, halo), :] = zeros_halo
        act_scr[pl.ds(halo + rv, halo), :] = zeros_halo
        act_scr[pl.ds(halo, rv), :] = a * mask_v

        # ---- conv2 -> BN2 -> residual add (drop_path = 0 -> identity) ----
        z = conv(act_scr, bw2_ref)
        s2, t2 = bn_scale_shift(z, g2_ref, b2_ref)
        out_ref[pl.ds(halo, rv), :] = xp_ref[pl.ds(halo, rv), :] + (z * s2 + t2)

    def full_spec(shape):
        nd = len(shape)
        return pl.BlockSpec(shape, lambda i, _nd=nd: (0,) * _nd)

    in_arrays = (xp, bw1, bw2, g1r, b1r, g2r, b2r, mask, gsum)

    # Total VMEM (inputs double-buffered + output + scratch) < 1 MiB -> default scoped VMEM
    # limit is plenty on every generation; no vmem_limit_bytes override needed any more.
    out_pad = pl.pallas_call(
        kernel,
        out_shape=jax.ShapeDtypeStruct((rp, wc), jnp.float32),
        grid_spec=pltpu.PrefetchScalarGridSpec(
            num_scalar_prefetch=0,
            grid=(1,),          # training-mode BN needs global (N,D,H,W) statistics
            in_specs=[full_spec(a.shape) for a in in_arrays],
            out_specs=full_spec((rp, wc)),
            scratch_shapes=[pltpu.VMEM((rp, wc), jnp.float32)],
        ),
        compiler_params=pltpu.CompilerParams(
            dimension_semantics=("arbitrary",),
        ),
    )(*in_arrays)

    # strip the D/H halo rows (free XLA slice) and go back to NCDHW
    out = out_pad.reshape(n, dp, hp_, w, c)[:, 1:d + 1, 1:h + 1, :, :]
    return jnp.transpose(out, (0, 4, 1, 2, 3))


def reference_forward(x_ncdhw, w1_pt, w2_pt, g1, b1, g2, b2):
    """Pure-JAX reference (same math as the PyTorch module in train mode)."""
    x = jnp.transpose(x_ncdhw, (0, 2, 3, 4, 1))
    w1 = jnp.transpose(w1_pt, (2, 3, 4, 1, 0))
    w2 = jnp.transpose(w2_pt, (2, 3, 4, 1, 0))
    dn = lax.conv_dimension_numbers(x.shape, w1.shape, ("NDHWC", "DHWIO", "NDHWC"))

    def conv(v, wgt):
        return lax.conv_general_dilated(v, wgt, (1, 1, 1), "SAME",
                                        dimension_numbers=dn)

    def bn(v, g, b):
        mean = jnp.mean(v, axis=(0, 1, 2, 3), keepdims=True)
        var = jnp.mean((v - mean) ** 2, axis=(0, 1, 2, 3), keepdims=True)
        return ((v - mean) * lax.rsqrt(var + EPS) * g.reshape(1, 1, 1, 1, -1)
                + b.reshape(1, 1, 1, 1, -1))

    y = conv(x, w1)
    y = bn(y, g1, b1)
    y = 0.5 * y * (1.0 + jax.scipy.special.erf(y / math.sqrt(2.0)))
    z = conv(y, w2)
    z = bn(z, g2, b2)
    out = x + z
    return jnp.transpose(out, (0, 4, 1, 2, 3))


if __name__ == "__main__":
    key = jax.random.PRNGKey(0)
    kx, k1, k2 = jax.random.split(key, 3)

    dim = 8                        # channels (= Conv3d dim)
    N, D, H, W = 2, 6, 8, 8        # batch, depth (spectral bands), height, width
    x = jax.random.normal(kx, (N, dim, D, H, W), jnp.float32)

    # deterministic parameter init (kaiming-uniform-like scale for the convs)
    fan_in = dim * KS * KS * KS
    bound = 1.0 / math.sqrt(fan_in)
    w1_pt = jax.random.uniform(k1, (dim, dim, KS, KS, KS), jnp.float32, -bound, bound)
    w2_pt = jax.random.uniform(k2, (dim, dim, KS, KS, KS), jnp.float32, -bound, bound)

    ar = jnp.arange(dim, dtype=jnp.float32)
    g1 = 1.0 + 0.05 * ar
    b1 = 0.02 * ar - 0.05
    g2 = 1.0 - 0.03 * ar
    b2 = 0.01 * ar + 0.02

    out = jax.block_until_ready(hsi_conv3d_block(x, w1_pt, w2_pt, g1, b1, g2, b2))
    ref = jax.block_until_ready(reference_forward(x, w1_pt, w2_pt, g1, b1, g2, b2))

    np.testing.assert_allclose(np.asarray(out), np.asarray(ref), rtol=2e-4, atol=2e-4)
    print("KERNEL_OK")
</pallas_src>

<mosaic_0001>
module attributes {stable_mosaic.version = 11 : i64} {
  func.func @kernel(%arg0: i32, %arg1: memref<160x64xf32, #tpu.memory_space<vmem>>, %arg2: memref<9x64x64xf32, #tpu.memory_space<vmem>>, %arg3: memref<9x64x64xf32, #tpu.memory_space<vmem>>, %arg4: memref<1x64xf32, #tpu.memory_space<vmem>>, %arg5: memref<1x64xf32, #tpu.memory_space<vmem>>, %arg6: memref<1x64xf32, #tpu.memory_space<vmem>>, %arg7: memref<1x64xf32, #tpu.memory_space<vmem>>, %arg8: memref<138x1xf32, #tpu.memory_space<vmem>>, %arg9: memref<64x64xf32, #tpu.memory_space<vmem>>, %arg10: memref<160x64xf32, #tpu.memory_space<vmem>>, %arg11: memref<160x64xf32, #tpu.memory_space<vmem>>) attributes {dimension_semantics = [#tpu.dimension_semantics<arbitrary>], iteration_bounds = array<i64: 1>, scalar_prefetch = 0 : i64, scratch_operands = 1 : i64, tpu.core_type = #tpu.core_type<tc>, window_params = [{pipeline_mode = #tpu.pipeline_mode<synchronous>, transform_indices = @transform_0, window_bounds = array<i64: 160, 64>}, {pipeline_mode = #tpu.pipeline_mode<synchronous>, transform_indices = @transform_1, window_bounds = array<i64: 9, 64, 64>}, {pipeline_mode = #tpu.pipeline_mode<synchronous>, transform_indices = @transform_2, window_bounds = array<i64: 9, 64, 64>}, {pipeline_mode = #tpu.pipeline_mode<synchronous>, transform_indices = @transform_3, window_bounds = array<i64: 1, 64>}, {pipeline_mode = #tpu.pipeline_mode<synchronous>, transform_indices = @transform_4, window_bounds = array<i64: 1, 64>}, {pipeline_mode = #tpu.pipeline_mode<synchronous>, transform_indices = @transform_5, window_bounds = array<i64: 1, 64>}, {pipeline_mode = #tpu.pipeline_mode<synchronous>, transform_indices = @transform_6, window_bounds = array<i64: 1, 64>}, {pipeline_mode = #tpu.pipeline_mode<synchronous>, transform_indices = @transform_7, window_bounds = array<i64: 138, 1>}, {pipeline_mode = #tpu.pipeline_mode<synchronous>, transform_indices = @transform_8, window_bounds = array<i64: 64, 64>}, {pipeline_mode = #tpu.pipeline_mode<synchronous>, transform_indices = @transform_9, window_bounds = array<i64: 160, 64>}]} {
    %c0 = arith.constant 0 : index
    %c0_0 = arith.constant 0 : index
    %0 = vector.load %arg8[%c0, %c0_0] : memref<138x1xf32, #tpu.memory_space<vmem>>, vector<138x1xf32>
    %c0_1 = arith.constant 0 : index
    %c0_2 = arith.constant 0 : index
    %1 = vector.load %arg1[%c0_1, %c0_2] : memref<160x64xf32, #tpu.memory_space<vmem>>, vector<160x64xf32>
    %c0_3 = arith.constant 0 : index
    %c0_4 = arith.constant 0 : index
    %2 = vector.load %arg10[%c0_3, %c0_4] : memref<160x64xf32, #tpu.memory_space<vmem>>, vector<160x64xf32>
    tpu.vector_store %arg10[%c0_3, %c0_4], %1 {strides = array<i32>} : memref<160x64xf32, #tpu.memory_space<vmem>>, vector<160x64xf32>,
    %c0_5 = arith.constant 0 : index
    %c0_6 = arith.constant 0 : index
    %3 = vector.load %arg1[%c0_5, %c0_6] : memref<160x64xf32, #tpu.memory_space<vmem>>, vector<138x64xf32>
    %c0_7 = arith.constant 0 : index
    %c0_8 = arith.constant 0 : index
    %c0_9 = arith.constant 0 : index
    %4 = vector.load %arg2[%c0_7, %c0_8, %c0_9] : memref<9x64x64xf32, #tpu.memory_space<vmem>>, vector<1x64x64xf32>
    %5 = vector.shape_cast %4 : vector<1x64x64xf32> to vector<64x64xf32>
    %cst = arith.constant dense<0.000000e+00> : vector<138x64xf32>
    %6 = tpu.matmul %3, %5, %cst {dimension_numbers = #tpu.dot_dimension_numbers<[1], [0], [0], [1], [0, 0, 1, 1], [], []>} : vector<138x64xf32>, vector<64x64xf32>, vector<138x64xf32> -> vector<138x64xf32>
    %c1 = arith.constant 1 : index
    %c0_10 = arith.constant 0 : index
    %7 = vector.load %arg1[%c1, %c0_10] : memref<160x64xf32, #tpu.memory_space<vmem>>, vector<138x64xf32>
    %c1_11 = arith.constant 1 : index
    %c0_12 = arith.constant 0 : index
    %c0_13 = arith.constant 0 : index
    %8 = vector.load %arg2[%c1_11, %c0_12, %c0_13] : memref<9x64x64xf32, #tpu.memory_space<vmem>>, vector<1x64x64xf32>
    %9 = vector.shape_cast %8 : vector<1x64x64xf32> to vector<64x64xf32>
    %cst_14 = arith.constant dense<0.000000e+00> : vector<138x64xf32>
    %10 = tpu.matmul %7, %9, %cst_14 {dimension_numbers = #tpu.dot_dimension_numbers<[1], [0], [0], [1], [0, 0, 1, 1], [], []>} : vector<138x64xf32>, vector<64x64xf32>, vector<138x64xf32> -> vector<138x64xf32>
    %11 = arith.addf %6, %10 : vector<138x64xf32>
    %c2 = arith.constant 2 : index
    %c0_15 = arith.constant 0 : index
    %12 = vector.load %arg1[%c2, %c0_15] : memref<160x64xf32, #tpu.memory_space<vmem>>, vector<138x64xf32>
    %c2_16 = arith.constant 2 : index
    %c0_17 = arith.constant 0 : index
    %c0_18 = arith.constant 0 : index
    %13 = vector.load %arg2[%c2_16, %c0_17, %c0_18] : memref<9x64x64xf32, #tpu.memory_space<vmem>>, vector<1x64x64xf32>
    %14 = vector.shape_cast %13 : vector<1x64x64xf32> to vector<64x64xf32>
    %cst_19 = arith.constant dense<0.000000e+00> : vector<138x64xf32>
    %15 = tpu.matmul %12, %14, %cst_19 {dimension_numbers = #tpu.dot_dimension_numbers<[1], [0], [0], [1], [0, 0, 1, 1], [], []>} : vector<138x64xf32>, vector<64x64xf32>, vector<138x64xf32> -> vector<138x64xf32>
    %16 = arith.addf %11, %15 : vector<138x64xf32>
    %c10 = arith.constant 10 : index
    %c0_20 = arith.constant 0 : index
    %17 = vector.load %arg1[%c10, %c0_20] : memref<160x64xf32, #tpu.memory_space<vmem>>, vector<138x64xf32>
    %c3 = arith.constant 3 : index
    %c0_21 = arith.constant 0 : index
    %c0_22 = arith.constant 0 : index
    %18 = vector.load %arg2[%c3, %c0_21, %c0_22] : memref<9x64x64xf32, #tpu.memory_space<vmem>>, vector<1x64x64xf32>
    %19 = vector.shape_cast %18 : vector<1x64x64xf32> to vector<64x64xf32>
    %cst_23 = arith.constant dense<0.000000e+00> : vector<138x64xf32>
    %20 = tpu.matmul %17, %19, %cst_23 {dimension_numbers = #tpu.dot_dimension_numbers<[1], [0], [0], [1], [0, 0, 1, 1], [], []>} : vector<138x64xf32>, vector<64x64xf32>, vector<138x64xf32> -> vector<138x64xf32>
    %21 = arith.addf %16, %20 : vector<138x64xf32>
    %c11 = arith.constant 11 : index
    %c0_24 = arith.constant 0 : index
    %22 = vector.load %arg1[%c11, %c0_24] : memref<160x64xf32, #tpu.memory_space<vmem>>, vector<138x64xf32>
    %c4 = arith.constant 4 : index
    %c0_25 = arith.constant 0 : index
    %c0_26 = arith.constant 0 : index
    %23 = vector.load %arg2[%c4, %c0_25, %c0_26] : memref<9x64x64xf32, #tpu.memory_space<vmem>>, vector<1x64x64xf32>
    %24 = vector.shape_cast %23 : vector<1x64x64xf32> to vector<64x64xf32>
    %cst_27 = arith.constant dense<0.000000e+00> : vector<138x64xf32>
    %25 = tpu.matmul %22, %24, %cst_27 {dimension_numbers = #tpu.dot_dimension_numbers<[1], [0], [0], [1], [0, 0, 1, 1], [], []>} : vector<138x64xf32>, vector<64x64xf32>, vector<138x64xf32> -> vector<138x64xf32>
    %26 = arith.addf %21, %25 : vector<138x64xf32>
    %c12 = arith.constant 12 : index
    %c0_28 = arith.constant 0 : index
    %27 = vector.load %arg1[%c12, %c0_28] : memref<160x64xf32, #tpu.memory_space<vmem>>, vector<138x64xf32>
    %c5 = arith.constant 5 : index
    %c0_29 = arith.constant 0 : index
    %c0_30 = arith.constant 0 : index
    %28 = vector.load %arg2[%c5, %c0_29, %c0_30] : memref<9x64x64xf32, #tpu.memory_space<vmem>>, vector<1x64x64xf32>
    %29 = vector.shape_cast %28 : vector<1x64x64xf32> to vector<64x64xf32>
    %cst_31 = arith.constant dense<0.000000e+00> : vector<138x64xf32>
    %30 = tpu.matmul %27, %29, %cst_31 {dimension_numbers = #tpu.dot_dimension_numbers<[1], [0], [0], [1], [0, 0, 1, 1], [], []>} : vector<138x64xf32>, vector<64x64xf32>, vector<138x64xf32> -> vector<138x64xf32>
    %31 = arith.addf %26, %30 : vector<138x64xf32>
    %c20 = arith.constant 20 : index
    %c0_32 = arith.constant 0 : index
    %32 = vector.load %arg1[%c20, %c0_32] : memref<160x64xf32, #tpu.memory_space<vmem>>, vector<138x64xf32>
    %c6 = arith.constant 6 : index
    %c0_33 = arith.constant 0 : index
    %c0_34 = arith.constant 0 : index
    %33 = vector.load %arg2[%c6, %c0_33, %c0_34] : memref<9x64x64xf32, #tpu.memory_space<vmem>>, vector<1x64x64xf32>
    %34 = vector.shape_cast %33 : vector<1x64x64xf32> to vector<64x64xf32>
    %cst_35 = arith.constant dense<0.000000e+00> : vector<138x64xf32>
    %35 = tpu.matmul %32, %34, %cst_35 {dimension_numbers = #tpu.dot_dimension_numbers<[1], [0], [0], [1], [0, 0, 1, 1], [], []>} : vector<138x64xf32>, vector<64x64xf32>, vector<138x64xf32> -> vector<138x64xf32>
    %36 = arith.addf %31, %35 : vector<138x64xf32>
    %c21 = arith.constant 21 : index
    %c0_36 = arith.constant 0 : index
    %37 = vector.load %arg1[%c21, %c0_36] : memref<160x64xf32, #tpu.memory_space<vmem>>, vector<138x64xf32>
    %c7 = arith.constant 7 : index
    %c0_37 = arith.constant 0 : index
    %c0_38 = arith.constant 0 : index
    %38 = vector.load %arg2[%c7, %c0_37, %c0_38] : memref<9x64x64xf32, #tpu.memory_space<vmem>>, vector<1x64x64xf32>
    %39 = vector.shape_cast %38 : vector<1x64x64xf32> to vector<64x64xf32>
    %cst_39 = arith.constant dense<0.000000e+00> : vector<138x64xf32>
    %40 = tpu.matmul %37, %39, %cst_39 {dimension_numbers = #tpu.dot_dimension_numbers<[1], [0], [0], [1], [0, 0, 1, 1], [], []>} : vector<138x64xf32>, vector<64x64xf32>, vector<138x64xf32> -> vector<138x64xf32>
    %41 = arith.addf %36, %40 : vector<138x64xf32>
    %c22 = arith.constant 22 : index
    %c0_40 = arith.constant 0 : index
    %42 = vector.load %arg1[%c22, %c0_40] : memref<160x64xf32, #tpu.memory_space<vmem>>, vector<138x64xf32>
    %c8 = arith.constant 8 : index
    %c0_41 = arith.constant 0 : index
    %c0_42 = arith.constant 0 : index
    %43 = vector.load %arg2[%c8, %c0_41, %c0_42] : memref<9x64x64xf32, #tpu.memory_space<vmem>>, vector<1x64x64xf32>
    %44 = vector.shape_cast %43 : vector<1x64x64xf32> to vector<64x64xf32>
    %cst_43 = arith.constant dense<0.000000e+00> : vector<138x64xf32>
    %45 = tpu.matmul %42, %44, %cst_43 {dimension_numbers = #tpu.dot_dimension_numbers<[1], [0], [0], [1], [0, 0, 1, 1], [], []>} : vector<138x64xf32>, vector<64x64xf32>, vector<138x64xf32> -> vector<138x64xf32>
    %46 = arith.addf %41, %45 : vector<138x64xf32>
    %47 = vector.broadcast %0 : vector<138x1xf32> to vector<138x64xf32>
    %48 = arith.mulf %46, %47 : vector<138x64xf32>
    %cst_44 = arith.constant dense<0.000000e+00> : vector<64xf32>
    %49 = vector.multi_reduction <add>, %48, %cst_44 [0] : vector<138x64xf32> to vector<64xf32>
    %50 = vector.shape_cast %49 : vector<64xf32> to vector<1x64xf32>
    %51 = arith.mulf %48, %46 : vector<138x64xf32>
    %cst_45 = arith.constant dense<0.000000e+00> : vector<64xf32>
    %52 = vector.multi_reduction <add>, %51, %cst_45 [0] : vector<138x64xf32> to vector<64xf32>
    %53 = vector.shape_cast %52 : vector<64xf32> to vector<1x64xf32>
    %c0_46 = arith.constant 0 : index
    %c0_47 = arith.constant 0 : index
    %54 = vector.load %arg9[%c0_46, %c0_47] : memref<64x64xf32, #tpu.memory_space<vmem>>, vector<64x64xf32>
    %cst_48 = arith.constant dense<0.000000e+00> : vector<1x64xf32>
    %55 = tpu.matmul %50, %54, %cst_48 {dimension_numbers = #tpu.dot_dimension_numbers<[1], [0], [0], [1], [0, 0, 1, 1], [], []>} : vector<1x64xf32>, vector<64x64xf32>, vector<1x64xf32> -> vector<1x64xf32>
    %c0_49 = arith.constant 0 : index
    %c0_50 = arith.constant 0 : index
    %56 = vector.load %arg9[%c0_49, %c0_50] : memref<64x64xf32, #tpu.memory_space<vmem>>, vector<64x64xf32>
    %cst_51 = arith.constant dense<0.000000e+00> : vector<1x64xf32>
    %57 = tpu.matmul %53, %56, %cst_51 {dimension_numbers = #tpu.dot_dimension_numbers<[1], [0], [0], [1], [0, 0, 1, 1], [], []>} : vector<1x64xf32>, vector<64x64xf32>, vector<1x64xf32> -> vector<1x64xf32>
    %cst_52 = arith.constant 0.00130208337 : f32
    %58 = vector.broadcast %cst_52 : f32 to vector<1x64xf32>
    %59 = arith.mulf %55, %58 : vector<1x64xf32>
    %cst_53 = arith.constant 0.00130208337 : f32
    %60 = vector.broadcast %cst_53 : f32 to vector<1x64xf32>
    %61 = arith.mulf %57, %60 : vector<1x64xf32>
    %62 = arith.mulf %59, %59 : vector<1x64xf32>
    %63 = arith.subf %61, %62 : vector<1x64xf32>
    %cst_54 = arith.constant 0.000000e+00 : f32
    %64 = vector.broadcast %cst_54 : f32 to vector<1x64xf32>
    %65 = arith.maximumf %63, %64 : vector<1x64xf32>
    %c0_55 = arith.constant 0 : index
    %c0_56 = arith.constant 0 : index
    %66 = vector.load %arg4[%c0_55, %c0_56] : memref<1x64xf32, #tpu.memory_space<vmem>>, vector<1x64xf32>
    %cst_57 = arith.constant 9.99999974E-6 : f32
    %67 = vector.broadcast %cst_57 : f32 to vector<1x64xf32>
    %68 = arith.addf %65, %67 : vector<1x64xf32>
    %69 = math.rsqrt %68 : vector<1x64xf32>
    %70 = arith.mulf %66, %69 : vector<1x64xf32>
    %c0_58 = arith.constant 0 : index
    %c0_59 = arith.constant 0 : index
    %71 = vector.load %arg5[%c0_58, %c0_59] : memref<1x64xf32, #tpu.memory_space<vmem>>, vector<1x64xf32>
    %72 = arith.mulf %59, %70 : vector<1x64xf32>
    %73 = arith.subf %71, %72 : vector<1x64xf32>
    %74 = vector.broadcast %70 : vector<1x64xf32> to vector<138x64xf32>
    %75 = arith.mulf %46, %74 : vector<138x64xf32>
    %76 = vector.broadcast %73 : vector<1x64xf32> to vector<138x64xf32>
    %77 = arith.addf %75, %76 : vector<138x64xf32>
    %cst_60 = arith.constant 0.707106769 : f32
    %78 = vector.broadcast %cst_60 : f32 to vector<138x64xf32>
    %79 = arith.mulf %77, %78 : vector<138x64xf32>
    %cst_61 = arith.constant 0.000000e+00 : f32
    %80 = vector.broadcast %cst_61 : f32 to vector<138x64xf32>
    %81 = arith.cmpf oge, %79, %80 : vector<138x64xf32>
    %cst_62 = arith.constant 1.000000e+00 : f32
    %cst_63 = arith.constant -1.000000e+00 : f32
    %82 = vector.broadcast %cst_62 : f32 to vector<138x64xf32>
    %83 = vector.broadcast %cst_63 : f32 to vector<138x64xf32>
    %84 = arith.select %81, %82, %83 : vector<138x64xi1>, vector<138x64xf32>
    %85 = math.absf %79 : vector<138x64xf32>
    %cst_64 = arith.constant 0.327591091 : f32
    %86 = vector.broadcast %cst_64 : f32 to vector<138x64xf32>
    %87 = arith.mulf %86, %85 : vector<138x64xf32>
    %cst_65 = arith.constant 1.000000e+00 : f32
    %88 = vector.broadcast %cst_65 : f32 to vector<138x64xf32>
    %89 = arith.addf %88, %87 : vector<138x64xf32>
    %90 = tpu.reciprocal %89 {approx = true} : vector<138x64xf32> -> vector<138x64xf32>
    %91 = arith.mulf %89, %90 : vector<138x64xf32>
    %cst_66 = arith.constant 2.000000e+00 : f32
    %92 = vector.broadcast %cst_66 : f32 to vector<138x64xf32>
    %93 = arith.subf %92, %91 : vector<138x64xf32>
    %94 = arith.mulf %90, %93 : vector<138x64xf32>
    %cst_67 = arith.constant 1.06140542 : f32
    %95 = vector.broadcast %cst_67 : f32 to vector<138x64xf32>
    %96 = arith.mulf %95, %94 : vector<138x64xf32>
    %cst_68 = arith.constant -1.45315206 : f32
    %97 = vector.broadcast %cst_68 : f32 to vector<138x64xf32>
    %98 = arith.addf %96, %97 : vector<138x64xf32>
    %99 = arith.mulf %98, %94 : vector<138x64xf32>
    %cst_69 = arith.constant 1.42141378 : f32
    %100 = vector.broadcast %cst_69 : f32 to vector<138x64xf32>
    %101 = arith.addf %99, %100 : vector<138x64xf32>
    %102 = arith.mulf %101, %94 : vector<138x64xf32>
    %cst_70 = arith.constant -0.284496725 : f32
    %103 = vector.broadcast %cst_70 : f32 to vector<138x64xf32>
    %104 = arith.addf %102, %103 : vector<138x64xf32>
    %105 = arith.mulf %104, %94 : vector<138x64xf32>
    %cst_71 = arith.constant 0.254829586 : f32
    %106 = vector.broadcast %cst_71 : f32 to vector<138x64xf32>
    %107 = arith.addf %105, %106 : vector<138x64xf32>
    %108 = arith.mulf %107, %94 : vector<138x64xf32>
    %109 = arith.mulf %79, %79 : vector<138x64xf32>
    %cst_72 = arith.constant 0.000000e+00 : f32
    %110 = vector.broadcast %cst_72 : f32 to vector<138x64xf32>
    %111 = arith.subf %110, %109 : vector<138x64xf32>
    %112 = math.exp %111 : vector<138x64xf32>
    %113 = arith.mulf %108, %112 : vector<138x64xf32>
    %cst_73 = arith.constant 1.000000e+00 : f32
    %114 = vector.broadcast %cst_73 : f32 to vector<138x64xf32>
    %115 = arith.subf %114, %113 : vector<138x64xf32>
    %116 = arith.mulf %84, %115 : vector<138x64xf32>
    %cst_74 = arith.constant 5.000000e-01 : f32
    %117 = vector.broadcast %cst_74 : f32 to vector<138x64xf32>
    %118 = arith.mulf %117, %77 : vector<138x64xf32>
    %cst_75 = arith.constant 1.000000e+00 : f32
    %119 = vector.broadcast %cst_75 : f32 to vector<138x64xf32>
    %120 = arith.addf %119, %116 : vector<138x64xf32>
    %121 = arith.mulf %118, %120 : vector<138x64xf32>
    %cst_76 = arith.constant 0.000000e+00 : f32
    %122 = vector.broadcast %cst_76 : f32 to vector<11x64xf32>
    %c0_77 = arith.constant 0 : index
    %c0_78 = arith.constant 0 : index
    %123 = vector.load %arg11[%c0_77, %c0_78] : memref<160x64xf32, #tpu.memory_space<vmem>>, vector<11x64xf32>
    tpu.vector_store %arg11[%c0_77, %c0_78], %122 {strides = array<i32>} : memref<160x64xf32, #tpu.memory_space<vmem>>, vector<11x64xf32>,
    %c149 = arith.constant 149 : index
    %c0_79 = arith.constant 0 : index
    %124 = vector.load %arg11[%c149, %c0_79] : memref<160x64xf32, #tpu.memory_space<vmem>>, vector<11x64xf32>
    tpu.vector_store %arg11[%c149, %c0_79], %122 {strides = array<i32>} : memref<160x64xf32, #tpu.memory_space<vmem>>, vector<11x64xf32>,
    %125 = vector.broadcast %0 : vector<138x1xf32> to vector<138x64xf32>
    %126 = arith.mulf %121, %125 : vector<138x64xf32>
    %c11_80 = arith.constant 11 : index
    %c0_81 = arith.constant 0 : index
    %127 = vector.load %arg11[%c11_80, %c0_81] : memref<160x64xf32, #tpu.memory_space<vmem>>, vector<138x64xf32>
    tpu.vector_store %arg11[%c11_80, %c0_81], %126 {strides = array<i32>} : memref<160x64xf32, #tpu.memory_space<vmem>>, vector<138x64xf32>,
    %c0_82 = arith.constant 0 : index
    %c0_83 = arith.constant 0 : index
    %128 = vector.load %arg11[%c0_82, %c0_83] : memref<160x64xf32, #tpu.memory_space<vmem>>, vector<138x64xf32>
    %c0_84 = arith.constant 0 : index
    %c0_85 = arith.constant 0 : index
    %c0_86 = arith.constant 0 : index
    %129 = vector.load %arg3[%c0_84, %c0_85, %c0_86] : memref<9x64x64xf32, #tpu.memory_space<vmem>>, vector<1x64x64xf32>
    %130 = vector.shape_cast %129 : vector<1x64x64xf32> to vector<64x64xf32>
    %cst_87 = arith.constant dense<0.000000e+00> : vector<138x64xf32>
    %131 = tpu.matmul %128, %130, %cst_87 {dimension_numbers = #tpu.dot_dimension_numbers<[1], [0], [0], [1], [0, 0, 1, 1], [], []>} : vector<138x64xf32>, vector<64x64xf32>, vector<138x64xf32> -> vector<138x64xf32>
    %c1_88 = arith.constant 1 : index
    %c0_89 = arith.constant 0 : index
    %132 = vector.load %arg11[%c1_88, %c0_89] : memref<160x64xf32, #tpu.memory_space<vmem>>, vector<138x64xf32>
    %c1_90 = arith.constant 1 : index
    %c0_91 = arith.constant 0 : index
    %c0_92 = arith.constant 0 : index
    %133 = vector.load %arg3[%c1_90, %c0_91, %c0_92] : memref<9x64x64xf32, #tpu.memory_space<vmem>>, vector<1x64x64xf32>
    %134 = vector.shape_cast %133 : vector<1x64x64xf32> to vector<64x64xf32>
    %cst_93 = arith.constant dense<0.000000e+00> : vector<138x64xf32>
    %135 = tpu.matmul %132, %134, %cst_93 {dimension_numbers = #tpu.dot_dimension_numbers<[1], [0], [0], [1], [0, 0, 1, 1], [], []>} : vector<138x64xf32>, vector<64x64xf32>, vector<138x64xf32> -> vector<138x64xf32>
    %136 = arith.addf %131, %135 : vector<138x64xf32>
    %c2_94 = arith.constant 2 : index
    %c0_95 = arith.constant 0 : index
    %137 = vector.load %arg11[%c2_94, %c0_95] : memref<160x64xf32, #tpu.memory_space<vmem>>, vector<138x64xf32>
    %c2_96 = arith.constant 2 : index
    %c0_97 = arith.constant 0 : index
    %c0_98 = arith.constant 0 : index
    %138 = vector.load %arg3[%c2_96, %c0_97, %c0_98] : memref<9x64x64xf32, #tpu.memory_space<vmem>>, vector<1x64x64xf32>
    %139 = vector.shape_cast %138 : vector<1x64x64xf32> to vector<64x64xf32>
    %cst_99 = arith.constant dense<0.000000e+00> : vector<138x64xf32>
    %140 = tpu.matmul %137, %139, %cst_99 {dimension_numbers = #tpu.dot_dimension_numbers<[1], [0], [0], [1], [0, 0, 1, 1], [], []>} : vector<138x64xf32>, vector<64x64xf32>, vector<138x64xf32> -> vector<138x64xf32>
    %141 = arith.addf %136, %140 : vector<138x64xf32>
    %c10_100 = arith.constant 10 : index
    %c0_101 = arith.constant 0 : index
    %142 = vector.load %arg11[%c10_100, %c0_101] : memref<160x64xf32, #tpu.memory_space<vmem>>, vector<138x64xf32>
    %c3_102 = arith.constant 3 : index
    %c0_103 = arith.constant 0 : index
    %c0_104 = arith.constant 0 : index
    %143 = vector.load %arg3[%c3_102, %c0_103, %c0_104] : memref<9x64x64xf32, #tpu.memory_space<vmem>>, vector<1x64x64xf32>
    %144 = vector.shape_cast %143 : vector<1x64x64xf32> to vector<64x64xf32>
    %cst_105 = arith.constant dense<0.000000e+00> : vector<138x64xf32>
    %145 = tpu.matmul %142, %144, %cst_105 {dimension_numbers = #tpu.dot_dimension_numbers<[1], [0], [0], [1], [0, 0, 1, 1], [], []>} : vector<138x64xf32>, vector<64x64xf32>, vector<138x64xf32> -> vector<138x64xf32>
    %146 = arith.addf %141, %145 : vector<138x64xf32>
    %c11_106 = arith.constant 11 : index
    %c0_107 = arith.constant 0 : index
    %147 = vector.load %arg11[%c11_106, %c0_107] : memref<160x64xf32, #tpu.memory_space<vmem>>, vector<138x64xf32>
    %c4_108 = arith.constant 4 : index
    %c0_109 = arith.constant 0 : index
    %c0_110 = arith.constant 0 : index
    %148 = vector.load %arg3[%c4_108, %c0_109, %c0_110] : memref<9x64x64xf32, #tpu.memory_space<vmem>>, vector<1x64x64xf32>
    %149 = vector.shape_cast %148 : vector<1x64x64xf32> to vector<64x64xf32>
    %cst_111 = arith.constant dense<0.000000e+00> : vector<138x64xf32>
    %150 = tpu.matmul %147, %149, %cst_111 {dimension_numbers = #tpu.dot_dimension_numbers<[1], [0], [0], [1], [0, 0, 1, 1], [], []>} : vector<138x64xf32>, vector<64x64xf32>, vector<138x64xf32> -> vector<138x64xf32>
    %151 = arith.addf %146, %150 : vector<138x64xf32>
    %c12_112 = arith.constant 12 : index
    %c0_113 = arith.constant 0 : index
    %152 = vector.load %arg11[%c12_112, %c0_113] : memref<160x64xf32, #tpu.memory_space<vmem>>, vector<138x64xf32>
    %c5_114 = arith.constant 5 : index
    %c0_115 = arith.constant 0 : index
    %c0_116 = arith.constant 0 : index
    %153 = vector.load %arg3[%c5_114, %c0_115, %c0_116] : memref<9x64x64xf32, #tpu.memory_space<vmem>>, vector<1x64x64xf32>
    %154 = vector.shape_cast %153 : vector<1x64x64xf32> to vector<64x64xf32>
    %cst_117 = arith.constant dense<0.000000e+00> : vector<138x64xf32>
    %155 = tpu.matmul %152, %154, %cst_117 {dimension_numbers = #tpu.dot_dimension_numbers<[1], [0], [0], [1], [0, 0, 1, 1], [], []>} : vector<138x64xf32>, vector<64x64xf32>, vector<138x64xf32> -> vector<138x64xf32>
    %156 = arith.addf %151, %155 : vector<138x64xf32>
    %c20_118 = arith.constant 20 : index
    %c0_119 = arith.constant 0 : index
    %157 = vector.load %arg11[%c20_118, %c0_119] : memref<160x64xf32, #tpu.memory_space<vmem>>, vector<138x64xf32>
    %c6_120 = arith.constant 6 : index
    %c0_121 = arith.constant 0 : index
    %c0_122 = arith.constant 0 : index
    %158 = vector.load %arg3[%c6_120, %c0_121, %c0_122] : memref<9x64x64xf32, #tpu.memory_space<vmem>>, vector<1x64x64xf32>
    %159 = vector.shape_cast %158 : vector<1x64x64xf32> to vector<64x64xf32>
    %cst_123 = arith.constant dense<0.000000e+00> : vector<138x64xf32>
    %160 = tpu.matmul %157, %159, %cst_123 {dimension_numbers = #tpu.dot_dimension_numbers<[1], [0], [0], [1], [0, 0, 1, 1], [], []>} : vector<138x64xf32>, vector<64x64xf32>, vector<138x64xf32> -> vector<138x64xf32>
    %161 = arith.addf %156, %160 : vector<138x64xf32>
    %c21_124 = arith.constant 21 : index
    %c0_125 = arith.constant 0 : index
    %162 = vector.load %arg11[%c21_124, %c0_125] : memref<160x64xf32, #tpu.memory_space<vmem>>, vector<138x64xf32>
    %c7_126 = arith.constant 7 : index
    %c0_127 = arith.constant 0 : index
    %c0_128 = arith.constant 0 : index
    %163 = vector.load %arg3[%c7_126, %c0_127, %c0_128] : memref<9x64x64xf32, #tpu.memory_space<vmem>>, vector<1x64x64xf32>
    %164 = vector.shape_cast %163 : vector<1x64x64xf32> to vector<64x64xf32>
    %cst_129 = arith.constant dense<0.000000e+00> : vector<138x64xf32>
    %165 = tpu.matmul %162, %164, %cst_129 {dimension_numbers = #tpu.dot_dimension_numbers<[1], [0], [0], [1], [0, 0, 1, 1], [], []>} : vector<138x64xf32>, vector<64x64xf32>, vector<138x64xf32> -> vector<138x64xf32>
    %166 = arith.addf %161, %165 : vector<138x64xf32>
    %c22_130 = arith.constant 22 : index
    %c0_131 = arith.constant 0 : index
    %167 = vector.load %arg11[%c22_130, %c0_131] : memref<160x64xf32, #tpu.memory_space<vmem>>, vector<138x64xf32>
    %c8_132 = arith.constant 8 : index
    %c0_133 = arith.constant 0 : index
    %c0_134 = arith.constant 0 : index
    %168 = vector.load %arg3[%c8_132, %c0_133, %c0_134] : memref<9x64x64xf32, #tpu.memory_space<vmem>>, vector<1x64x64xf32>
    %169 = vector.shape_cast %168 : vector<1x64x64xf32> to vector<64x64xf32>
    %cst_135 = arith.constant dense<0.000000e+00> : vector<138x64xf32>
    %170 = tpu.matmul %167, %169, %cst_135 {dimension_numbers = #tpu.dot_dimension_numbers<[1], [0], [0], [1], [0, 0, 1, 1], [], []>} : vector<138x64xf32>, vector<64x64xf32>, vector<138x64xf32> -> vector<138x64xf32>
    %171 = arith.addf %166, %170 : vector<138x64xf32>
    %172 = vector.broadcast %0 : vector<138x1xf32> to vector<138x64xf32>
    %173 = arith.mulf %171, %172 : vector<138x64xf32>
    %cst_136 = arith.constant dense<0.000000e+00> : vector<64xf32>
    %174 = vector.multi_reduction <add>, %173, %cst_136 [0] : vector<138x64xf32> to vector<64xf32>
    %175 = vector.shape_cast %174 : vector<64xf32> to vector<1x64xf32>
    %176 = arith.mulf %173, %171 : vector<138x64xf32>
    %cst_137 = arith.constant dense<0.000000e+00> : vector<64xf32>
    %177 = vector.multi_reduction <add>, %176, %cst_137 [0] : vector<138x64xf32> to vector<64xf32>
    %178 = vector.shape_cast %177 : vector<64xf32> to vector<1x64xf32>
    %c0_138 = arith.constant 0 : index
    %c0_139 = arith.constant 0 : index
    %179 = vector.load %arg9[%c0_138, %c0_139] : memref<64x64xf32, #tpu.memory_space<vmem>>, vector<64x64xf32>
    %cst_140 = arith.constant dense<0.000000e+00> : vector<1x64xf32>
    %180 = tpu.matmul %175, %179, %cst_140 {dimension_numbers = #tpu.dot_dimension_numbers<[1], [0], [0], [1], [0, 0, 1, 1], [], []>} : vector<1x64xf32>, vector<64x64xf32>, vector<1x64xf32> -> vector<1x64xf32>
    %c0_141 = arith.constant 0 : index
    %c0_142 = arith.constant 0 : index
    %181 = vector.load %arg9[%c0_141, %c0_142] : memref<64x64xf32, #tpu.memory_space<vmem>>, vector<64x64xf32>
    %cst_143 = arith.constant dense<0.000000e+00> : vector<1x64xf32>
    %182 = tpu.matmul %178, %181, %cst_143 {dimension_numbers = #tpu.dot_dimension_numbers<[1], [0], [0], [1], [0, 0, 1, 1], [], []>} : vector<1x64xf32>, vector<64x64xf32>, vector<1x64xf32> -> vector<1x64xf32>
    %cst_144 = arith.constant 0.00130208337 : f32
    %183 = vector.broadcast %cst_144 : f32 to vector<1x64xf32>
    %184 = arith.mulf %180, %183 : vector<1x64xf32>
    %cst_145 = arith.constant 0.00130208337 : f32
    %185 = vector.broadcast %cst_145 : f32 to vector<1x64xf32>
    %186 = arith.mulf %182, %185 : vector<1x64xf32>
    %187 = arith.mulf %184, %184 : vector<1x64xf32>
    %188 = arith.subf %186, %187 : vector<1x64xf32>
    %cst_146 = arith.constant 0.000000e+00 : f32
    %189 = vector.broadcast %cst_146 : f32 to vector<1x64xf32>
    %190 = arith.maximumf %188, %189 : vector<1x64xf32>
    %c0_147 = arith.constant 0 : index
    %c0_148 = arith.constant 0 : index
    %191 = vector.load %arg6[%c0_147, %c0_148] : memref<1x64xf32, #tpu.memory_space<vmem>>, vector<1x64xf32>
    %cst_149 = arith.constant 9.99999974E-6 : f32
    %192 = vector.broadcast %cst_149 : f32 to vector<1x64xf32>
    %193 = arith.addf %190, %192 : vector<1x64xf32>
    %194 = math.rsqrt %193 : vector<1x64xf32>
    %195 = arith.mulf %191, %194 : vector<1x64xf32>
    %c0_150 = arith.constant 0 : index
    %c0_151 = arith.constant 0 : index
    %196 = vector.load %arg7[%c0_150, %c0_151] : memref<1x64xf32, #tpu.memory_space<vmem>>, vector<1x64xf32>
    %197 = arith.mulf %184, %195 : vector<1x64xf32>
    %198 = arith.subf %196, %197 : vector<1x64xf32>
    %c11_152 = arith.constant 11 : index
    %c0_153 = arith.constant 0 : index
    %199 = vector.load %arg1[%c11_152, %c0_153] : memref<160x64xf32, #tpu.memory_space<vmem>>, vector<138x64xf32>
    %200 = vector.broadcast %195 : vector<1x64xf32> to vector<138x64xf32>
    %201 = arith.mulf %171, %200 : vector<138x64xf32>
    %202 = vector.broadcast %198 : vector<1x64xf32> to vector<138x64xf32>
    %203 = arith.addf %201, %202 : vector<138x64xf32>
    %204 = arith.addf %199, %203 : vector<138x64xf32>
    %c11_154 = arith.constant 11 : index
    %c0_155 = arith.constant 0 : index
    %205 = vector.load %arg10[%c11_154, %c0_155] : memref<160x64xf32, #tpu.memory_space<vmem>>, vector<138x64xf32>
    tpu.vector_store %arg10[%c11_154, %c0_155], %204 {strides = array<i32>} : memref<160x64xf32, #tpu.memory_space<vmem>>, vector<138x64xf32>,
    return
  }
  func.func @transform_0(%arg0: i32) -> (i32, i32) {
    %c0_i32 = arith.constant 0 : i32
    %c0_i32_0 = arith.constant 0 : i32
    %c0_i32_1 = arith.constant 0 : i32
    return %c0_i32, %c0_i32_0 : i32, i32
  }
  func.func @transform_1(%arg0: i32) -> (i32, i32, i32) {
    %c0_i32 = arith.constant 0 : i32
    %c0_i32_0 = arith.constant 0 : i32
    %c0_i32_1 = arith.constant 0 : i32
    %c0_i32_2 = arith.constant 0 : i32
    return %c0_i32, %c0_i32_0, %c0_i32_1 : i32, i32, i32
  }
  func.func @transform_2(%arg0: i32) -> (i32, i32, i32) {
    %c0_i32 = arith.constant 0 : i32
    %c0_i32_0 = arith.constant 0 : i32
    %c0_i32_1 = arith.constant 0 : i32
    %c0_i32_2 = arith.constant 0 : i32
    return %c0_i32, %c0_i32_0, %c0_i32_1 : i32, i32, i32
  }
  func.func @transform_3(%arg0: i32) -> (i32, i32) {
    %c0_i32 = arith.constant 0 : i32
    %c0_i32_0 = arith.constant 0 : i32
    %c0_i32_1 = arith.constant 0 : i32
    return %c0_i32, %c0_i32_0 : i32, i32
  }
  func.func @transform_4(%arg0: i32) -> (i32, i32) {
    %c0_i32 = arith.constant 0 : i32
    %c0_i32_0 = arith.constant 0 : i32
    %c0_i32_1 = arith.constant 0 : i32
    return %c0_i32, %c0_i32_0 : i32, i32
  }
  func.func @transform_5(%arg0: i32) -> (i32, i32) {
    %c0_i32 = arith.constant 0 : i32
    %c0_i32_0 = arith.constant 0 : i32
    %c0_i32_1 = arith.constant 0 : i32
    return %c0_i32, %c0_i32_0 : i32, i32
  }
  func.func @transform_6(%arg0: i32) -> (i32, i32) {
    %c0_i32 = arith.constant 0 : i32
    %c0_i32_0 = arith.constant 0 : i32
    %c0_i32_1 = arith.constant 0 : i32
    return %c0_i32, %c0_i32_0 : i32, i32
  }
  func.func @transform_7(%arg0: i32) -> (i32, i32) {
    %c0_i32 = arith.constant 0 : i32
    %c0_i32_0 = arith.constant 0 : i32
    %c0_i32_1 = arith.constant 0 : i32
    return %c0_i32, %c0_i32_0 : i32, i32
  }
  func.func @transform_8(%arg0: i32) -> (i32, i32) {
    %c0_i32 = arith.constant 0 : i32
    %c0_i32_0 = arith.constant 0 : i32
    %c0_i32_1 = arith.constant 0 : i32
    return %c0_i32, %c0_i32_0 : i32, i32
  }
  func.func @transform_9(%arg0: i32) -> (i32, i32) {
    %c0_i32 = arith.constant 0 : i32
    %c0_i32_0 = arith.constant 0 : i32
    %c0_i32_1 = arith.constant 0 : i32
    return %c0_i32, %c0_i32_0 : i32, i32
  }
}

</mosaic_0001>

<llo_original>
// kernel: tpu_custom_call.1
$region0: #{tpu_custom_call.1}
  #allocation0 [shape = 'u32[]', space=smem, size = 0x4, offset = 0x4, fixed_abs, tag = 'smem constant byte address 0x4 - core index']
  #allocation1 [shape = 'u32[144,128]{1,0:T(1,128)}', space=vmem, size = 0x12000, scoped, tag = 'internal scratch']
  #allocation2 [shape = 'f32[160,64]{1,0:T(8,128)}', space=vmem, size = 0x14000, scoped, tag = 'scratch operand']
  %s0 = inlined_call_operand.vmem [shape: f32[160,64], index: 0, kind: input, shape index: {}]
  %s1 = inlined_call_operand.hbm [shape: f32[9,64,64], index: 1, kind: input, shape index: {}]
  %s2 = inlined_call_operand.hbm [shape: f32[9,64,64], index: 2, kind: input, shape index: {}]
  %s3 = inlined_call_operand.vmem [shape: f32[1,64], index: 3, kind: input, shape index: {}]
  %s4 = inlined_call_operand.vmem [shape: f32[1,64], index: 4, kind: input, shape index: {}]
  %s5 = inlined_call_operand.vmem [shape: f32[1,64], index: 5, kind: input, shape index: {}]
  %s6 = inlined_call_operand.vmem [shape: f32[1,64], index: 6, kind: input, shape index: {}]
  %s7 = inlined_call_operand.vmem [shape: f32[138,1], index: 7, kind: input, shape index: {}]
  %s8 = inlined_call_operand.vmem [shape: f32[64,64], index: 8, kind: input, shape index: {}]
  %s9 = inlined_call_operand.vmem [shape: f32[160,64], index: 9, kind: output, shape index: {}]
  %s10 = sld [smem:[#allocation0]]
  $region54: #{tpu_custom_call.1} parent=0
    _
  %s12 = ssub.s32 1, %s10
  %s13 = scalar_select 0, %s12, %s10
  $region1: #{tpu_custom_call.1} parent=0
    #allocation3 [shape = 'u8[294912]{0}', space=vmem, size = 0x48000, scoped, tag = 'input window, operand 1, single buffered']
    #allocation4 [shape = 's32[1]{0}', space=sflag, size = 0x4, scoped, tag = 'scoped memory for tpu_custom_call.1']
    #allocation5 [shape = 'u8[294912]{0}', space=vmem, size = 0x48000, scoped, tag = 'input window, operand 2, single buffered']
    #allocation6 [shape = 's32[1]{0}', space=sflag, size = 0x4, scoped, tag = 'scoped memory for tpu_custom_call.1']
    %14 = vsyncpa [#allocation4], 0
    %15 = vsyncpa [#allocation6], 0
    // Predicated region
    $region2: #{tpu_custom_call.1} parent=1 // pred_check
      _
    $region3: #{tpu_custom_call.1} parent=1 // pred_check_branch
      %17 = sbr.rel (0) target = $region5
    $region4: #{tpu_custom_call.1} parent=1 // pred_region
      _
    $region5: #{tpu_custom_call.1} parent=1 // pred_fallthru
      _
    // Predicated region
    $region6: #{tpu_custom_call.1} parent=1 // pred_check
      _
    $region7: #{tpu_custom_call.1} parent=1 // pred_check_branch
      %19 = sbr.rel (0) target = $region9
    $region8: #{tpu_custom_call.1} parent=1 // pred_region
      %s21 = ssub.s32 9216, 9216
      %22 = vsyncadd [#allocation4], %s21
      %s23 = sshll.u32 [#allocation3], 4
      %s24 = int_to_ptr.vmem [resolvable:$true] %s23
      %29 = dma.hbm_to_vmem [thread:$0]  %s1, 9216, %s24, [#allocation4], 128, 128, 8
    $region9: #{tpu_custom_call.1} parent=1 // pred_fallthru
      _
    // Predicated region
    $region10: #{tpu_custom_call.1} parent=1 // pred_check
      _
    $region11: #{tpu_custom_call.1} parent=1 // pred_check_branch
      %31 = sbr.rel (0) target = $region13
    $region12: #{tpu_custom_call.1} parent=1 // pred_region
      %s33 = ssub.s32 9216, 9216
      %34 = vsyncadd [#allocation6], %s33
      %s35 = sshll.u32 [#allocation5], 4
      %s36 = int_to_ptr.vmem [resolvable:$true] %s35
      %41 = dma.hbm_to_vmem [thread:$0]  %s2, 9216, %s36, [#allocation6], 128, 128, 8
    $region13: #{tpu_custom_call.1} parent=1 // pred_fallthru
      _
    // Predicated region
    $region14: #{tpu_custom_call.1} parent=1 // pred_check
      _
    $region15: #{tpu_custom_call.1} parent=1 // pred_check_branch
      %43 = sbr.rel (0) target = $region17
    $region16: #{tpu_custom_call.1} parent=1 // pred_region
      _
    $region17: #{tpu_custom_call.1} parent=1 // pred_fallthru
      _
    // Predicated region
    $region18: #{tpu_custom_call.1} parent=1 // pred_check
      _
    $region19: #{tpu_custom_call.1} parent=1 // pred_check_branch
      %45 = sbr.rel (0) target = $region21
    $region20: #{tpu_custom_call.1} parent=1 // pred_region
      _
    $region21: #{tpu_custom_call.1} parent=1 // pred_fallthru
      _
    // Predicated region
    $region22: #{tpu_custom_call.1} parent=1 // pred_check
      _
    $region23: #{tpu_custom_call.1} parent=1 // pred_check_branch
      %47 = sbr.rel (0) target = $region25
    $region24: #{tpu_custom_call.1} parent=1 // pred_region
      _
    $region25: #{tpu_custom_call.1} parent=1 // pred_fallthru
      _
    // Predicated region
    $region26: #{tpu_custom_call.1} parent=1 // pred_check
      _
    $region27: #{tpu_custom_call.1} parent=1 // pred_check_branch
      %49 = sbr.rel (0) target = $region29
    $region28: #{tpu_custom_call.1} parent=1 // pred_region
      _
    $region29: #{tpu_custom_call.1} parent=1 // pred_fallthru
      _
    // Predicated region
    $region30: #{tpu_custom_call.1} parent=1 // pred_check
      _
    $region31: #{tpu_custom_call.1} parent=1 // pred_check_branch
      %51 = sbr.rel (0) target = $region33
    $region32: #{tpu_custom_call.1} parent=1 // pred_region
      _
    $region33: #{tpu_custom_call.1} parent=1 // pred_fallthru
      _
    // Predicated region
    $region34: #{tpu_custom_call.1} parent=1 // pred_check
      _
    $region35: #{tpu_custom_call.1} parent=1 // pred_check_branch
      %53 = sbr.rel (0) target = $region37
    $region36: #{tpu_custom_call.1} parent=1 // pred_region
      _
    $region37: #{tpu_custom_call.1} parent=1 // pred_fallthru
      _
    // Predicated region
    $region38: #{tpu_custom_call.1} parent=1 // pred_check
      _
    $region39: #{tpu_custom_call.1} parent=1 // pred_check_branch
      %55 = sbr.rel (0) target = $region41
    $region40: #{tpu_custom_call.1} parent=1 // pred_region
      %56 = dma.done [#allocation4], 9216
    $region41: #{tpu_custom_call.1} parent=1 // pred_fallthru
      _
    // Predicated region
    $region42: #{tpu_custom_call.1} parent=1 // pred_check
      _
    $region43: #{tpu_custom_call.1} parent=1 // pred_check_branch
      %58 = sbr.rel (0) target = $region45
    $region44: #{tpu_custom_call.1} parent=1 // pred_region
      %59 = dma.done [#allocation6], 9216
    $region45: #{tpu_custom_call.1} parent=1 // pred_fallthru
      _
    %v60 = vld [vmem:[%s7] sm:$0xff]
    %v61 = vld [vmem:[%s7 + $0x8] sm:$0xff]
    %v62 = vld [vmem:[%s7 + $0x10] sm:$0xff]
    %v63 = vld [vmem:[%s7 + $0x18] sm:$0xff]
    %v64 = vld [vmem:[%s7 + $0x20] sm:$0xff]
    %v65 = vld [vmem:[%s7 + $0x28] sm:$0xff]
    %v66 = vld [vmem:[%s7 + $0x30] sm:$0xff]
    %v67 = vld [vmem:[%s7 + $0x38] sm:$0xff]
    %v68 = vld [vmem:[%s7 + $0x40] sm:$0xff]
    %v69 = vld [vmem:[%s7 + $0x48] sm:$0xff]
    %v70 = vld [vmem:[%s7 + $0x50] sm:$0xff]
    %v71 = vld [vmem:[%s7 + $0x58] sm:$0xff]
    %v72 = vld [vmem:[%s7 + $0x60] sm:$0xff]
    %v73 = vld [vmem:[%s7 + $0x68] sm:$0xff]
    %v74 = vld [vmem:[%s7 + $0x70] sm:$0xff]
    %v75 = vld [vmem:[%s7 + $0x78] sm:$0xff]
    %v76 = vld [vmem:[%s7 + $0x80] sm:$0xff]
    %v77 = vld [vmem:[%s7 + $0x88] sm:$0x3]
    %v78 = vld [vmem:[%s0] sm:$0xff]
    %v79 = vld [vmem:[%s0 + $0x8] sm:$0xff]
    %v80 = vld [vmem:[%s0 + $0x10] sm:$0xff]
    %v81 = vld [vmem:[%s0 + $0x18] sm:$0xff]
    %v82 = vld [vmem:[%s0 + $0x20] sm:$0xff]
    %v83 = vld [vmem:[%s0 + $0x28] sm:$0xff]
    %v84 = vld [vmem:[%s0 + $0x30] sm:$0xff]
    %v85 = vld [vmem:[%s0 + $0x38] sm:$0xff]
    %v86 = vld [vmem:[%s0 + $0x40] sm:$0xff]
    %v87 = vld [vmem:[%s0 + $0x48] sm:$0xff]
    %v88 = vld [vmem:[%s0 + $0x50] sm:$0xff]
    %v89 = vld [vmem:[%s0 + $0x58] sm:$0xff]
    %v90 = vld [vmem:[%s0 + $0x60] sm:$0xff]
    %v91 = vld [vmem:[%s0 + $0x68] sm:$0xff]
    %v92 = vld [vmem:[%s0 + $0x70] sm:$0xff]
    %v93 = vld [vmem:[%s0 + $0x78] sm:$0xff]
    %v94 = vld [vmem:[%s0 + $0x80] sm:$0xff]
    %v95 = vld [vmem:[%s0 + $0x88] sm:$0xff]
    %v96 = vld [vmem:[%s0 + $0x90] sm:$0xff]
    %v97 = vld [vmem:[%s0 + $0x98] sm:$0xff]
    %vm98 = vcmask 523264
    %99 = vst.msk [vmem:[%s9] sm:$0xff] %vm98, %v78
    %100 = vst.msk [vmem:[%s9 + $0x8] sm:$0xff] %vm98, %v79
    %101 = vst.msk [vmem:[%s9 + $0x10] sm:$0xff] %vm98, %v80
    %102 = vst.msk [vmem:[%s9 + $0x18] sm:$0xff] %vm98, %v81
    %103 = vst.msk [vmem:[%s9 + $0x20] sm:$0xff] %vm98, %v82
    %104 = vst.msk [vmem:[%s9 + $0x28] sm:$0xff] %vm98, %v83
    %105 = vst.msk [vmem:[%s9 + $0x30] sm:$0xff] %vm98, %v84
    %106 = vst.msk [vmem:[%s9 + $0x38] sm:$0xff] %vm98, %v85
    %107 = vst.msk [vmem:[%s9 + $0x40] sm:$0xff] %vm98, %v86
    %108 = vst.msk [vmem:[%s9 + $0x48] sm:$0xff] %vm98, %v87
    %109 = vst.msk [vmem:[%s9 + $0x50] sm:$0xff] %vm98, %v88
    %110 = vst.msk [vmem:[%s9 + $0x58] sm:$0xff] %vm98, %v89
    %111 = vst.msk [vmem:[%s9 + $0x60] sm:$0xff] %vm98, %v90
    %112 = vst.msk [vmem:[%s9 + $0x68] sm:$0xff] %vm98, %v91
    %113 = vst.msk [vmem:[%s9 + $0x70] sm:$0xff] %vm98, %v92
    %114 = vst.msk [vmem:[%s9 + $0x78] sm:$0xff] %vm98, %v93
    %115 = vst.msk [vmem:[%s9 + $0x80] sm:$0xff] %vm98, %v94
    %116 = vst.msk [vmem:[%s9 + $0x88] sm:$0xff] %vm98, %v95
    %117 = vst.msk [vmem:[%s9 + $0x90] sm:$0xff] %vm98, %v96
    %118 = vst.msk [vmem:[%s9 + $0x98] sm:$0xff] %vm98, %v97
    %v119 = vld [vmem:[%s0] sm:$0xff]
    %v120 = vld [vmem:[%s0 + $0x8] sm:$0xff]
    %v121 = vld [vmem:[%s0 + $0x10] sm:$0xff]
    %v122 = vld [vmem:[%s0 + $0x18] sm:$0xff]
    %v123 = vld [vmem:[%s0 + $0x20] sm:$0xff]
    %v124 = vld [vmem:[%s0 + $0x28] sm:$0xff]
    %v125 = vld [vmem:[%s0 + $0x30] sm:$0xff]
    %v126 = vld [vmem:[%s0 + $0x38] sm:$0xff]
    %v127 = vld [vmem:[%s0 + $0x40] sm:$0xff]
    %v128 = vld [vmem:[%s0 + $0x48] sm:$0xff]
    %v129 = vld [vmem:[%s0 + $0x50] sm:$0xff]
    %v130 = vld [vmem:[%s0 + $0x58] sm:$0xff]
    %v131 = vld [vmem:[%s0 + $0x60] sm:$0xff]
    %v132 = vld [vmem:[%s0 + $0x68] sm:$0xff]
    %v133 = vld [vmem:[%s0 + $0x70] sm:$0xff]
    %v134 = vld [vmem:[%s0 + $0x78] sm:$0xff]
    %v135 = vld [vmem:[%s0 + $0x80] sm:$0xff]
    %v136 = vld [vmem:[%s0 + $0x88] sm:$0x3]
    %v137 = vld [vmem:[#allocation3] sm:$0xff]
    %v138 = vld [vmem:[#allocation3 + $0x8] sm:$0xff]
    %v139 = vld [vmem:[#allocation3 + $0x10] sm:$0xff]
    %v140 = vld [vmem:[#allocation3 + $0x18] sm:$0xff]
    %v141 = vld [vmem:[#allocation3 + $0x20] sm:$0xff]
    %v142 = vld [vmem:[#allocation3 + $0x28] sm:$0xff]
    %v143 = vld [vmem:[#allocation3 + $0x30] sm:$0xff]
    %v144 = vld [vmem:[#allocation3 + $0x38] sm:$0xff]
    %v145 = vld [vmem:[%s0 + $0x1] sm:$0xff]
    %v146 = vld [vmem:[%s0 + $0x9] sm:$0xff]
    %v147 = vld [vmem:[%s0 + $0x11] sm:$0xff]
    %v148 = vld [vmem:[%s0 + $0x19] sm:$0xff]
    %v149 = vld [vmem:[%s0 + $0x21] sm:$0xff]
    %v150 = vld [vmem:[%s0 + $0x29] sm:$0xff]
    %v151 = vld [vmem:[%s0 + $0x31] sm:$0xff]
    %v152 = vld [vmem:[%s0 + $0x39] sm:$0xff]
    %v153 = vld [vmem:[%s0 + $0x41] sm:$0xff]
    %v154 = vld [vmem:[%s0 + $0x49] sm:$0xff]
    %v155 = vld [vmem:[%s0 + $0x51] sm:$0xff]
    %v156 = vld [vmem:[%s0 + $0x59] sm:$0xff]
    %v157 = vld [vmem:[%s0 + $0x61] sm:$0xff]
    %v158 = vld [vmem:[%s0 + $0x69] sm:$0xff]
    %v159 = vld [vmem:[%s0 + $0x71] sm:$0xff]
    %v160 = vld [vmem:[%s0 + $0x79] sm:$0xff]
    %v161 = vld [vmem:[%s0 + $0x81] sm:$0xff]
    %v162 = vld [vmem:[%s0 + $0x89] sm:$0x3]
    %s163 = scalar_lea.vmem [#allocation3], 64
    %v164 = vld [vmem:[%s163] sm:$0xff]
    %v165 = vld [vmem:[%s163 + $0x8] sm:$0xff]
    %v166 = vld [vmem:[%s163 + $0x10] sm:$0xff]
    %v167 = vld [vmem:[%s163 + $0x18] sm:$0xff]
    %v168 = vld [vmem:[%s163 + $0x20] sm:$0xff]
    %v169 = vld [vmem:[%s163 + $0x28] sm:$0xff]
    %v170 = vld [vmem:[%s163 + $0x30] sm:$0xff]
    %v171 = vld [vmem:[%s163 + $0x38] sm:$0xff]
    %v173 = vsel %vm98, %v145, 0
    %v176 = vsel %vm98, %v146, 0
    %v179 = vsel %vm98, %v147, 0
    %v182 = vsel %vm98, %v148, 0
    %v185 = vsel %vm98, %v149, 0
    %v188 = vsel %vm98, %v150, 0
    %v191 = vsel %vm98, %v151, 0
    %v194 = vsel %vm98, %v152, 0
    %v197 = vsel %vm98, %v153, 0
    %v200 = vsel %vm98, %v154, 0
    %v203 = vsel %vm98, %v155, 0
    %v206 = vsel %vm98, %v156, 0
    %v209 = vsel %vm98, %v157, 0
    %v212 = vsel %vm98, %v158, 0
    %v215 = vsel %vm98, %v159, 0
    %v218 = vsel %vm98, %v160, 0
    %v221 = vsel %vm98, %v161, 0
    %v224 = vsel %vm98, %v162, 0
    %226 = vmatprep.subr.mxu0 0.0
    %227 = vmatpush1.msra.mxu0 0.0
    %228 = vmatprep.subr.mxu0 0.0
    %229 = vmatpush1.msra.mxu0 0.0
    %230 = vmatprep.subr.mxu0 0.0
    %231 = vmatpush1.msra.mxu0 0.0
    %232 = vmatprep.subr.mxu0 0.0
    %233 = vmatpush1.msra.mxu0 0.0
    %234 = vmatprep.subr.mxu0 0.0
    %235 = vmatpush1.msra.mxu0 0.0
    %236 = vmatprep.subr.mxu0 0.0
    %237 = vmatpush1.msra.mxu0 0.0
    %238 = vmatprep.subr.mxu0 0.0
    %239 = vmatpush1.msra.mxu0 0.0
    %240 = vmatprep.subr.mxu0 0.0
    %241 = vmatpush1.msra.mxu0 0.0
    %242 = vmatprep.subr.mxu0 0.0
    %243 = vmatpush1.msra.mxu0 %v171
    %244 = vmatprep.subr.mxu0 0.0
    %245 = vmatpush1.msra.mxu0 %v170
    %246 = vmatprep.subr.mxu0 0.0
    %247 = vmatpush1.msra.mxu0 %v169
    %248 = vmatprep.subr.mxu0 0.0
    %249 = vmatpush1.msra.mxu0 %v168
    %250 = vmatprep.subr.mxu0 0.0
    %251 = vmatpush1.msra.mxu0 %v167
    %252 = vmatprep.subr.mxu0 0.0
    %253 = vmatpush1.msra.mxu0 %v166
    %254 = vmatprep.subr.mxu0 0.0
    %255 = vmatpush1.msra.mxu0 %v165
    %256 = vmatprep.subr.mxu0 0.0
    %257 = vmatpush1.msra.mxu0 %v164
    %258 = vmatprep.subr.mxu0 0.0
    %259 = vmatpush2.msra.mxu0 0.0
    %260 = vmatprep.subr.mxu0 0.0
    %261 = vmatpush2.msra.mxu0 0.0
    %262 = vmatprep.subr.mxu0 0.0
    %263 = vmatpush2.msra.mxu0 0.0
    %264 = vmatprep.subr.mxu0 0.0
    %265 = vmatpush2.msra.mxu0 0.0
    %266 = vmatprep.subr.mxu0 0.0
    %267 = vmatpush2.msra.mxu0 0.0
    %268 = vmatprep.subr.mxu0 0.0
    %269 = vmatpush2.msra.mxu0 0.0
    %270 = vmatprep.subr.mxu0 0.0
    %271 = vmatpush2.msra.mxu0 0.0
    %272 = vmatprep.subr.mxu0 0.0
    %273 = vmatpush2.msra.mxu0 0.0
    %274 = vmatprep.subr.mxu0 0.0
    %275 = vmatpush2.msra.mxu0 0.0
    %276 = vmatprep.subr.mxu0 0.0
    %277 = vmatpush2.msra.mxu0 0.0
    %278 = vmatprep.subr.mxu0 0.0
    %279 = vmatpush2.msra.mxu0 0.0
    %280 = vmatprep.subr.mxu0 0.0
    %281 = vmatpush2.msra.mxu0 0.0
    %282 = vmatprep.subr.mxu0 0.0
    %283 = vmatpush2.msra.mxu0 0.0
    %284 = vmatprep.subr.mxu0 0.0
    %285 = vmatpush2.msra.mxu0 0.0
    %286 = vmatprep.subr.mxu0 0.0
    %287 = vmatpush2.msra.mxu0 0.0
    %288 = vmatprep.subr.mxu0 0.0
    %289 = vmatpush2.msra.mxu0 0.0
    %290 = vmatprep.mubr.f32.mxu0 0.0
    %291 = vmatmul.mubr.f32.gmra.mxu0 %v173
    %v292 = vpop.f32.mrf.mxu0
    %v293 = vadd.f32 0.0, %v292
    %v294 = vpop.f32.mrf.mxu0
    %295 = vmatprep.mubr.f32.mxu0 0.0
    %296 = vmatmul.mubr.f32.gmra.mxu0 %v176
    %v297 = vpop.f32.mrf.mxu0
    %v298 = vadd.f32 0.0, %v297
    %v299 = vpop.f32.mrf.mxu0
    %300 = vmatprep.mubr.f32.mxu0 0.0
    %301 = vmatmul.mubr.f32.gmra.mxu0 %v179
    %v302 = vpop.f32.mrf.mxu0
    %v303 = vadd.f32 0.0, %v302
    %v304 = vpop.f32.mrf.mxu0
    %305 = vmatprep.mubr.f32.mxu0 0.0
    %306 = vmatmul.mubr.f32.gmra.mxu0 %v182
    %v307 = vpop.f32.mrf.mxu0
    %v308 = vadd.f32 0.0, %v307
    %v309 = vpop.f32.mrf.mxu0
    %310 = vmatprep.mubr.f32.mxu0 0.0
    %311 = vmatmul.mubr.f32.gmra.mxu0 %v185
    %v312 = vpop.f32.mrf.mxu0
    %v313 = vadd.f32 0.0, %v312
    %v314 = vpop.f32.mrf.mxu0
    %315 = vmatprep.mubr.f32.mxu0 0.0
    %316 = vmatmul.mubr.f32.gmra.mxu0 %v188
    %v317 = vpop.f32.mrf.mxu0
    %v318 = vadd.f32 0.0, %v317
    %v319 = vpop.f32.mrf.mxu0
    %320 = vmatprep.mubr.f32.mxu0 0.0
    %321 = vmatmul.mubr.f32.gmra.mxu0 %v191
    %v322 = vpop.f32.mrf.mxu0
    %v323 = vadd.f32 0.0, %v322
    %v324 = vpop.f32.mrf.mxu0
    %325 = vmatprep.mubr.f32.mxu0 0.0
    %326 = vmatmul.mubr.f32.gmra.mxu0 %v194
    %v327 = vpop.f32.mrf.mxu0
    %v328 = vadd.f32 0.0, %v327
    %v329 = vpop.f32.mrf.mxu0
    %330 = vmatprep.mubr.f32.mxu0 0.0
    %331 = vmatmul.mubr.f32.gmra.mxu0 %v197
    %v332 = vpop.f32.mrf.mxu0
    %v333 = vadd.f32 0.0, %v332
    %v334 = vpop.f32.mrf.mxu0
    %335 = vmatprep.mubr.f32.mxu0 0.0
    %336 = vmatmul.mubr.f32.gmra.mxu0 %v200
    %v337 = vpop.f32.mrf.mxu0
    %v338 = vadd.f32 0.0, %v337
    %v339 = vpop.f32.mrf.mxu0
    %340 = vmatprep.mubr.f32.mxu0 0.0
    %341 = vmatmul.mubr.f32.gmra.mxu0 %v203
    %v342 = vpop.f32.mrf.mxu0
    %v343 = vadd.f32 0.0, %v342
    %v344 = vpop.f32.mrf.mxu0
    %345 = vmatprep.mubr.f32.mxu0 0.0
    %346 = vmatmul.mubr.f32.gmra.mxu0 %v206
    %v347 = vpop.f32.mrf.mxu0
    %v348 = vadd.f32 0.0, %v347
    %v349 = vpop.f32.mrf.mxu0
    %350 = vmatprep.mubr.f32.mxu0 0.0
    %351 = vmatmul.mubr.f32.gmra.mxu0 %v209
    %v352 = vpop.f32.mrf.mxu0
    %v353 = vadd.f32 0.0, %v352
    %v354 = vpop.f32.mrf.mxu0
    %355 = vmatprep.mubr.f32.mxu0 0.0
    %356 = vmatmul.mubr.f32.gmra.mxu0 %v212
    %v357 = vpop.f32.mrf.mxu0
    %v358 = vadd.f32 0.0, %v357
    %v359 = vpop.f32.mrf.mxu0
    %360 = vmatprep.mubr.f32.mxu0 0.0
    %361 = vmatmul.mubr.f32.gmra.mxu0 %v215
    %v362 = vpop.f32.mrf.mxu0
    %v363 = vadd.f32 0.0, %v362
    %v364 = vpop.f32.mrf.mxu0
    %365 = vmatprep.mubr.f32.mxu0 0.0
    %366 = vmatmul.mubr.f32.gmra.mxu0 %v218
    %v367 = vpop.f32.mrf.mxu0
    %v368 = vadd.f32 0.0, %v367
    %v369 = vpop.f32.mrf.mxu0
    %370 = vmatprep.mubr.f32.mxu0 0.0
    %371 = vmatmul.mubr.f32.gmra.mxu0 %v221
    %v372 = vpop.f32.mrf.mxu0
    %v373 = vadd.f32 0.0, %v372
    %v374 = vpop.f32.mrf.mxu0
    %375 = vmatprep.mubr.f32.mxu0 0.0
    %376 = vmatmul.mubr.f32.gmra.mxu0 %v224
    %v377 = vpop.f32.mrf.mxu0
    %v378 = vadd.f32 0.0, %v377
    %v379 = vpop.f32.mrf.mxu0
    %380 = vdwg.mxu0
    %v382 = vsel %vm98, %v119, 0
    %v385 = vsel %vm98, %v120, 0
    %v388 = vsel %vm98, %v121, 0
    %v391 = vsel %vm98, %v122, 0
    %v394 = vsel %vm98, %v123, 0
    %v397 = vsel %vm98, %v124, 0
    %v400 = vsel %vm98, %v125, 0
    %v403 = vsel %vm98, %v126, 0
    %v406 = vsel %vm98, %v127, 0
    %v409 = vsel %vm98, %v128, 0
    %v412 = vsel %vm98, %v129, 0
    %v415 = vsel %vm98, %v130, 0
    %v418 = vsel %vm98, %v131, 0
    %v421 = vsel %vm98, %v132, 0
    %v424 = vsel %vm98, %v133, 0
    %v427 = vsel %vm98, %v134, 0
    %v430 = vsel %vm98, %v135, 0
    %v433 = vsel %vm98, %v136, 0
    %435 = vmatprep.subr.mxu0 0.0
    %436 = vmatpush1.msra.mxu0 0.0
    %437 = vmatprep.subr.mxu0 0.0
    %438 = vmatpush1.msra.mxu0 0.0
    %439 = vmatprep.subr.mxu0 0.0
    %440 = vmatpush1.msra.mxu0 0.0
    %441 = vmatprep.subr.mxu0 0.0
    %442 = vmatpush1.msra.mxu0 0.0
    %443 = vmatprep.subr.mxu0 0.0
    %444 = vmatpush1.msra.mxu0 0.0
    %445 = vmatprep.subr.mxu0 0.0
    %446 = vmatpush1.msra.mxu0 0.0
    %447 = vmatprep.subr.mxu0 0.0
    %448 = vmatpush1.msra.mxu0 0.0
    %449 = vmatprep.subr.mxu0 0.0
    %450 = vmatpush1.msra.mxu0 0.0
    %451 = vmatprep.subr.mxu0 0.0
    %452 = vmatpush1.msra.mxu0 %v144
    %453 = vmatprep.subr.mxu0 0.0
    %454 = vmatpush1.msra.mxu0 %v143
    %455 = vmatprep.subr.mxu0 0.0
    %456 = vmatpush1.msra.mxu0 %v142
    %457 = vmatprep.subr.mxu0 0.0
    %458 = vmatpush1.msra.mxu0 %v141
    %459 = vmatprep.subr.mxu0 0.0
    %460 = vmatpush1.msra.mxu0 %v140
    %461 = vmatprep.subr.mxu0 0.0
    %462 = vmatpush1.msra.mxu0 %v139
    %463 = vmatprep.subr.mxu0 0.0
    %464 = vmatpush1.msra.mxu0 %v138
    %465 = vmatprep.subr.mxu0 0.0
    %466 = vmatpush1.msra.mxu0 %v137
    %467 = vmatprep.subr.mxu0 0.0
    %468 = vmatpush2.msra.mxu0 0.0
    %469 = vmatprep.subr.mxu0 0.0
    %470 = vmatpush2.msra.mxu0 0.0
    %471 = vmatprep.subr.mxu0 0.0
    %472 = vmatpush2.msra.mxu0 0.0
    %473 = vmatprep.subr.mxu0 0.0
    %474 = vmatpush2.msra.mxu0 0.0
    %475 = vmatprep.subr.mxu0 0.0
    %476 = vmatpush2.msra.mxu0 0.0
    %477 = vmatprep.subr.mxu0 0.0
    %478 = vmatpush2.msra.mxu0 0.0
    %479 = vmatprep.subr.mxu0 0.0
    %480 = vmatpush2.msra.mxu0 0.0
    %481 = vmatprep.subr.mxu0 0.0
    %482 = vmatpush2.msra.mxu0 0.0
    %483 = vmatprep.subr.mxu0 0.0
    %484 = vmatpush2.msra.mxu0 0.0
    %485 = vmatprep.subr.mxu0 0.0
    %486 = vmatpush2.msra.mxu0 0.0
    %487 = vmatprep.subr.mxu0 0.0
    %488 = vmatpush2.msra.mxu0 0.0
    %489 = vmatprep.subr.mxu0 0.0
    %490 = vmatpush2.msra.mxu0 0.0
    %491 = vmatprep.subr.mxu0 0.0
    %492 = vmatpush2.msra.mxu0 0.0
    %493 = vmatprep.subr.mxu0 0.0
    %494 = vmatpush2.msra.mxu0 0.0
    %495 = vmatprep.subr.mxu0 0.0
    %496 = vmatpush2.msra.mxu0 0.0
    %497 = vmatprep.subr.mxu0 0.0
    %498 = vmatpush2.msra.mxu0 0.0
    %499 = vmatprep.mubr.f32.mxu0 0.0
    %500 = vmatmul.mubr.f32.gmra.mxu0 %v382
    %v501 = vpop.f32.mrf.mxu0
    %v502 = vadd.f32 %v293, %v501
    %v503 = vpop.f32.mrf.mxu0
    %504 = vmatprep.mubr.f32.mxu0 0.0
    %505 = vmatmul.mubr.f32.gmra.mxu0 %v385
    %v506 = vpop.f32.mrf.mxu0
    %v507 = vadd.f32 %v298, %v506
    %v508 = vpop.f32.mrf.mxu0
    %509 = vmatprep.mubr.f32.mxu0 0.0
    %510 = vmatmul.mubr.f32.gmra.mxu0 %v388
    %v511 = vpop.f32.mrf.mxu0
    %v512 = vadd.f32 %v303, %v511
    %v513 = vpop.f32.mrf.mxu0
    %514 = vmatprep.mubr.f32.mxu0 0.0
    %515 = vmatmul.mubr.f32.gmra.mxu0 %v391
    %v516 = vpop.f32.mrf.mxu0
    %v517 = vadd.f32 %v308, %v516
    %v518 = vpop.f32.mrf.mxu0
    %519 = vmatprep.mubr.f32.mxu0 0.0
    %520 = vmatmul.mubr.f32.gmra.mxu0 %v394
    %v521 = vpop.f32.mrf.mxu0
    %v522 = vadd.f32 %v313, %v521
    %v523 = vpop.f32.mrf.mxu0
    %524 = vmatprep.mubr.f32.mxu0 0.0
    %525 = vmatmul.mubr.f32.gmra.mxu0 %v397
    %v526 = vpop.f32.mrf.mxu0
    %v527 = vadd.f32 %v318, %v526
    %v528 = vpop.f32.mrf.mxu0
    %529 = vmatprep.mubr.f32.mxu0 0.0
    %530 = vmatmul.mubr.f32.gmra.mxu0 %v400
    %v531 = vpop.f32.mrf.mxu0
    %v532 = vadd.f32 %v323, %v531
    %v533 = vpop.f32.mrf.mxu0
    %534 = vmatprep.mubr.f32.mxu0 0.0
    %535 = vmatmul.mubr.f32.gmra.mxu0 %v403
    %v536 = vpop.f32.mrf.mxu0
    %v537 = vadd.f32 %v328, %v536
    %v538 = vpop.f32.mrf.mxu0
    %539 = vmatprep.mubr.f32.mxu0 0.0
    %540 = vmatmul.mubr.f32.gmra.mxu0 %v406
    %v541 = vpop.f32.mrf.mxu0
    %v542 = vadd.f32 %v333, %v541
    %v543 = vpop.f32.mrf.mxu0
    %544 = vmatprep.mubr.f32.mxu0 0.0
    %545 = vmatmul.mubr.f32.gmra.mxu0 %v409
    %v546 = vpop.f32.mrf.mxu0
    %v547 = vadd.f32 %v338, %v546
    %v548 = vpop.f32.mrf.mxu0
    %549 = vmatprep.mubr.f32.mxu0 0.0
    %550 = vmatmul.mubr.f32.gmra.mxu0 %v412
    %v551 = vpop.f32.mrf.mxu0
    %v552 = vadd.f32 %v343, %v551
    %v553 = vpop.f32.mrf.mxu0
    %554 = vmatprep.mubr.f32.mxu0 0.0
    %555 = vmatmul.mubr.f32.gmra.mxu0 %v415
    %v556 = vpop.f32.mrf.mxu0
    %v557 = vadd.f32 %v348, %v556
    %v558 = vpop.f32.mrf.mxu0
    %559 = vmatprep.mubr.f32.mxu0 0.0
    %560 = vmatmul.mubr.f32.gmra.mxu0 %v418
    %v561 = vpop.f32.mrf.mxu0
    %v562 = vadd.f32 %v353, %v561
    %v563 = vpop.f32.mrf.mxu0
    %564 = vmatprep.mubr.f32.mxu0 0.0
    %565 = vmatmul.mubr.f32.gmra.mxu0 %v421
    %v566 = vpop.f32.mrf.mxu0
    %v567 = vadd.f32 %v358, %v566
    %v568 = vpop.f32.mrf.mxu0
    %569 = vmatprep.mubr.f32.mxu0 0.0
    %570 = vmatmul.mubr.f32.gmra.mxu0 %v424
    %v571 = vpop.f32.mrf.mxu0
    %v572 = vadd.f32 %v363, %v571
    %v573 = vpop.f32.mrf.mxu0
    %574 = vmatprep.mubr.f32.mxu0 0.0
    %575 = vmatmul.mubr.f32.gmra.mxu0 %v427
    %v576 = vpop.f32.mrf.mxu0
    %v577 = vadd.f32 %v368, %v576
    %v578 = vpop.f32.mrf.mxu0
    %579 = vmatprep.mubr.f32.mxu0 0.0
    %580 = vmatmul.mubr.f32.gmra.mxu0 %v430
    %v581 = vpop.f32.mrf.mxu0
    %v582 = vadd.f32 %v373, %v581
    %v583 = vpop.f32.mrf.mxu0
    %584 = vmatprep.mubr.f32.mxu0 0.0
    %585 = vmatmul.mubr.f32.gmra.mxu0 %v433
    %v586 = vpop.f32.mrf.mxu0
    %v587 = vadd.f32 %v378, %v586
    %v588 = vpop.f32.mrf.mxu0
    %589 = vdwg.mxu0
    %v590 = vld [vmem:[%s0 + $0x2] sm:$0xff]
    %v591 = vld [vmem:[%s0 + $0xa] sm:$0xff]
    %v592 = vld [vmem:[%s0 + $0x12] sm:$0xff]
    %v593 = vld [vmem:[%s0 + $0x1a] sm:$0xff]
    %v594 = vld [vmem:[%s0 + $0x22] sm:$0xff]
    %v595 = vld [vmem:[%s0 + $0x2a] sm:$0xff]
    %v596 = vld [vmem:[%s0 + $0x32] sm:$0xff]
    %v597 = vld [vmem:[%s0 + $0x3a] sm:$0xff]
    %v598 = vld [vmem:[%s0 + $0x42] sm:$0xff]
    %v599 = vld [vmem:[%s0 + $0x4a] sm:$0xff]
    %v600 = vld [vmem:[%s0 + $0x52] sm:$0xff]
    %v601 = vld [vmem:[%s0 + $0x5a] sm:$0xff]
    %v602 = vld [vmem:[%s0 + $0x62] sm:$0xff]
    %v603 = vld [vmem:[%s0 + $0x6a] sm:$0xff]
    %v604 = vld [vmem:[%s0 + $0x72] sm:$0xff]
    %v605 = vld [vmem:[%s0 + $0x7a] sm:$0xff]
    %v606 = vld [vmem:[%s0 + $0x82] sm:$0xff]
    %v607 = vld [vmem:[%s0 + $0x8a] sm:$0x3]
    %s608 = scalar_lea.vmem [#allocation3], 128
    %v609 = vld [vmem:[%s608] sm:$0xff]
    %v610 = vld [vmem:[%s608 + $0x8] sm:$0xff]
    %v611 = vld [vmem:[%s608 + $0x10] sm:$0xff]
    %v612 = vld [vmem:[%s608 + $0x18] sm:$0xff]
    %v613 = vld [vmem:[%s608 + $0x20] sm:$0xff]
    %v614 = vld [vmem:[%s608 + $0x28] sm:$0xff]
    %v615 = vld [vmem:[%s608 + $0x30] sm:$0xff]
    %v616 = vld [vmem:[%s608 + $0x38] sm:$0xff]
    %v618 = vsel %vm98, %v590, 0
    %v621 = vsel %vm98, %v591, 0
    %v624 = vsel %vm98, %v592, 0
    %v627 = vsel %vm98, %v593, 0
    %v630 = vsel %vm98, %v594, 0
    %v633 = vsel %vm98, %v595, 0
    %v636 = vsel %vm98, %v596, 0
    %v639 = vsel %vm98, %v597, 0
    %v642 = vsel %vm98, %v598, 0
    %v645 = vsel %vm98, %v599, 0
    %v648 = vsel %vm98, %v600, 0
    %v651 = vsel %vm98, %v601, 0
    %v654 = vsel %vm98, %v602, 0
    %v657 = vsel %vm98, %v603, 0
    %v660 = vsel %vm98, %v604, 0
    %v663 = vsel %vm98, %v605, 0
    %v666 = vsel %vm98, %v606, 0
    %v669 = vsel %vm98, %v607, 0
    %671 = vmatprep.subr.mxu0 0.0
    %672 = vmatpush1.msra.mxu0 0.0
    %673 = vmatprep.subr.mxu0 0.0
    %674 = vmatpush1.msra.mxu0 0.0
    %675 = vmatprep.subr.mxu0 0.0
    %676 = vmatpush1.msra.mxu0 0.0
    %677 = vmatprep.subr.mxu0 0.0
    %678 = vmatpush1.msra.mxu0 0.0
    %679 = vmatprep.subr.mxu0 0.0
    %680 = vmatpush1.msra.mxu0 0.0
    %681 = vmatprep.subr.mxu0 0.0
    %682 = vmatpush1.msra.mxu0 0.0
    %683 = vmatprep.subr.mxu0 0.0
    %684 = vmatpush1.msra.mxu0 0.0
    %685 = vmatprep.subr.mxu0 0.0
    %686 = vmatpush1.msra.mxu0 0.0
    %687 = vmatprep.subr.mxu0 0.0
    %688 = vmatpush1.msra.mxu0 %v616
    %689 = vmatprep.subr.mxu0 0.0
    %690 = vmatpush1.msra.mxu0 %v615
    %691 = vmatprep.subr.mxu0 0.0
    %692 = vmatpush1.msra.mxu0 %v614
    %693 = vmatprep.subr.mxu0 0.0
    %694 = vmatpush1.msra.mxu0 %v613
    %695 = vmatprep.subr.mxu0 0.0
    %696 = vmatpush1.msra.mxu0 %v612
    %697 = vmatprep.subr.mxu0 0.0
    %698 = vmatpush1.msra.mxu0 %v611
    %699 = vmatprep.subr.mxu0 0.0
    %700 = vmatpush1.msra.mxu0 %v610
    %701 = vmatprep.subr.mxu0 0.0
    %702 = vmatpush1.msra.mxu0 %v609
    %703 = vmatprep.subr.mxu0 0.0
    %704 = vmatpush2.msra.mxu0 0.0
    %705 = vmatprep.subr.mxu0 0.0
    %706 = vmatpush2.msra.mxu0 0.0
    %707 = vmatprep.subr.mxu0 0.0
    %708 = vmatpush2.msra.mxu0 0.0
    %709 = vmatprep.subr.mxu0 0.0
    %710 = vmatpush2.msra.mxu0 0.0
    %711 = vmatprep.subr.mxu0 0.0
    %712 = vmatpush2.msra.mxu0 0.0
    %713 = vmatprep.subr.mxu0 0.0
    %714 = vmatpush2.msra.mxu0 0.0
    %715 = vmatprep.subr.mxu0 0.0
    %716 = vmatpush2.msra.mxu0 0.0
    %717 = vmatprep.subr.mxu0 0.0
    %718 = vmatpush2.msra.mxu0 0.0
    %719 = vmatprep.subr.mxu0 0.0
    %720 = vmatpush2.msra.mxu0 0.0
    %721 = vmatprep.subr.mxu0 0.0
    %722 = vmatpush2.msra.mxu0 0.0
    %723 = vmatprep.subr.mxu0 0.0
    %724 = vmatpush2.msra.mxu0 0.0
    %725 = vmatprep.subr.mxu0 0.0
    %726 = vmatpush2.msra.mxu0 0.0
    %727 = vmatprep.subr.mxu0 0.0
    %728 = vmatpush2.msra.mxu0 0.0
    %729 = vmatprep.subr.mxu0 0.0
    %730 = vmatpush2.msra.mxu0 0.0
    %731 = vmatprep.subr.mxu0 0.0
    %732 = vmatpush2.msra.mxu0 0.0
    %733 = vmatprep.subr.mxu0 0.0
    %734 = vmatpush2.msra.mxu0 0.0
    %735 = vmatprep.mubr.f32.mxu0 0.0
    %736 = vmatmul.mubr.f32.gmra.mxu0 %v618
    %v737 = vpop.f32.mrf.mxu0
    %v738 = vadd.f32 0.0, %v737
    %v739 = vpop.f32.mrf.mxu0
    %740 = vmatprep.mubr.f32.mxu0 0.0
    %741 = vmatmul.mubr.f32.gmra.mxu0 %v621
    %v742 = vpop.f32.mrf.mxu0
    %v743 = vadd.f32 0.0, %v742
    %v744 = vpop.f32.mrf.mxu0
    %745 = vmatprep.mubr.f32.mxu0 0.0
    %746 = vmatmul.mubr.f32.gmra.mxu0 %v624
    %v747 = vpop.f32.mrf.mxu0
    %v748 = vadd.f32 0.0, %v747
    %v749 = vpop.f32.mrf.mxu0
    %750 = vmatprep.mubr.f32.mxu0 0.0
    %751 = vmatmul.mubr.f32.gmra.mxu0 %v627
    %v752 = vpop.f32.mrf.mxu0
    %v753 = vadd.f32 0.0, %v752
    %v754 = vpop.f32.mrf.mxu0
    %755 = vmatprep.mubr.f32.mxu0 0.0
    %756 = vmatmul.mubr.f32.gmra.mxu0 %v630
    %v757 = vpop.f32.mrf.mxu0
    %v758 = vadd.f32 0.0, %v757
    %v759 = vpop.f32.mrf.mxu0
    %760 = vmatprep.mubr.f32.mxu0 0.0
    %761 = vmatmul.mubr.f32.gmra.mxu0 %v633
    %v762 = vpop.f32.mrf.mxu0
    %v763 = vadd.f32 0.0, %v762
    %v764 = vpop.f32.mrf.mxu0
    %765 = vmatprep.mubr.f32.mxu0 0.0
    %766 = vmatmul.mubr.f32.gmra.mxu0 %v636
    %v767 = vpop.f32.mrf.mxu0
    %v768 = vadd.f32 0.0, %v767
    %v769 = vpop.f32.mrf.mxu0
    %770 = vmatprep.mubr.f32.mxu0 0.0
    %771 = vmatmul.mubr.f32.gmra.mxu0 %v639
    %v772 = vpop.f32.mrf.mxu0
    %v773 = vadd.f32 0.0, %v772
    %v774 = vpop.f32.mrf.mxu0
    %775 = vmatprep.mubr.f32.mxu0 0.0
    %776 = vmatmul.mubr.f32.gmra.mxu0 %v642
    %v777 = vpop.f32.mrf.mxu0
    %v778 = vadd.f32 0.0, %v777
    %v779 = vpop.f32.mrf.mxu0
    %780 = vmatprep.mubr.f32.mxu0 0.0
    %781 = vmatmul.mubr.f32.gmra.mxu0 %v645
    %v782 = vpop.f32.mrf.mxu0
    %v783 = vadd.f32 0.0, %v782
    %v784 = vpop.f32.mrf.mxu0
    %785 = vmatprep.mubr.f32.mxu0 0.0
    %786 = vmatmul.mubr.f32.gmra.mxu0 %v648
    %v787 = vpop.f32.mrf.mxu0
    %v788 = vadd.f32 0.0, %v787
    %v789 = vpop.f32.mrf.mxu0
    %790 = vmatprep.mubr.f32.mxu0 0.0
    %791 = vmatmul.mubr.f32.gmra.mxu0 %v651
    %v792 = vpop.f32.mrf.mxu0
    %v793 = vadd.f32 0.0, %v792
    %v794 = vpop.f32.mrf.mxu0
    %795 = vmatprep.mubr.f32.mxu0 0.0
    %796 = vmatmul.mubr.f32.gmra.mxu0 %v654
    %v797 = vpop.f32.mrf.mxu0
    %v798 = vadd.f32 0.0, %v797
    %v799 = vpop.f32.mrf.mxu0
    %800 = vmatprep.mubr.f32.mxu0 0.0
    %801 = vmatmul.mubr.f32.gmra.mxu0 %v657
    %v802 = vpop.f32.mrf.mxu0
    %v803 = vadd.f32 0.0, %v802
    %v804 = vpop.f32.mrf.mxu0
    %805 = vmatprep.mubr.f32.mxu0 0.0
    %806 = vmatmul.mubr.f32.gmra.mxu0 %v660
    %v807 = vpop.f32.mrf.mxu0
    %v808 = vadd.f32 0.0, %v807
    %v809 = vpop.f32.mrf.mxu0
    %810 = vmatprep.mubr.f32.mxu0 0.0
    %811 = vmatmul.mubr.f32.gmra.mxu0 %v663
    %v812 = vpop.f32.mrf.mxu0
    %v813 = vadd.f32 0.0, %v812
    %v814 = vpop.f32.mrf.mxu0
    %815 = vmatprep.mubr.f32.mxu0 0.0
    %816 = vmatmul.mubr.f32.gmra.mxu0 %v666
    %v817 = vpop.f32.mrf.mxu0
    %v818 = vadd.f32 0.0, %v817
    %v819 = vpop.f32.mrf.mxu0
    %820 = vmatprep.mubr.f32.mxu0 0.0
    %821 = vmatmul.mubr.f32.gmra.mxu0 %v669
    %v822 = vpop.f32.mrf.mxu0
    %v823 = vadd.f32 0.0, %v822
    %v824 = vpop.f32.mrf.mxu0
    %825 = vdwg.mxu0
    %v826 = vadd.f32 %v502, %v738
    %v827 = vadd.f32 %v507, %v743
    %v828 = vadd.f32 %v512, %v748
    %v829 = vadd.f32 %v517, %v753
    %v830 = vadd.f32 %v522, %v758
    %v831 = vadd.f32 %v527, %v763
    %v832 = vadd.f32 %v532, %v768
    %v833 = vadd.f32 %v537, %v773
    %v834 = vadd.f32 %v542, %v778
    %v835 = vadd.f32 %v547, %v783
    %v836 = vadd.f32 %v552, %v788
    %v837 = vadd.f32 %v557, %v793
    %v838 = vadd.f32 %v562, %v798
    %v839 = vadd.f32 %v567, %v803
    %v840 = vadd.f32 %v572, %v808
    %v841 = vadd.f32 %v577, %v813
    %v842 = vadd.f32 %v582, %v818
    %v843 = vadd.f32 %v587, %v823
    %v844 = vld [vmem:[%s0 + $0xa] sm:$0xff]
    %v845 = vld [vmem:[%s0 + $0x12] sm:$0xff]
    %v846 = vld [vmem:[%s0 + $0x1a] sm:$0xff]
    %v847 = vld [vmem:[%s0 + $0x22] sm:$0xff]
    %v848 = vld [vmem:[%s0 + $0x2a] sm:$0xff]
    %v849 = vld [vmem:[%s0 + $0x32] sm:$0xff]
    %v850 = vld [vmem:[%s0 + $0x3a] sm:$0xff]
    %v851 = vld [vmem:[%s0 + $0x42] sm:$0xff]
    %v852 = vld [vmem:[%s0 + $0x4a] sm:$0xff]
    %v853 = vld [vmem:[%s0 + $0x52] sm:$0xff]
    %v854 = vld [vmem:[%s0 + $0x5a] sm:$0xff]
    %v855 = vld [vmem:[%s0 + $0x62] sm:$0xff]
    %v856 = vld [vmem:[%s0 + $0x6a] sm:$0xff]
    %v857 = vld [vmem:[%s0 + $0x72] sm:$0xff]
    %v858 = vld [vmem:[%s0 + $0x7a] sm:$0xff]
    %v859 = vld [vmem:[%s0 + $0x82] sm:$0xff]
    %v860 = vld [vmem:[%s0 + $0x8a] sm:$0xff]
    %v861 = vld [vmem:[%s0 + $0x92] sm:$0x3]
    %s862 = scalar_lea.vmem [#allocation3], 192
    %v863 = vld [vmem:[%s862] sm:$0xff]
    %v864 = vld [vmem:[%s862 + $0x8] sm:$0xff]
    %v865 = vld [vmem:[%s862 + $0x10] sm:$0xff]
    %v866 = vld [vmem:[%s862 + $0x18] sm:$0xff]
    %v867 = vld [vmem:[%s862 + $0x20] sm:$0xff]
    %v868 = vld [vmem:[%s862 + $0x28] sm:$0xff]
    %v869 = vld [vmem:[%s862 + $0x30] sm:$0xff]
    %v870 = vld [vmem:[%s862 + $0x38] sm:$0xff]
    %v872 = vsel %vm98, %v844, 0
    %v875 = vsel %vm98, %v845, 0
    %v878 = vsel %vm98, %v846, 0
    %v881 = vsel %vm98, %v847, 0
    %v884 = vsel %vm98, %v848, 0
    %v887 = vsel %vm98, %v849, 0
    %v890 = vsel %vm98, %v850, 0
    %v893 = vsel %vm98, %v851, 0
    %v896 = vsel %vm98, %v852, 0
    %v899 = vsel %vm98, %v853, 0
    %v902 = vsel %vm98, %v854, 0
    %v905 = vsel %vm98, %v855, 0
    %v908 = vsel %vm98, %v856, 0
    %v911 = vsel %vm98, %v857, 0
    %v914 = vsel %vm98, %v858, 0
    %v917 = vsel %vm98, %v859, 0
    %v920 = vsel %vm98, %v860, 0
    %v923 = vsel %vm98, %v861, 0
    %925 = vmatprep.subr.mxu0 0.0
    %926 = vmatpush1.msra.mxu0 0.0
    %927 = vmatprep.subr.mxu0 0.0
    %928 = vmatpush1.msra.mxu0 0.0
    %929 = vmatprep.subr.mxu0 0.0
    %930 = vmatpush1.msra.mxu0 0.0
    %931 = vmatprep.subr.mxu0 0.0
    %932 = vmatpush1.msra.mxu0 0.0
    %933 = vmatprep.subr.mxu0 0.0
    %934 = vmatpush1.msra.mxu0 0.0
    %935 = vmatprep.subr.mxu0 0.0
    %936 = vmatpush1.msra.mxu0 0.0
    %937 = vmatprep.subr.mxu0 0.0
    %938 = vmatpush1.msra.mxu0 0.0
    %939 = vmatprep.subr.mxu0 0.0
    %940 = vmatpush1.msra.mxu0 0.0
    %941 = vmatprep.subr.mxu0 0.0
    %942 = vmatpush1.msra.mxu0 %v870
    %943 = vmatprep.subr.mxu0 0.0
    %944 = vmatpush1.msra.mxu0 %v869
    %945 = vmatprep.subr.mxu0 0.0
    %946 = vmatpush1.msra.mxu0 %v868
    %947 = vmatprep.subr.mxu0 0.0
    %948 = vmatpush1.msra.mxu0 %v867
    %949 = vmatprep.subr.mxu0 0.0
    %950 = vmatpush1.msra.mxu0 %v866
    %951 = vmatprep.subr.mxu0 0.0
    %952 = vmatpush1.msra.mxu0 %v865
    %953 = vmatprep.subr.mxu0 0.0
    %954 = vmatpush1.msra.mxu0 %v864
    %955 = vmatprep.subr.mxu0 0.0
    %956 = vmatpush1.msra.mxu0 %v863
    %957 = vmatprep.subr.mxu0 0.0
    %958 = vmatpush2.msra.mxu0 0.0
    %959 = vmatprep.subr.mxu0 0.0
    %960 = vmatpush2.msra.mxu0 0.0
    %961 = vmatprep.subr.mxu0 0.0
    %962 = vmatpush2.msra.mxu0 0.0
    %963 = vmatprep.subr.mxu0 0.0
    %964 = vmatpush2.msra.mxu0 0.0
    %965 = vmatprep.subr.mxu0 0.0
    %966 = vmatpush2.msra.mxu0 0.0
    %967 = vmatprep.subr.mxu0 0.0
    %968 = vmatpush2.msra.mxu0 0.0
    %969 = vmatprep.subr.mxu0 0.0
    %970 = vmatpush2.msra.mxu0 0.0
    %971 = vmatprep.subr.mxu0 0.0
    %972 = vmatpush2.msra.mxu0 0.0
    %973 = vmatprep.subr.mxu0 0.0
    %974 = vmatpush2.msra.mxu0 0.0
    %975 = vmatprep.subr.mxu0 0.0
    %976 = vmatpush2.msra.mxu0 0.0
    %977 = vmatprep.subr.mxu0 0.0
    %978 = vmatpush2.msra.mxu0 0.0
    %979 = vmatprep.subr.mxu0 0.0
    %980 = vmatpush2.msra.mxu0 0.0
    %981 = vmatprep.subr.mxu0 0.0
    %982 = vmatpush2.msra.mxu0 0.0
    %983 = vmatprep.subr.mxu0 0.0
    %984 = vmatpush2.msra.mxu0 0.0
    %985 = vmatprep.subr.mxu0 0.0
    %986 = vmatpush2.msra.mxu0 0.0
    %987 = vmatprep.subr.mxu0 0.0
    %988 = vmatpush2.msra.mxu0 0.0
    %989 = vmatprep.mubr.f32.mxu0 0.0
    %990 = vmatmul.mubr.f32.gmra.mxu0 %v872
    %v991 = vpop.f32.mrf.mxu0
    %v992 = vadd.f32 0.0, %v991
    %v993 = vpop.f32.mrf.mxu0
    %994 = vmatprep.mubr.f32.mxu0 0.0
    %995 = vmatmul.mubr.f32.gmra.mxu0 %v875
    %v996 = vpop.f32.mrf.mxu0
    %v997 = vadd.f32 0.0, %v996
    %v998 = vpop.f32.mrf.mxu0
    %999 = vmatprep.mubr.f32.mxu0 0.0
    %1000 = vmatmul.mubr.f32.gmra.mxu0 %v878
    %v1001 = vpop.f32.mrf.mxu0
    %v1002 = vadd.f32 0.0, %v1001
    %v1003 = vpop.f32.mrf.mxu0
    %1004 = vmatprep.mubr.f32.mxu0 0.0
    %1005 = vmatmul.mubr.f32.gmra.mxu0 %v881
    %v1006 = vpop.f32.mrf.mxu0
    %v1007 = vadd.f32 0.0, %v1006
    %v1008 = vpop.f32.mrf.mxu0
    %1009 = vmatprep.mubr.f32.mxu0 0.0
    %1010 = vmatmul.mubr.f32.gmra.mxu0 %v884
    %v1011 = vpop.f32.mrf.mxu0
    %v1012 = vadd.f32 0.0, %v1011
    %v1013 = vpop.f32.mrf.mxu0
    %1014 = vmatprep.mubr.f32.mxu0 0.0
    %1015 = vmatmul.mubr.f32.gmra.mxu0 %v887
    %v1016 = vpop.f32.mrf.mxu0
    %v1017 = vadd.f32 0.0, %v1016
    %v1018 = vpop.f32.mrf.mxu0
    %1019 = vmatprep.mubr.f32.mxu0 0.0
    %1020 = vmatmul.mubr.f32.gmra.mxu0 %v890
    %v1021 = vpop.f32.mrf.mxu0
    %v1022 = vadd.f32 0.0, %v1021
    %v1023 = vpop.f32.mrf.mxu0
    %1024 = vmatprep.mubr.f32.mxu0 0.0
    %1025 = vmatmul.mubr.f32.gmra.mxu0 %v893
    %v1026 = vpop.f32.mrf.mxu0
    %v1027 = vadd.f32 0.0, %v1026
    %v1028 = vpop.f32.mrf.mxu0
    %1029 = vmatprep.mubr.f32.mxu0 0.0
    %1030 = vmatmul.mubr.f32.gmra.mxu0 %v896
    %v1031 = vpop.f32.mrf.mxu0
    %v1032 = vadd.f32 0.0, %v1031
    %v1033 = vpop.f32.mrf.mxu0
    %1034 = vmatprep.mubr.f32.mxu0 0.0
    %1035 = vmatmul.mubr.f32.gmra.mxu0 %v899
    %v1036 = vpop.f32.mrf.mxu0
    %v1037 = vadd.f32 0.0, %v1036
    %v1038 = vpop.f32.mrf.mxu0
    %1039 = vmatprep.mubr.f32.mxu0 0.0
    %1040 = vmatmul.mubr.f32.gmra.mxu0 %v902
    %v1041 = vpop.f32.mrf.mxu0
    %v1042 = vadd.f32 0.0, %v1041
    %v1043 = vpop.f32.mrf.mxu0
    %1044 = vmatprep.mubr.f32.mxu0 0.0
    %1045 = vmatmul.mubr.f32.gmra.mxu0 %v905
    %v1046 = vpop.f32.mrf.mxu0
    %v1047 = vadd.f32 0.0, %v1046
    %v1048 = vpop.f32.mrf.mxu0
    %1049 = vmatprep.mubr.f32.mxu0 0.0
    %1050 = vmatmul.mubr.f32.gmra.mxu0 %v908
    %v1051 = vpop.f32.mrf.mxu0
    %v1052 = vadd.f32 0.0, %v1051
    %v1053 = vpop.f32.mrf.mxu0
    %1054 = vmatprep.mubr.f32.mxu0 0.0
    %1055 = vmatmul.mubr.f32.gmra.mxu0 %v911
    %v1056 = vpop.f32.mrf.mxu0
    %v1057 = vadd.f32 0.0, %v1056
    %v1058 = vpop.f32.mrf.mxu0
    %1059 = vmatprep.mubr.f32.mxu0 0.0
    %1060 = vmatmul.mubr.f32.gmra.mxu0 %v914
    %v1061 = vpop.f32.mrf.mxu0
    %v1062 = vadd.f32 0.0, %v1061
    %v1063 = vpop.f32.mrf.mxu0
    %1064 = vmatprep.mubr.f32.mxu0 0.0
    %1065 = vmatmul.mubr.f32.gmra.mxu0 %v917
    %v1066 = vpop.f32.mrf.mxu0
    %v1067 = vadd.f32 0.0, %v1066
    %v1068 = vpop.f32.mrf.mxu0
    %1069 = vmatprep.mubr.f32.mxu0 0.0
    %1070 = vmatmul.mubr.f32.gmra.mxu0 %v920
    %v1071 = vpop.f32.mrf.mxu0
    %v1072 = vadd.f32 0.0, %v1071
    %v1073 = vpop.f32.mrf.mxu0
    %1074 = vmatprep.mubr.f32.mxu0 0.0
    %1075 = vmatmul.mubr.f32.gmra.mxu0 %v923
    %v1076 = vpop.f32.mrf.mxu0
    %v1077 = vadd.f32 0.0, %v1076
    %v1078 = vpop.f32.mrf.mxu0
    %1079 = vdwg.mxu0
    %v1080 = vadd.f32 %v826, %v992
    %v1081 = vadd.f32 %v827, %v997
    %v1082 = vadd.f32 %v828, %v1002
    %v1083 = vadd.f32 %v829, %v1007
    %v1084 = vadd.f32 %v830, %v1012
    %v1085 = vadd.f32 %v831, %v1017
    %v1086 = vadd.f32 %v832, %v1022
    %v1087 = vadd.f32 %v833, %v1027
    %v1088 = vadd.f32 %v834, %v1032
    %v1089 = vadd.f32 %v835, %v1037
    %v1090 = vadd.f32 %v836, %v1042
    %v1091 = vadd.f32 %v837, %v1047
    %v1092 = vadd.f32 %v838, %v1052
    %v1093 = vadd.f32 %v839, %v1057
    %v1094 = vadd.f32 %v840, %v1062
    %v1095 = vadd.f32 %v841, %v1067
    %v1096 = vadd.f32 %v842, %v1072
    %v1097 = vadd.f32 %v843, %v1077
    %v1098 = vld [vmem:[%s0 + $0xb] sm:$0xff]
    %v1099 = vld [vmem:[%s0 + $0x13] sm:$0xff]
    %v1100 = vld [vmem:[%s0 + $0x1b] sm:$0xff]
    %v1101 = vld [vmem:[%s0 + $0x23] sm:$0xff]
    %v1102 = vld [vmem:[%s0 + $0x2b] sm:$0xff]
    %v1103 = vld [vmem:[%s0 + $0x33] sm:$0xff]
    %v1104 = vld [vmem:[%s0 + $0x3b] sm:$0xff]
    %v1105 = vld [vmem:[%s0 + $0x43] sm:$0xff]
    %v1106 = vld [vmem:[%s0 + $0x4b] sm:$0xff]
    %v1107 = vld [vmem:[%s0 + $0x53] sm:$0xff]
    %v1108 = vld [vmem:[%s0 + $0x5b] sm:$0xff]
    %v1109 = vld [vmem:[%s0 + $0x63] sm:$0xff]
    %v1110 = vld [vmem:[%s0 + $0x6b] sm:$0xff]
    %v1111 = vld [vmem:[%s0 + $0x73] sm:$0xff]
    %v1112 = vld [vmem:[%s0 + $0x7b] sm:$0xff]
    %v1113 = vld [vmem:[%s0 + $0x83] sm:$0xff]
    %v1114 = vld [vmem:[%s0 + $0x8b] sm:$0xff]
    %v1115 = vld [vmem:[%s0 + $0x93] sm:$0x3]
    %s1116 = scalar_lea.vmem [#allocation3], 256
    %v1117 = vld [vmem:[%s1116] sm:$0xff]
    %v1118 = vld [vmem:[%s1116 + $0x8] sm:$0xff]
    %v1119 = vld [vmem:[%s1116 + $0x10] sm:$0xff]
    %v1120 = vld [vmem:[%s1116 + $0x18] sm:$0xff]
    %v1121 = vld [vmem:[%s1116 + $0x20] sm:$0xff]
    %v1122 = vld [vmem:[%s1116 + $0x28] sm:$0xff]
    %v1123 = vld [vmem:[%s1116 + $0x30] sm:$0xff]
    %v1124 = vld [vmem:[%s1116 + $0x38] sm:$0xff]
    %v1126 = vsel %vm98, %v1098, 0
    %v1129 = vsel %vm98, %v1099, 0
    %v1132 = vsel %vm98, %v1100, 0
    %v1135 = vsel %vm98, %v1101, 0
    %v1138 = vsel %vm98, %v1102, 0
    %v1141 = vsel %vm98, %v1103, 0
    %v1144 = vsel %vm98, %v1104, 0
    %v1147 = vsel %vm98, %v1105, 0
    %v1150 = vsel %vm98, %v1106, 0
    %v1153 = vsel %vm98, %v1107, 0
    %v1156 = vsel %vm98, %v1108, 0
    %v1159 = vsel %vm98, %v1109, 0
    %v1162 = vsel %vm98, %v1110, 0
    %v1165 = vsel %vm98, %v1111, 0
    %v1168 = vsel %vm98, %v1112, 0
    %v1171 = vsel %vm98, %v1113, 0
    %v1174 = vsel %vm98, %v1114, 0
    %v1177 = vsel %vm98, %v1115, 0
    %1179 = vmatprep.subr.mxu0 0.0
    %1180 = vmatpush1.msra.mxu0 0.0
    %1181 = vmatprep.subr.mxu0 0.0
    %1182 = vmatpush1.msra.mxu0 0.0
    %1183 = vmatprep.subr.mxu0 0.0
    %1184 = vmatpush1.msra.mxu0 0.0
    %1185 = vmatprep.subr.mxu0 0.0
    %1186 = vmatpush1.msra.mxu0 0.0
    %1187 = vmatprep.subr.mxu0 0.0
    %1188 = vmatpush1.msra.mxu0 0.0
    %1189 = vmatprep.subr.mxu0 0.0
    %1190 = vmatpush1.msra.mxu0 0.0
    %1191 = vmatprep.subr.mxu0 0.0
    %1192 = vmatpush1.msra.mxu0 0.0
    %1193 = vmatprep.subr.mxu0 0.0
    %1194 = vmatpush1.msra.mxu0 0.0
    %1195 = vmatprep.subr.mxu0 0.0
    %1196 = vmatpush1.msra.mxu0 %v1124
    %1197 = vmatprep.subr.mxu0 0.0
    %1198 = vmatpush1.msra.mxu0 %v1123
    %1199 = vmatprep.subr.mxu0 0.0
    %1200 = vmatpush1.msra.mxu0 %v1122
    %1201 = vmatprep.subr.mxu0 0.0
    %1202 = vmatpush1.msra.mxu0 %v1121
    %1203 = vmatprep.subr.mxu0 0.0
    %1204 = vmatpush1.msra.mxu0 %v1120
    %1205 = vmatprep.subr.mxu0 0.0
    %1206 = vmatpush1.msra.mxu0 %v1119
    %1207 = vmatprep.subr.mxu0 0.0
    %1208 = vmatpush1.msra.mxu0 %v1118
    %1209 = vmatprep.subr.mxu0 0.0
    %1210 = vmatpush1.msra.mxu0 %v1117
    %1211 = vmatprep.subr.mxu0 0.0
    %1212 = vmatpush2.msra.mxu0 0.0
    %1213 = vmatprep.subr.mxu0 0.0
    %1214 = vmatpush2.msra.mxu0 0.0
    %1215 = vmatprep.subr.mxu0 0.0
    %1216 = vmatpush2.msra.mxu0 0.0
    %1217 = vmatprep.subr.mxu0 0.0
    %1218 = vmatpush2.msra.mxu0 0.0
    %1219 = vmatprep.subr.mxu0 0.0
    %1220 = vmatpush2.msra.mxu0 0.0
    %1221 = vmatprep.subr.mxu0 0.0
    %1222 = vmatpush2.msra.mxu0 0.0
    %1223 = vmatprep.subr.mxu0 0.0
    %1224 = vmatpush2.msra.mxu0 0.0
    %1225 = vmatprep.subr.mxu0 0.0
    %1226 = vmatpush2.msra.mxu0 0.0
    %1227 = vmatprep.subr.mxu0 0.0
    %1228 = vmatpush2.msra.mxu0 0.0
    %1229 = vmatprep.subr.mxu0 0.0
    %1230 = vmatpush2.msra.mxu0 0.0
    %1231 = vmatprep.subr.mxu0 0.0
    %1232 = vmatpush2.msra.mxu0 0.0
    %1233 = vmatprep.subr.mxu0 0.0
    %1234 = vmatpush2.msra.mxu0 0.0
    %1235 = vmatprep.subr.mxu0 0.0
    %1236 = vmatpush2.msra.mxu0 0.0
    %1237 = vmatprep.subr.mxu0 0.0
    %1238 = vmatpush2.msra.mxu0 0.0
    %1239 = vmatprep.subr.mxu0 0.0
    %1240 = vmatpush2.msra.mxu0 0.0
    %1241 = vmatprep.subr.mxu0 0.0
    %1242 = vmatpush2.msra.mxu0 0.0
    %1243 = vmatprep.mubr.f32.mxu0 0.0
    %1244 = vmatmul.mubr.f32.gmra.mxu0 %v1126
    %v1245 = vpop.f32.mrf.mxu0
    %v1246 = vadd.f32 0.0, %v1245
    %v1247 = vpop.f32.mrf.mxu0
    %1248 = vmatprep.mubr.f32.mxu0 0.0
    %1249 = vmatmul.mubr.f32.gmra.mxu0 %v1129
    %v1250 = vpop.f32.mrf.mxu0
    %v1251 = vadd.f32 0.0, %v1250
    %v1252 = vpop.f32.mrf.mxu0
    %1253 = vmatprep.mubr.f32.mxu0 0.0
    %1254 = vmatmul.mubr.f32.gmra.mxu0 %v1132
    %v1255 = vpop.f32.mrf.mxu0
    %v1256 = vadd.f32 0.0, %v1255
    %v1257 = vpop.f32.mrf.mxu0
    %1258 = vmatprep.mubr.f32.mxu0 0.0
    %1259 = vmatmul.mubr.f32.gmra.mxu0 %v1135
    %v1260 = vpop.f32.mrf.mxu0
    %v1261 = vadd.f32 0.0, %v1260
    %v1262 = vpop.f32.mrf.mxu0
    %1263 = vmatprep.mubr.f32.mxu0 0.0
    %1264 = vmatmul.mubr.f32.gmra.mxu0 %v1138
    %v1265 = vpop.f32.mrf.mxu0
    %v1266 = vadd.f32 0.0, %v1265
    %v1267 = vpop.f32.mrf.mxu0
    %1268 = vmatprep.mubr.f32.mxu0 0.0
    %1269 = vmatmul.mubr.f32.gmra.mxu0 %v1141
    %v1270 = vpop.f32.mrf.mxu0
    %v1271 = vadd.f32 0.0, %v1270
    %v1272 = vpop.f32.mrf.mxu0
    %1273 = vmatprep.mubr.f32.mxu0 0.0
    %1274 = vmatmul.mubr.f32.gmra.mxu0 %v1144
    %v1275 = vpop.f32.mrf.mxu0
    %v1276 = vadd.f32 0.0, %v1275
    %v1277 = vpop.f32.mrf.mxu0
    %1278 = vmatprep.mubr.f32.mxu0 0.0
    %1279 = vmatmul.mubr.f32.gmra.mxu0 %v1147
    %v1280 = vpop.f32.mrf.mxu0
    %v1281 = vadd.f32 0.0, %v1280
    %v1282 = vpop.f32.mrf.mxu0
    %1283 = vmatprep.mubr.f32.mxu0 0.0
    %1284 = vmatmul.mubr.f32.gmra.mxu0 %v1150
    %v1285 = vpop.f32.mrf.mxu0
    %v1286 = vadd.f32 0.0, %v1285
    %v1287 = vpop.f32.mrf.mxu0
    %1288 = vmatprep.mubr.f32.mxu0 0.0
    %1289 = vmatmul.mubr.f32.gmra.mxu0 %v1153
    %v1290 = vpop.f32.mrf.mxu0
    %v1291 = vadd.f32 0.0, %v1290
    %v1292 = vpop.f32.mrf.mxu0
    %1293 = vmatprep.mubr.f32.mxu0 0.0
    %1294 = vmatmul.mubr.f32.gmra.mxu0 %v1156
    %v1295 = vpop.f32.mrf.mxu0
    %v1296 = vadd.f32 0.0, %v1295
    %v1297 = vpop.f32.mrf.mxu0
    %1298 = vmatprep.mubr.f32.mxu0 0.0
    %1299 = vmatmul.mubr.f32.gmra.mxu0 %v1159
    %v1300 = vpop.f32.mrf.mxu0
    %v1301 = vadd.f32 0.0, %v1300
    %v1302 = vpop.f32.mrf.mxu0
    %1303 = vmatprep.mubr.f32.mxu0 0.0
    %1304 = vmatmul.mubr.f32.gmra.mxu0 %v1162
    %v1305 = vpop.f32.mrf.mxu0
    %v1306 = vadd.f32 0.0, %v1305
    %v1307 = vpop.f32.mrf.mxu0
    %1308 = vmatprep.mubr.f32.mxu0 0.0
    %1309 = vmatmul.mubr.f32.gmra.mxu0 %v1165
    %v1310 = vpop.f32.mrf.mxu0
    %v1311 = vadd.f32 0.0, %v1310
    %v1312 = vpop.f32.mrf.mxu0
    %1313 = vmatprep.mubr.f32.mxu0 0.0
    %1314 = vmatmul.mubr.f32.gmra.mxu0 %v1168
    %v1315 = vpop.f32.mrf.mxu0
    %v1316 = vadd.f32 0.0, %v1315
    %v1317 = vpop.f32.mrf.mxu0
    %1318 = vmatprep.mubr.f32.mxu0 0.0
    %1319 = vmatmul.mubr.f32.gmra.mxu0 %v1171
    %v1320 = vpop.f32.mrf.mxu0
    %v1321 = vadd.f32 0.0, %v1320
    %v1322 = vpop.f32.mrf.mxu0
    %1323 = vmatprep.mubr.f32.mxu0 0.0
    %1324 = vmatmul.mubr.f32.gmra.mxu0 %v1174
    %v1325 = vpop.f32.mrf.mxu0
    %v1326 = vadd.f32 0.0, %v1325
    %v1327 = vpop.f32.mrf.mxu0
    %1328 = vmatprep.mubr.f32.mxu0 0.0
    %1329 = vmatmul.mubr.f32.gmra.mxu0 %v1177
    %v1330 = vpop.f32.mrf.mxu0
    %v1331 = vadd.f32 0.0, %v1330
    %v1332 = vpop.f32.mrf.mxu0
    %1333 = vdwg.mxu0
    %v1334 = vadd.f32 %v1080, %v1246
    %v1335 = vadd.f32 %v1081, %v1251
    %v1336 = vadd.f32 %v1082, %v1256
    %v1337 = vadd.f32 %v1083, %v1261
    %v1338 = vadd.f32 %v1084, %v1266
    %v1339 = vadd.f32 %v1085, %v1271
    %v1340 = vadd.f32 %v1086, %v1276
    %v1341 = vadd.f32 %v1087, %v1281
    %v1342 = vadd.f32 %v1088, %v1286
    %v1343 = vadd.f32 %v1089, %v1291
    %v1344 = vadd.f32 %v1090, %v1296
    %v1345 = vadd.f32 %v1091, %v1301
    %v1346 = vadd.f32 %v1092, %v1306
    %v1347 = vadd.f32 %v1093, %v1311
    %v1348 = vadd.f32 %v1094, %v1316
    %v1349 = vadd.f32 %v1095, %v1321
    %v1350 = vadd.f32 %v1096, %v1326
    %v1351 = vadd.f32 %v1097, %v1331
    %v1352 = vld [vmem:[%s0 + $0xc] sm:$0xff]
    %v1353 = vld [vmem:[%s0 + $0x14] sm:$0xff]
    %v1354 = vld [vmem:[%s0 + $0x1c] sm:$0xff]
    %v1355 = vld [vmem:[%s0 + $0x24] sm:$0xff]
    %v1356 = vld [vmem:[%s0 + $0x2c] sm:$0xff]
    %v1357 = vld [vmem:[%s0 + $0x34] sm:$0xff]
    %v1358 = vld [vmem:[%s0 + $0x3c] sm:$0xff]
    %v1359 = vld [vmem:[%s0 + $0x44] sm:$0xff]
    %v1360 = vld [vmem:[%s0 + $0x4c] sm:$0xff]
    %v1361 = vld [vmem:[%s0 + $0x54] sm:$0xff]
    %v1362 = vld [vmem:[%s0 + $0x5c] sm:$0xff]
    %v1363 = vld [vmem:[%s0 + $0x64] sm:$0xff]
    %v1364 = vld [vmem:[%s0 + $0x6c] sm:$0xff]
    %v1365 = vld [vmem:[%s0 + $0x74] sm:$0xff]
    %v1366 = vld [vmem:[%s0 + $0x7c] sm:$0xff]
    %v1367 = vld [vmem:[%s0 + $0x84] sm:$0xff]
    %v1368 = vld [vmem:[%s0 + $0x8c] sm:$0xff]
    %v1369 = vld [vmem:[%s0 + $0x94] sm:$0x3]
    %s1370 = scalar_lea.vmem [#allocation3], 320
    %v1371 = vld [vmem:[%s1370] sm:$0xff]
    %v1372 = vld [vmem:[%s1370 + $0x8] sm:$0xff]
    %v1373 = vld [vmem:[%s1370 + $0x10] sm:$0xff]
    %v1374 = vld [vmem:[%s1370 + $0x18] sm:$0xff]
    %v1375 = vld [vmem:[%s1370 + $0x20] sm:$0xff]
    %v1376 = vld [vmem:[%s1370 + $0x28] sm:$0xff]
    %v1377 = vld [vmem:[%s1370 + $0x30] sm:$0xff]
    %v1378 = vld [vmem:[%s1370 + $0x38] sm:$0xff]
    %v1380 = vsel %vm98, %v1352, 0
    %v1383 = vsel %vm98, %v1353, 0
    %v1386 = vsel %vm98, %v1354, 0
    %v1389 = vsel %vm98, %v1355, 0
    %v1392 = vsel %vm98, %v1356, 0
    %v1395 = vsel %vm98, %v1357, 0
    %v1398 = vsel %vm98, %v1358, 0
    %v1401 = vsel %vm98, %v1359, 0
    %v1404 = vsel %vm98, %v1360, 0
    %v1407 = vsel %vm98, %v1361, 0
    %v1410 = vsel %vm98, %v1362, 0
    %v1413 = vsel %vm98, %v1363, 0
    %v1416 = vsel %vm98, %v1364, 0
    %v1419 = vsel %vm98, %v1365, 0
    %v1422 = vsel %vm98, %v1366, 0
    %v1425 = vsel %vm98, %v1367, 0
    %v1428 = vsel %vm98, %v1368, 0
    %v1431 = vsel %vm98, %v1369, 0
    %1433 = vmatprep.subr.mxu0 0.0
    %1434 = vmatpush1.msra.mxu0 0.0
    %1435 = vmatprep.subr.mxu0 0.0
    %1436 = vmatpush1.msra.mxu0 0.0
    %1437 = vmatprep.subr.mxu0 0.0
    %1438 = vmatpush1.msra.mxu0 0.0
    %1439 = vmatprep.subr.mxu0 0.0
    %1440 = vmatpush1.msra.mxu0 0.0
    %1441 = vmatprep.subr.mxu0 0.0
    %1442 = vmatpush1.msra.mxu0 0.0
    %1443 = vmatprep.subr.mxu0 0.0
    %1444 = vmatpush1.msra.mxu0 0.0
    %1445 = vmatprep.subr.mxu0 0.0
    %1446 = vmatpush1.msra.mxu0 0.0
    %1447 = vmatprep.subr.mxu0 0.0
    %1448 = vmatpush1.msra.mxu0 0.0
    %1449 = vmatprep.subr.mxu0 0.0
    %1450 = vmatpush1.msra.mxu0 %v1378
    %1451 = vmatprep.subr.mxu0 0.0
    %1452 = vmatpush1.msra.mxu0 %v1377
    %1453 = vmatprep.subr.mxu0 0.0
    %1454 = vmatpush1.msra.mxu0 %v1376
    %1455 = vmatprep.subr.mxu0 0.0
    %1456 = vmatpush1.msra.mxu0 %v1375
    %1457 = vmatprep.subr.mxu0 0.0
    %1458 = vmatpush1.msra.mxu0 %v1374
    %1459 = vmatprep.subr.mxu0 0.0
    %1460 = vmatpush1.msra.mxu0 %v1373
    %1461 = vmatprep.subr.mxu0 0.0
    %1462 = vmatpush1.msra.mxu0 %v1372
    %1463 = vmatprep.subr.mxu0 0.0
    %1464 = vmatpush1.msra.mxu0 %v1371
    %1465 = vmatprep.subr.mxu0 0.0
    %1466 = vmatpush2.msra.mxu0 0.0
    %1467 = vmatprep.subr.mxu0 0.0
    %1468 = vmatpush2.msra.mxu0 0.0
    %1469 = vmatprep.subr.mxu0 0.0
    %1470 = vmatpush2.msra.mxu0 0.0
    %1471 = vmatprep.subr.mxu0 0.0
    %1472 = vmatpush2.msra.mxu0 0.0
    %1473 = vmatprep.subr.mxu0 0.0
    %1474 = vmatpush2.msra.mxu0 0.0
    %1475 = vmatprep.subr.mxu0 0.0
    %1476 = vmatpush2.msra.mxu0 0.0
    %1477 = vmatprep.subr.mxu0 0.0
    %1478 = vmatpush2.msra.mxu0 0.0
    %1479 = vmatprep.subr.mxu0 0.0
    %1480 = vmatpush2.msra.mxu0 0.0
    %1481 = vmatprep.subr.mxu0 0.0
    %1482 = vmatpush2.msra.mxu0 0.0
    %1483 = vmatprep.subr.mxu0 0.0
    %1484 = vmatpush2.msra.mxu0 0.0
    %1485 = vmatprep.subr.mxu0 0.0
    %1486 = vmatpush2.msra.mxu0 0.0
    %1487 = vmatprep.subr.mxu0 0.0
    %1488 = vmatpush2.msra.mxu0 0.0
    %1489 = vmatprep.subr.mxu0 0.0
    %1490 = vmatpush2.msra.mxu0 0.0
    %1491 = vmatprep.subr.mxu0 0.0
    %1492 = vmatpush2.msra.mxu0 0.0
    %1493 = vmatprep.subr.mxu0 0.0
    %1494 = vmatpush2.msra.mxu0 0.0
    %1495 = vmatprep.subr.mxu0 0.0
    %1496 = vmatpush2.msra.mxu0 0.0
    %1497 = vmatprep.mubr.f32.mxu0 0.0
    %1498 = vmatmul.mubr.f32.gmra.mxu0 %v1380
    %v1499 = vpop.f32.mrf.mxu0
    %v1500 = vadd.f32 0.0, %v1499
    %v1501 = vpop.f32.mrf.mxu0
    %1502 = vmatprep.mubr.f32.mxu0 0.0
    %1503 = vmatmul.mubr.f32.gmra.mxu0 %v1383
    %v1504 = vpop.f32.mrf.mxu0
    %v1505 = vadd.f32 0.0, %v1504
    %v1506 = vpop.f32.mrf.mxu0
    %1507 = vmatprep.mubr.f32.mxu0 0.0
    %1508 = vmatmul.mubr.f32.gmra.mxu0 %v1386
    %v1509 = vpop.f32.mrf.mxu0
    %v1510 = vadd.f32 0.0, %v1509
    %v1511 = vpop.f32.mrf.mxu0
    %1512 = vmatprep.mubr.f32.mxu0 0.0
    %1513 = vmatmul.mubr.f32.gmra.mxu0 %v1389
    %v1514 = vpop.f32.mrf.mxu0
    %v1515 = vadd.f32 0.0, %v1514
    %v1516 = vpop.f32.mrf.mxu0
    %1517 = vmatprep.mubr.f32.mxu0 0.0
    %1518 = vmatmul.mubr.f32.gmra.mxu0 %v1392
    %v1519 = vpop.f32.mrf.mxu0
    %v1520 = vadd.f32 0.0, %v1519
    %v1521 = vpop.f32.mrf.mxu0
    %1522 = vmatprep.mubr.f32.mxu0 0.0
    %1523 = vmatmul.mubr.f32.gmra.mxu0 %v1395
    %v1524 = vpop.f32.mrf.mxu0
    %v1525 = vadd.f32 0.0, %v1524
    %v1526 = vpop.f32.mrf.mxu0
    %1527 = vmatprep.mubr.f32.mxu0 0.0
    %1528 = vmatmul.mubr.f32.gmra.mxu0 %v1398
    %v1529 = vpop.f32.mrf.mxu0
    %v1530 = vadd.f32 0.0, %v1529
    %v1531 = vpop.f32.mrf.mxu0
    %1532 = vmatprep.mubr.f32.mxu0 0.0
    %1533 = vmatmul.mubr.f32.gmra.mxu0 %v1401
    %v1534 = vpop.f32.mrf.mxu0
    %v1535 = vadd.f32 0.0, %v1534
    %v1536 = vpop.f32.mrf.mxu0
    %1537 = vmatprep.mubr.f32.mxu0 0.0
    %1538 = vmatmul.mubr.f32.gmra.mxu0 %v1404
    %v1539 = vpop.f32.mrf.mxu0
    %v1540 = vadd.f32 0.0, %v1539
    %v1541 = vpop.f32.mrf.mxu0
    %1542 = vmatprep.mubr.f32.mxu0 0.0
    %1543 = vmatmul.mubr.f32.gmra.mxu0 %v1407
    %v1544 = vpop.f32.mrf.mxu0
    %v1545 = vadd.f32 0.0, %v1544
    %v1546 = vpop.f32.mrf.mxu0
    %1547 = vmatprep.mubr.f32.mxu0 0.0
    %1548 = vmatmul.mubr.f32.gmra.mxu0 %v1410
    %v1549 = vpop.f32.mrf.mxu0
    %v1550 = vadd.f32 0.0, %v1549
    %v1551 = vpop.f32.mrf.mxu0
    %1552 = vmatprep.mubr.f32.mxu0 0.0
    %1553 = vmatmul.mubr.f32.gmra.mxu0 %v1413
    %v1554 = vpop.f32.mrf.mxu0
    %v1555 = vadd.f32 0.0, %v1554
    %v1556 = vpop.f32.mrf.mxu0
    %1557 = vmatprep.mubr.f32.mxu0 0.0
    %1558 = vmatmul.mubr.f32.gmra.mxu0 %v1416
    %v1559 = vpop.f32.mrf.mxu0
    %v1560 = vadd.f32 0.0, %v1559
    %v1561 = vpop.f32.mrf.mxu0
    %1562 = vmatprep.mubr.f32.mxu0 0.0
    %1563 = vmatmul.mubr.f32.gmra.mxu0 %v1419
    %v1564 = vpop.f32.mrf.mxu0
    %v1565 = vadd.f32 0.0, %v1564
    %v1566 = vpop.f32.mrf.mxu0
    %1567 = vmatprep.mubr.f32.mxu0 0.0
    %1568 = vmatmul.mubr.f32.gmra.mxu0 %v1422
    %v1569 = vpop.f32.mrf.mxu0
    %v1570 = vadd.f32 0.0, %v1569
    %v1571 = vpop.f32.mrf.mxu0
    %1572 = vmatprep.mubr.f32.mxu0 0.0
    %1573 = vmatmul.mubr.f32.gmra.mxu0 %v1425
    %v1574 = vpop.f32.mrf.mxu0
    %v1575 = vadd.f32 0.0, %v1574
    %v1576 = vpop.f32.mrf.mxu0
    %1577 = vmatprep.mubr.f32.mxu0 0.0
    %1578 = vmatmul.mubr.f32.gmra.mxu0 %v1428
    %v1579 = vpop.f32.mrf.mxu0
    %v1580 = vadd.f32 0.0, %v1579
    %v1581 = vpop.f32.mrf.mxu0
    %1582 = vmatprep.mubr.f32.mxu0 0.0
    %1583 = vmatmul.mubr.f32.gmra.mxu0 %v1431
    %v1584 = vpop.f32.mrf.mxu0
    %v1585 = vadd.f32 0.0, %v1584
    %v1586 = vpop.f32.mrf.mxu0
    %1587 = vdwg.mxu0
    %v1588 = vadd.f32 %v1334, %v1500
    %v1589 = vadd.f32 %v1335, %v1505
    %v1590 = vadd.f32 %v1336, %v1510
    %v1591 = vadd.f32 %v1337, %v1515
    %v1592 = vadd.f32 %v1338, %v1520
    %v1593 = vadd.f32 %v1339, %v1525
    %v1594 = vadd.f32 %v1340, %v1530
    %v1595 = vadd.f32 %v1341, %v1535
    %v1596 = vadd.f32 %v1342, %v1540
    %v1597 = vadd.f32 %v1343, %v1545
    %v1598 = vadd.f32 %v1344, %v1550
    %v1599 = vadd.f32 %v1345, %v1555
    %v1600 = vadd.f32 %v1346, %v1560
    %v1601 = vadd.f32 %v1347, %v1565
    %v1602 = vadd.f32 %v1348, %v1570
    %v1603 = vadd.f32 %v1349, %v1575
    %v1604 = vadd.f32 %v1350, %v1580
    %v1605 = vadd.f32 %v1351, %v1585
    %v1606 = vld [vmem:[%s0 + $0x14] sm:$0xff]
    %v1607 = vld [vmem:[%s0 + $0x1c] sm:$0xff]
    %v1608 = vld [vmem:[%s0 + $0x24] sm:$0xff]
    %v1609 = vld [vmem:[%s0 + $0x2c] sm:$0xff]
    %v1610 = vld [vmem:[%s0 + $0x34] sm:$0xff]
    %v1611 = vld [vmem:[%s0 + $0x3c] sm:$0xff]
    %v1612 = vld [vmem:[%s0 + $0x44] sm:$0xff]
    %v1613 = vld [vmem:[%s0 + $0x4c] sm:$0xff]
    %v1614 = vld [vmem:[%s0 + $0x54] sm:$0xff]
    %v1615 = vld [vmem:[%s0 + $0x5c] sm:$0xff]
    %v1616 = vld [vmem:[%s0 + $0x64] sm:$0xff]
    %v1617 = vld [vmem:[%s0 + $0x6c] sm:$0xff]
    %v1618 = vld [vmem:[%s0 + $0x74] sm:$0xff]
    %v1619 = vld [vmem:[%s0 + $0x7c] sm:$0xff]
    %v1620 = vld [vmem:[%s0 + $0x84] sm:$0xff]
    %v1621 = vld [vmem:[%s0 + $0x8c] sm:$0xff]
    %v1622 = vld [vmem:[%s0 + $0x94] sm:$0xff]
    %v1623 = vld [vmem:[%s0 + $0x9c] sm:$0x3]
    %s1624 = scalar_lea.vmem [#allocation3], 384
    %v1625 = vld [vmem:[%s1624] sm:$0xff]
    %v1626 = vld [vmem:[%s1624 + $0x8] sm:$0xff]
    %v1627 = vld [vmem:[%s1624 + $0x10] sm:$0xff]
    %v1628 = vld [vmem:[%s1624 + $0x18] sm:$0xff]
    %v1629 = vld [vmem:[%s1624 + $0x20] sm:$0xff]
    %v1630 = vld [vmem:[%s1624 + $0x28] sm:$0xff]
    %v1631 = vld [vmem:[%s1624 + $0x30] sm:$0xff]
    %v1632 = vld [vmem:[%s1624 + $0x38] sm:$0xff]
    %v1634 = vsel %vm98, %v1606, 0
    %v1637 = vsel %vm98, %v1607, 0
    %v1640 = vsel %vm98, %v1608, 0
    %v1643 = vsel %vm98, %v1609, 0
    %v1646 = vsel %vm98, %v1610, 0
    %v1649 = vsel %vm98, %v1611, 0
    %v1652 = vsel %vm98, %v1612, 0
    %v1655 = vsel %vm98, %v1613, 0
    %v1658 = vsel %vm98, %v1614, 0
    %v1661 = vsel %vm98, %v1615, 0
    %v1664 = vsel %vm98, %v1616, 0
    %v1667 = vsel %vm98, %v1617, 0
    %v1670 = vsel %vm98, %v1618, 0
    %v1673 = vsel %vm98, %v1619, 0
    %v1676 = vsel %vm98, %v1620, 0
    %v1679 = vsel %vm98, %v1621, 0
    %v1682 = vsel %vm98, %v1622, 0
    %v1685 = vsel %vm98, %v1623, 0
    %1687 = vmatprep.subr.mxu0 0.0
    %1688 = vmatpush1.msra.mxu0 0.0
    %1689 = vmatprep.subr.mxu0 0.0
    %1690 = vmatpush1.msra.mxu0 0.0
    %1691 = vmatprep.subr.mxu0 0.0
    %1692 = vmatpush1.msra.mxu0 0.0
    %1693 = vmatprep.subr.mxu0 0.0
    %1694 = vmatpush1.msra.mxu0 0.0
    %1695 = vmatprep.subr.mxu0 0.0
    %1696 = vmatpush1.msra.mxu0 0.0
    %1697 = vmatprep.subr.mxu0 0.0
    %1698 = vmatpush1.msra.mxu0 0.0
    %1699 = vmatprep.subr.mxu0 0.0
    %1700 = vmatpush1.msra.mxu0 0.0
    %1701 = vmatprep.subr.mxu0 0.0
    %1702 = vmatpush1.msra.mxu0 0.0
    %1703 = vmatprep.subr.mxu0 0.0
    %1704 = vmatpush1.msra.mxu0 %v1632
    %1705 = vmatprep.subr.mxu0 0.0
    %1706 = vmatpush1.msra.mxu0 %v1631
    %1707 = vmatprep.subr.mxu0 0.0
    %1708 = vmatpush1.msra.mxu0 %v1630
    %1709 = vmatprep.subr.mxu0 0.0
    %1710 = vmatpush1.msra.mxu0 %v1629
    %1711 = vmatprep.subr.mxu0 0.0
    %1712 = vmatpush1.msra.mxu0 %v1628
    %1713 = vmatprep.subr.mxu0 0.0
    %1714 = vmatpush1.msra.mxu0 %v1627
    %1715 = vmatprep.subr.mxu0 0.0
    %1716 = vmatpush1.msra.mxu0 %v1626
    %1717 = vmatprep.subr.mxu0 0.0
    %1718 = vmatpush1.msra.mxu0 %v1625
    %1719 = vmatprep.subr.mxu0 0.0
    %1720 = vmatpush2.msra.mxu0 0.0
    %1721 = vmatprep.subr.mxu0 0.0
    %1722 = vmatpush2.msra.mxu0 0.0
    %1723 = vmatprep.subr.mxu0 0.0
    %1724 = vmatpush2.msra.mxu0 0.0
    %1725 = vmatprep.subr.mxu0 0.0
    %1726 = vmatpush2.msra.mxu0 0.0
    %1727 = vmatprep.subr.mxu0 0.0
    %1728 = vmatpush2.msra.mxu0 0.0
    %1729 = vmatprep.subr.mxu0 0.0
    %1730 = vmatpush2.msra.mxu0 0.0
    %1731 = vmatprep.subr.mxu0 0.0
    %1732 = vmatpush2.msra.mxu0 0.0
    %1733 = vmatprep.subr.mxu0 0.0
    %1734 = vmatpush2.msra.mxu0 0.0
    %1735 = vmatprep.subr.mxu0 0.0
    %1736 = vmatpush2.msra.mxu0 0.0
    %1737 = vmatprep.subr.mxu0 0.0
    %1738 = vmatpush2.msra.mxu0 0.0
    %1739 = vmatprep.subr.mxu0 0.0
    %1740 = vmatpush2.msra.mxu0 0.0
    %1741 = vmatprep.subr.mxu0 0.0
    %1742 = vmatpush2.msra.mxu0 0.0
    %1743 = vmatprep.subr.mxu0 0.0
    %1744 = vmatpush2.msra.mxu0 0.0
    %1745 = vmatprep.subr.mxu0 0.0
    %1746 = vmatpush2.msra.mxu0 0.0
    %1747 = vmatprep.subr.mxu0 0.0
    %1748 = vmatpush2.msra.mxu0 0.0
    %1749 = vmatprep.subr.mxu0 0.0
    %1750 = vmatpush2.msra.mxu0 0.0
    %1751 = vmatprep.mubr.f32.mxu0 0.0
    %1752 = vmatmul.mubr.f32.gmra.mxu0 %v1634
    %v1753 = vpop.f32.mrf.mxu0
    %v1754 = vadd.f32 0.0, %v1753
    %v1755 = vpop.f32.mrf.mxu0
    %1756 = vmatprep.mubr.f32.mxu0 0.0
    %1757 = vmatmul.mubr.f32.gmra.mxu0 %v1637
    %v1758 = vpop.f32.mrf.mxu0
    %v1759 = vadd.f32 0.0, %v1758
    %v1760 = vpop.f32.mrf.mxu0
    %1761 = vmatprep.mubr.f32.mxu0 0.0
    %1762 = vmatmul.mubr.f32.gmra.mxu0 %v1640
    %v1763 = vpop.f32.mrf.mxu0
    %v1764 = vadd.f32 0.0, %v1763
    %v1765 = vpop.f32.mrf.mxu0
    %1766 = vmatprep.mubr.f32.mxu0 0.0
    %1767 = vmatmul.mubr.f32.gmra.mxu0 %v1643
    %v1768 = vpop.f32.mrf.mxu0
    %v1769 = vadd.f32 0.0, %v1768
    %v1770 = vpop.f32.mrf.mxu0
    %1771 = vmatprep.mubr.f32.mxu0 0.0
    %1772 = vmatmul.mubr.f32.gmra.mxu0 %v1646
    %v1773 = vpop.f32.mrf.mxu0
    %v1774 = vadd.f32 0.0, %v1773
    %v1775 = vpop.f32.mrf.mxu0
    %1776 = vmatprep.mubr.f32.mxu0 0.0
    %1777 = vmatmul.mubr.f32.gmra.mxu0 %v1649
    %v1778 = vpop.f32.mrf.mxu0
    %v1779 = vadd.f32 0.0, %v1778
    %v1780 = vpop.f32.mrf.mxu0
    %1781 = vmatprep.mubr.f32.mxu0 0.0
    %1782 = vmatmul.mubr.f32.gmra.mxu0 %v1652
    %v1783 = vpop.f32.mrf.mxu0
    %v1784 = vadd.f32 0.0, %v1783
    %v1785 = vpop.f32.mrf.mxu0
    %1786 = vmatprep.mubr.f32.mxu0 0.0
    %1787 = vmatmul.mubr.f32.gmra.mxu0 %v1655
    %v1788 = vpop.f32.mrf.mxu0
    %v1789 = vadd.f32 0.0, %v1788
    %v1790 = vpop.f32.mrf.mxu0
    %1791 = vmatprep.mubr.f32.mxu0 0.0
    %1792 = vmatmul.mubr.f32.gmra.mxu0 %v1658
    %v1793 = vpop.f32.mrf.mxu0
    %v1794 = vadd.f32 0.0, %v1793
    %v1795 = vpop.f32.mrf.mxu0
    %1796 = vmatprep.mubr.f32.mxu0 0.0
    %1797 = vmatmul.mubr.f32.gmra.mxu0 %v1661
    %v1798 = vpop.f32.mrf.mxu0
    %v1799 = vadd.f32 0.0, %v1798
    %v1800 = vpop.f32.mrf.mxu0
    %1801 = vmatprep.mubr.f32.mxu0 0.0
    %1802 = vmatmul.mubr.f32.gmra.mxu0 %v1664
    %v1803 = vpop.f32.mrf.mxu0
    %v1804 = vadd.f32 0.0, %v1803
    %v1805 = vpop.f32.mrf.mxu0
    %1806 = vmatprep.mubr.f32.mxu0 0.0
    %1807 = vmatmul.mubr.f32.gmra.mxu0 %v1667
    %v1808 = vpop.f32.mrf.mxu0
    %v1809 = vadd.f32 0.0, %v1808
    %v1810 = vpop.f32.mrf.mxu0
    %1811 = vmatprep.mubr.f32.mxu0 0.0
    %1812 = vmatmul.mubr.f32.gmra.mxu0 %v1670
    %v1813 = vpop.f32.mrf.mxu0
    %v1814 = vadd.f32 0.0, %v1813
    %v1815 = vpop.f32.mrf.mxu0
    %1816 = vmatprep.mubr.f32.mxu0 0.0
    %1817 = vmatmul.mubr.f32.gmra.mxu0 %v1673
    %v1818 = vpop.f32.mrf.mxu0
    %v1819 = vadd.f32 0.0, %v1818
    %v1820 = vpop.f32.mrf.mxu0
    %1821 = vmatprep.mubr.f32.mxu0 0.0
    %1822 = vmatmul.mubr.f32.gmra.mxu0 %v1676
    %v1823 = vpop.f32.mrf.mxu0
    %v1824 = vadd.f32 0.0, %v1823
    %v1825 = vpop.f32.mrf.mxu0
    %1826 = vmatprep.mubr.f32.mxu0 0.0
    %1827 = vmatmul.mubr.f32.gmra.mxu0 %v1679
    %v1828 = vpop.f32.mrf.mxu0
    %v1829 = vadd.f32 0.0, %v1828
    %v1830 = vpop.f32.mrf.mxu0
    %1831 = vmatprep.mubr.f32.mxu0 0.0
    %1832 = vmatmul.mubr.f32.gmra.mxu0 %v1682
    %v1833 = vpop.f32.mrf.mxu0
    %v1834 = vadd.f32 0.0, %v1833
    %v1835 = vpop.f32.mrf.mxu0
    %1836 = vmatprep.mubr.f32.mxu0 0.0
    %1837 = vmatmul.mubr.f32.gmra.mxu0 %v1685
    %v1838 = vpop.f32.mrf.mxu0
    %v1839 = vadd.f32 0.0, %v1838
    %v1840 = vpop.f32.mrf.mxu0
    %1841 = vdwg.mxu0
    %v1842 = vadd.f32 %v1588, %v1754
    %v1843 = vadd.f32 %v1589, %v1759
    %v1844 = vadd.f32 %v1590, %v1764
    %v1845 = vadd.f32 %v1591, %v1769
    %v1846 = vadd.f32 %v1592, %v1774
    %v1847 = vadd.f32 %v1593, %v1779
    %v1848 = vadd.f32 %v1594, %v1784
    %v1849 = vadd.f32 %v1595, %v1789
    %v1850 = vadd.f32 %v1596, %v1794
    %v1851 = vadd.f32 %v1597, %v1799
    %v1852 = vadd.f32 %v1598, %v1804
    %v1853 = vadd.f32 %v1599, %v1809
    %v1854 = vadd.f32 %v1600, %v1814
    %v1855 = vadd.f32 %v1601, %v1819
    %v1856 = vadd.f32 %v1602, %v1824
    %v1857 = vadd.f32 %v1603, %v1829
    %v1858 = vadd.f32 %v1604, %v1834
    %v1859 = vadd.f32 %v1605, %v1839
    %v1860 = vld [vmem:[%s0 + $0x15] sm:$0xff]
    %v1861 = vld [vmem:[%s0 + $0x1d] sm:$0xff]
    %v1862 = vld [vmem:[%s0 + $0x25] sm:$0xff]
    %v1863 = vld [vmem:[%s0 + $0x2d] sm:$0xff]
    %v1864 = vld [vmem:[%s0 + $0x35] sm:$0xff]
    %v1865 = vld [vmem:[%s0 + $0x3d] sm:$0xff]
    %v1866 = vld [vmem:[%s0 + $0x45] sm:$0xff]
    %v1867 = vld [vmem:[%s0 + $0x4d] sm:$0xff]
    %v1868 = vld [vmem:[%s0 + $0x55] sm:$0xff]
    %v1869 = vld [vmem:[%s0 + $0x5d] sm:$0xff]
    %v1870 = vld [vmem:[%s0 + $0x65] sm:$0xff]
    %v1871 = vld [vmem:[%s0 + $0x6d] sm:$0xff]
    %v1872 = vld [vmem:[%s0 + $0x75] sm:$0xff]
    %v1873 = vld [vmem:[%s0 + $0x7d] sm:$0xff]
    %v1874 = vld [vmem:[%s0 + $0x85] sm:$0xff]
    %v1875 = vld [vmem:[%s0 + $0x8d] sm:$0xff]
    %v1876 = vld [vmem:[%s0 + $0x95] sm:$0xff]
    %v1877 = vld [vmem:[%s0 + $0x9d] sm:$0x3]
    %s1878 = scalar_lea.vmem [#allocation3], 448
    %v1879 = vld [vmem:[%s1878] sm:$0xff]
    %v1880 = vld [vmem:[%s1878 + $0x8] sm:$0xff]
    %v1881 = vld [vmem:[%s1878 + $0x10] sm:$0xff]
    %v1882 = vld [vmem:[%s1878 + $0x18] sm:$0xff]
    %v1883 = vld [vmem:[%s1878 + $0x20] sm:$0xff]
    %v1884 = vld [vmem:[%s1878 + $0x28] sm:$0xff]
    %v1885 = vld [vmem:[%s1878 + $0x30] sm:$0xff]
    %v1886 = vld [vmem:[%s1878 + $0x38] sm:$0xff]
    %v1888 = vsel %vm98, %v1860, 0
    %v1891 = vsel %vm98, %v1861, 0
    %v1894 = vsel %vm98, %v1862, 0
    %v1897 = vsel %vm98, %v1863, 0
    %v1900 = vsel %vm98, %v1864, 0
    %v1903 = vsel %vm98, %v1865, 0
    %v1906 = vsel %vm98, %v1866, 0
    %v1909 = vsel %vm98, %v1867, 0
    %v1912 = vsel %vm98, %v1868, 0
    %v1915 = vsel %vm98, %v1869, 0
    %v1918 = vsel %vm98, %v1870, 0
    %v1921 = vsel %vm98, %v1871, 0
    %v1924 = vsel %vm98, %v1872, 0
    %v1927 = vsel %vm98, %v1873, 0
    %v1930 = vsel %vm98, %v1874, 0
    %v1933 = vsel %vm98, %v1875, 0
    %v1936 = vsel %vm98, %v1876, 0
    %v1939 = vsel %vm98, %v1877, 0
    %1941 = vmatprep.subr.mxu0 0.0
    %1942 = vmatpush1.msra.mxu0 0.0
    %1943 = vmatprep.subr.mxu0 0.0
    %1944 = vmatpush1.msra.mxu0 0.0
    %1945 = vmatprep.subr.mxu0 0.0
    %1946 = vmatpush1.msra.mxu0 0.0
    %1947 = vmatprep.subr.mxu0 0.0
    %1948 = vmatpush1.msra.mxu0 0.0
    %1949 = vmatprep.subr.mxu0 0.0
    %1950 = vmatpush1.msra.mxu0 0.0
    %1951 = vmatprep.subr.mxu0 0.0
    %1952 = vmatpush1.msra.mxu0 0.0
    %1953 = vmatprep.subr.mxu0 0.0
    %1954 = vmatpush1.msra.mxu0 0.0
    %1955 = vmatprep.subr.mxu0 0.0
    %1956 = vmatpush1.msra.mxu0 0.0
    %1957 = vmatprep.subr.mxu0 0.0
    %1958 = vmatpush1.msra.mxu0 %v1886
    %1959 = vmatprep.subr.mxu0 0.0
    %1960 = vmatpush1.msra.mxu0 %v1885
    %1961 = vmatprep.subr.mxu0 0.0
    %1962 = vmatpush1.msra.mxu0 %v1884
    %1963 = vmatprep.subr.mxu0 0.0
    %1964 = vmatpush1.msra.mxu0 %v1883
    %1965 = vmatprep.subr.mxu0 0.0
    %1966 = vmatpush1.msra.mxu0 %v1882
    %1967 = vmatprep.subr.mxu0 0.0
    %1968 = vmatpush1.msra.mxu0 %v1881
    %1969 = vmatprep.subr.mxu0 0.0
    %1970 = vmatpush1.msra.mxu0 %v1880
    %1971 = vmatprep.subr.mxu0 0.0
    %1972 = vmatpush1.msra.mxu0 %v1879
    %1973 = vmatprep.subr.mxu0 0.0
    %1974 = vmatpush2.msra.mxu0 0.0
    %1975 = vmatprep.subr.mxu0 0.0
    %1976 = vmatpush2.msra.mxu0 0.0
    %1977 = vmatprep.subr.mxu0 0.0
    %1978 = vmatpush2.msra.mxu0 0.0
    %1979 = vmatprep.subr.mxu0 0.0
    %1980 = vmatpush2.msra.mxu0 0.0
    %1981 = vmatprep.subr.mxu0 0.0
    %1982 = vmatpush2.msra.mxu0 0.0
    %1983 = vmatprep.subr.mxu0 0.0
    %1984 = vmatpush2.msra.mxu0 0.0
    %1985 = vmatprep.subr.mxu0 0.0
    %1986 = vmatpush2.msra.mxu0 0.0
    %1987 = vmatprep.subr.mxu0 0.0
    %1988 = vmatpush2.msra.mxu0 0.0
    %1989 = vmatprep.subr.mxu0 0.0
    %1990 = vmatpush2.msra.mxu0 0.0
    %1991 = vmatprep.subr.mxu0 0.0
    %1992 = vmatpush2.msra.mxu0 0.0
    %1993 = vmatprep.subr.mxu0 0.0
    %1994 = vmatpush2.msra.mxu0 0.0
    %1995 = vmatprep.subr.mxu0 0.0
    %1996 = vmatpush2.msra.mxu0 0.0
    %1997 = vmatprep.subr.mxu0 0.0
    %1998 = vmatpush2.msra.mxu0 0.0
    %1999 = vmatprep.subr.mxu0 0.0
    %2000 = vmatpush2.msra.mxu0 0.0
    %2001 = vmatprep.subr.mxu0 0.0
    %2002 = vmatpush2.msra.mxu0 0.0
    %2003 = vmatprep.subr.mxu0 0.0
    %2004 = vmatpush2.msra.mxu0 0.0
    %2005 = vmatprep.mubr.f32.mxu0 0.0
    %2006 = vmatmul.mubr.f32.gmra.mxu0 %v1888
    %v2007 = vpop.f32.mrf.mxu0
    %v2008 = vadd.f32 0.0, %v2007
    %v2009 = vpop.f32.mrf.mxu0
    %2010 = vmatprep.mubr.f32.mxu0 0.0
    %2011 = vmatmul.mubr.f32.gmra.mxu0 %v1891
    %v2012 = vpop.f32.mrf.mxu0
    %v2013 = vadd.f32 0.0, %v2012
    %v2014 = vpop.f32.mrf.mxu0
    %2015 = vmatprep.mubr.f32.mxu0 0.0
    %2016 = vmatmul.mubr.f32.gmra.mxu0 %v1894
    %v2017 = vpop.f32.mrf.mxu0
    %v2018 = vadd.f32 0.0, %v2017
    %v2019 = vpop.f32.mrf.mxu0
    %2020 = vmatprep.mubr.f32.mxu0 0.0
    %2021 = vmatmul.mubr.f32.gmra.mxu0 %v1897
    %v2022 = vpop.f32.mrf.mxu0
    %v2023 = vadd.f32 0.0, %v2022
    %v2024 = vpop.f32.mrf.mxu0
    %2025 = vmatprep.mubr.f32.mxu0 0.0
    %2026 = vmatmul.mubr.f32.gmra.mxu0 %v1900
    %v2027 = vpop.f32.mrf.mxu0
    %v2028 = vadd.f32 0.0, %v2027
    %v2029 = vpop.f32.mrf.mxu0
    %2030 = vmatprep.mubr.f32.mxu0 0.0
    %2031 = vmatmul.mubr.f32.gmra.mxu0 %v1903
    %v2032 = vpop.f32.mrf.mxu0
    %v2033 = vadd.f32 0.0, %v2032
    %v2034 = vpop.f32.mrf.mxu0
    %2035 = vmatprep.mubr.f32.mxu0 0.0
    %2036 = vmatmul.mubr.f32.gmra.mxu0 %v1906
    %v2037 = vpop.f32.mrf.mxu0
    %v2038 = vadd.f32 0.0, %v2037
    %v2039 = vpop.f32.mrf.mxu0
    %2040 = vmatprep.mubr.f32.mxu0 0.0
    %2041 = vmatmul.mubr.f32.gmra.mxu0 %v1909
    %v2042 = vpop.f32.mrf.mxu0
    %v2043 = vadd.f32 0.0, %v2042
    %v2044 = vpop.f32.mrf.mxu0
    %2045 = vmatprep.mubr.f32.mxu0 0.0
    %2046 = vmatmul.mubr.f32.gmra.mxu0 %v1912
    %v2047 = vpop.f32.mrf.mxu0
    %v2048 = vadd.f32 0.0, %v2047
    %v2049 = vpop.f32.mrf.mxu0
    %2050 = vmatprep.mubr.f32.mxu0 0.0
    %2051 = vmatmul.mubr.f32.gmra.mxu0 %v1915
    %v2052 = vpop.f32.mrf.mxu0
    %v2053 = vadd.f32 0.0, %v2052
    %v2054 = vpop.f32.mrf.mxu0
    %2055 = vmatprep.mubr.f32.mxu0 0.0
    %2056 = vmatmul.mubr.f32.gmra.mxu0 %v1918
    %v2057 = vpop.f32.mrf.mxu0
    %v2058 = vadd.f32 0.0, %v2057
    %v2059 = vpop.f32.mrf.mxu0
    %2060 = vmatprep.mubr.f32.mxu0 0.0
    %2061 = vmatmul.mubr.f32.gmra.mxu0 %v1921
    %v2062 = vpop.f32.mrf.mxu0
    %v2063 = vadd.f32 0.0, %v2062
    %v2064 = vpop.f32.mrf.mxu0
    %2065 = vmatprep.mubr.f32.mxu0 0.0
    %2066 = vmatmul.mubr.f32.gmra.mxu0 %v1924
    %v2067 = vpop.f32.mrf.mxu0
    %v2068 = vadd.f32 0.0, %v2067
    %v2069 = vpop.f32.mrf.mxu0
    %2070 = vmatprep.mubr.f32.mxu0 0.0
    %2071 = vmatmul.mubr.f32.gmra.mxu0 %v1927
    %v2072 = vpop.f32.mrf.mxu0
    %v2073 = vadd.f32 0.0, %v2072
    %v2074 = vpop.f32.mrf.mxu0
    %2075 = vmatprep.mubr.f32.mxu0 0.0
    %2076 = vmatmul.mubr.f32.gmra.mxu0 %v1930
    %v2077 = vpop.f32.mrf.mxu0
    %v2078 = vadd.f32 0.0, %v2077
    %v2079 = vpop.f32.mrf.mxu0
    %2080 = vmatprep.mubr.f32.mxu0 0.0
    %2081 = vmatmul.mubr.f32.gmra.mxu0 %v1933
    %v2082 = vpop.f32.mrf.mxu0
    %v2083 = vadd.f32 0.0, %v2082
    %v2084 = vpop.f32.mrf.mxu0
    %2085 = vmatprep.mubr.f32.mxu0 0.0
    %2086 = vmatmul.mubr.f32.gmra.mxu0 %v1936
    %v2087 = vpop.f32.mrf.mxu0
    %v2088 = vadd.f32 0.0, %v2087
    %v2089 = vpop.f32.mrf.mxu0
    %2090 = vmatprep.mubr.f32.mxu0 0.0
    %2091 = vmatmul.mubr.f32.gmra.mxu0 %v1939
    %v2092 = vpop.f32.mrf.mxu0
    %v2093 = vadd.f32 0.0, %v2092
    %v2094 = vpop.f32.mrf.mxu0
    %2095 = vdwg.mxu0
    %v2096 = vadd.f32 %v1842, %v2008
    %v2097 = vadd.f32 %v1843, %v2013
    %v2098 = vadd.f32 %v1844, %v2018
    %v2099 = vadd.f32 %v1845, %v2023
    %v2100 = vadd.f32 %v1846, %v2028
    %v2101 = vadd.f32 %v1847, %v2033
    %v2102 = vadd.f32 %v1848, %v2038
    %v2103 = vadd.f32 %v1849, %v2043
    %v2104 = vadd.f32 %v1850, %v2048
    %v2105 = vadd.f32 %v1851, %v2053
    %v2106 = vadd.f32 %v1852, %v2058
    %v2107 = vadd.f32 %v1853, %v2063
    %v2108 = vadd.f32 %v1854, %v2068
    %v2109 = vadd.f32 %v1855, %v2073
    %v2110 = vadd.f32 %v1856, %v2078
    %v2111 = vadd.f32 %v1857, %v2083
    %v2112 = vadd.f32 %v1858, %v2088
    %v2113 = vadd.f32 %v1859, %v2093
    %v2114 = vld [vmem:[%s0 + $0x16] sm:$0xff]
    %v2115 = vld [vmem:[%s0 + $0x1e] sm:$0xff]
    %v2116 = vld [vmem:[%s0 + $0x26] sm:$0xff]
    %v2117 = vld [vmem:[%s0 + $0x2e] sm:$0xff]
    %v2118 = vld [vmem:[%s0 + $0x36] sm:$0xff]
    %v2119 = vld [vmem:[%s0 + $0x3e] sm:$0xff]
    %v2120 = vld [vmem:[%s0 + $0x46] sm:$0xff]
    %v2121 = vld [vmem:[%s0 + $0x4e] sm:$0xff]
    %v2122 = vld [vmem:[%s0 + $0x56] sm:$0xff]
    %v2123 = vld [vmem:[%s0 + $0x5e] sm:$0xff]
    %v2124 = vld [vmem:[%s0 + $0x66] sm:$0xff]
    %v2125 = vld [vmem:[%s0 + $0x6e] sm:$0xff]
    %v2126 = vld [vmem:[%s0 + $0x76] sm:$0xff]
    %v2127 = vld [vmem:[%s0 + $0x7e] sm:$0xff]
    %v2128 = vld [vmem:[%s0 + $0x86] sm:$0xff]
    %v2129 = vld [vmem:[%s0 + $0x8e] sm:$0xff]
    %v2130 = vld [vmem:[%s0 + $0x96] sm:$0xff]
    %v2131 = vld [vmem:[%s0 + $0x9e] sm:$0x3]
    %s2132 = scalar_lea.vmem [#allocation3], 512
    %v2133 = vld [vmem:[%s2132] sm:$0xff]
    %v2134 = vld [vmem:[%s2132 + $0x8] sm:$0xff]
    %v2135 = vld [vmem:[%s2132 + $0x10] sm:$0xff]
    %v2136 = vld [vmem:[%s2132 + $0x18] sm:$0xff]
    %v2137 = vld [vmem:[%s2132 + $0x20] sm:$0xff]
    %v2138 = vld [vmem:[%s2132 + $0x28] sm:$0xff]
    %v2139 = vld [vmem:[%s2132 + $0x30] sm:$0xff]
    %v2140 = vld [vmem:[%s2132 + $0x38] sm:$0xff]
    %v2142 = vsel %vm98, %v2114, 0
    %v2145 = vsel %vm98, %v2115, 0
    %v2148 = vsel %vm98, %v2116, 0
    %v2151 = vsel %vm98, %v2117, 0
    %v2154 = vsel %vm98, %v2118, 0
    %v2157 = vsel %vm98, %v2119, 0
    %v2160 = vsel %vm98, %v2120, 0
    %v2163 = vsel %vm98, %v2121, 0
    %v2166 = vsel %vm98, %v2122, 0
    %v2169 = vsel %vm98, %v2123, 0
    %v2172 = vsel %vm98, %v2124, 0
    %v2175 = vsel %vm98, %v2125, 0
    %v2178 = vsel %vm98, %v2126, 0
    %v2181 = vsel %vm98, %v2127, 0
    %v2184 = vsel %vm98, %v2128, 0
    %v2187 = vsel %vm98, %v2129, 0
    %v2190 = vsel %vm98, %v2130, 0
    %v2193 = vsel %vm98, %v2131, 0
    %2195 = vmatprep.subr.mxu0 0.0
    %2196 = vmatpush1.msra.mxu0 0.0
    %2197 = vmatprep.subr.mxu0 0.0
    %2198 = vmatpush1.msra.mxu0 0.0
    %2199 = vmatprep.subr.mxu0 0.0
    %2200 = vmatpush1.msra.mxu0 0.0
    %2201 = vmatprep.subr.mxu0 0.0
    %2202 = vmatpush1.msra.mxu0 0.0
    %2203 = vmatprep.subr.mxu0 0.0
    %2204 = vmatpush1.msra.mxu0 0.0
    %2205 = vmatprep.subr.mxu0 0.0
    %2206 = vmatpush1.msra.mxu0 0.0
    %2207 = vmatprep.subr.mxu0 0.0
    %2208 = vmatpush1.msra.mxu0 0.0
    %2209 = vmatprep.subr.mxu0 0.0
    %2210 = vmatpush1.msra.mxu0 0.0
    %2211 = vmatprep.subr.mxu0 0.0
    %2212 = vmatpush1.msra.mxu0 %v2140
    %2213 = vmatprep.subr.mxu0 0.0
    %2214 = vmatpush1.msra.mxu0 %v2139
    %2215 = vmatprep.subr.mxu0 0.0
    %2216 = vmatpush1.msra.mxu0 %v2138
    %2217 = vmatprep.subr.mxu0 0.0
    %2218 = vmatpush1.msra.mxu0 %v2137
    %2219 = vmatprep.subr.mxu0 0.0
    %2220 = vmatpush1.msra.mxu0 %v2136
    %2221 = vmatprep.subr.mxu0 0.0
    %2222 = vmatpush1.msra.mxu0 %v2135
    %2223 = vmatprep.subr.mxu0 0.0
    %2224 = vmatpush1.msra.mxu0 %v2134
    %2225 = vmatprep.subr.mxu0 0.0
    %2226 = vmatpush1.msra.mxu0 %v2133
    %2227 = vmatprep.subr.mxu0 0.0
    %2228 = vmatpush2.msra.mxu0 0.0
    %2229 = vmatprep.subr.mxu0 0.0
    %2230 = vmatpush2.msra.mxu0 0.0
    %2231 = vmatprep.subr.mxu0 0.0
    %2232 = vmatpush2.msra.mxu0 0.0
    %2233 = vmatprep.subr.mxu0 0.0
    %2234 = vmatpush2.msra.mxu0 0.0
    %2235 = vmatprep.subr.mxu0 0.0
    %2236 = vmatpush2.msra.mxu0 0.0
    %2237 = vmatprep.subr.mxu0 0.0
    %2238 = vmatpush2.msra.mxu0 0.0
    %2239 = vmatprep.subr.mxu0 0.0
    %2240 = vmatpush2.msra.mxu0 0.0
    %2241 = vmatprep.subr.mxu0 0.0
    %2242 = vmatpush2.msra.mxu0 0.0
    %2243 = vmatprep.subr.mxu0 0.0
    %2244 = vmatpush2.msra.mxu0 0.0
    %2245 = vmatprep.subr.mxu0 0.0
    %2246 = vmatpush2.msra.mxu0 0.0
    %2247 = vmatprep.subr.mxu0 0.0
    %2248 = vmatpush2.msra.mxu0 0.0
    %2249 = vmatprep.subr.mxu0 0.0
    %2250 = vmatpush2.msra.mxu0 0.0
    %2251 = vmatprep.subr.mxu0 0.0
    %2252 = vmatpush2.msra.mxu0 0.0
    %2253 = vmatprep.subr.mxu0 0.0
    %2254 = vmatpush2.msra.mxu0 0.0
    %2255 = vmatprep.subr.mxu0 0.0
    %2256 = vmatpush2.msra.mxu0 0.0
    %2257 = vmatprep.subr.mxu0 0.0
    %2258 = vmatpush2.msra.mxu0 0.0
    %2259 = vmatprep.mubr.f32.mxu0 0.0
    %2260 = vmatmul.mubr.f32.gmra.mxu0 %v2142
    %v2261 = vpop.f32.mrf.mxu0
    %v2262 = vadd.f32 0.0, %v2261
    %v2263 = vpop.f32.mrf.mxu0
    %2264 = vmatprep.mubr.f32.mxu0 0.0
    %2265 = vmatmul.mubr.f32.gmra.mxu0 %v2145
    %v2266 = vpop.f32.mrf.mxu0
    %v2267 = vadd.f32 0.0, %v2266
    %v2268 = vpop.f32.mrf.mxu0
    %2269 = vmatprep.mubr.f32.mxu0 0.0
    %2270 = vmatmul.mubr.f32.gmra.mxu0 %v2148
    %v2271 = vpop.f32.mrf.mxu0
    %v2272 = vadd.f32 0.0, %v2271
    %v2273 = vpop.f32.mrf.mxu0
    %2274 = vmatprep.mubr.f32.mxu0 0.0
    %2275 = vmatmul.mubr.f32.gmra.mxu0 %v2151
    %v2276 = vpop.f32.mrf.mxu0
    %v2277 = vadd.f32 0.0, %v2276
    %v2278 = vpop.f32.mrf.mxu0
    %2279 = vmatprep.mubr.f32.mxu0 0.0
    %2280 = vmatmul.mubr.f32.gmra.mxu0 %v2154
    %v2281 = vpop.f32.mrf.mxu0
    %v2282 = vadd.f32 0.0, %v2281
    %v2283 = vpop.f32.mrf.mxu0
    %2284 = vmatprep.mubr.f32.mxu0 0.0
    %2285 = vmatmul.mubr.f32.gmra.mxu0 %v2157
    %v2286 = vpop.f32.mrf.mxu0
    %v2287 = vadd.f32 0.0, %v2286
    %v2288 = vpop.f32.mrf.mxu0
    %2289 = vmatprep.mubr.f32.mxu0 0.0
    %2290 = vmatmul.mubr.f32.gmra.mxu0 %v2160
    %v2291 = vpop.f32.mrf.mxu0
    %v2292 = vadd.f32 0.0, %v2291
    %v2293 = vpop.f32.mrf.mxu0
    %2294 = vmatprep.mubr.f32.mxu0 0.0
    %2295 = vmatmul.mubr.f32.gmra.mxu0 %v2163
    %v2296 = vpop.f32.mrf.mxu0
    %v2297 = vadd.f32 0.0, %v2296
    %v2298 = vpop.f32.mrf.mxu0
    %2299 = vmatprep.mubr.f32.mxu0 0.0
    %2300 = vmatmul.mubr.f32.gmra.mxu0 %v2166
    %v2301 = vpop.f32.mrf.mxu0
    %v2302 = vadd.f32 0.0, %v2301
    %v2303 = vpop.f32.mrf.mxu0
    %2304 = vmatprep.mubr.f32.mxu0 0.0
    %2305 = vmatmul.mubr.f32.gmra.mxu0 %v2169
    %v2306 = vpop.f32.mrf.mxu0
    %v2307 = vadd.f32 0.0, %v2306
    %v2308 = vpop.f32.mrf.mxu0
    %2309 = vmatprep.mubr.f32.mxu0 0.0
    %2310 = vmatmul.mubr.f32.gmra.mxu0 %v2172
    %v2311 = vpop.f32.mrf.mxu0
    %v2312 = vadd.f32 0.0, %v2311
    %v2313 = vpop.f32.mrf.mxu0
    %2314 = vmatprep.mubr.f32.mxu0 0.0
    %2315 = vmatmul.mubr.f32.gmra.mxu0 %v2175
    %v2316 = vpop.f32.mrf.mxu0
    %v2317 = vadd.f32 0.0, %v2316
    %v2318 = vpop.f32.mrf.mxu0
    %2319 = vmatprep.mubr.f32.mxu0 0.0
    %2320 = vmatmul.mubr.f32.gmra.mxu0 %v2178
    %v2321 = vpop.f32.mrf.mxu0
    %v2322 = vadd.f32 0.0, %v2321
    %v2323 = vpop.f32.mrf.mxu0
    %2324 = vmatprep.mubr.f32.mxu0 0.0
    %2325 = vmatmul.mubr.f32.gmra.mxu0 %v2181
    %v2326 = vpop.f32.mrf.mxu0
    %v2327 = vadd.f32 0.0, %v2326
    %v2328 = vpop.f32.mrf.mxu0
    %2329 = vmatprep.mubr.f32.mxu0 0.0
    %2330 = vmatmul.mubr.f32.gmra.mxu0 %v2184
    %v2331 = vpop.f32.mrf.mxu0
    %v2332 = vadd.f32 0.0, %v2331
    %v2333 = vpop.f32.mrf.mxu0
    %2334 = vmatprep.mubr.f32.mxu0 0.0
    %2335 = vmatmul.mubr.f32.gmra.mxu0 %v2187
    %v2336 = vpop.f32.mrf.mxu0
    %v2337 = vadd.f32 0.0, %v2336
    %v2338 = vpop.f32.mrf.mxu0
    %2339 = vmatprep.mubr.f32.mxu0 0.0
    %2340 = vmatmul.mubr.f32.gmra.mxu0 %v2190
    %v2341 = vpop.f32.mrf.mxu0
    %v2342 = vadd.f32 0.0, %v2341
    %v2343 = vpop.f32.mrf.mxu0
    %2344 = vmatprep.mubr.f32.mxu0 0.0
    %2345 = vmatmul.mubr.f32.gmra.mxu0 %v2193
    %v2346 = vpop.f32.mrf.mxu0
    %v2347 = vadd.f32 0.0, %v2346
    %v2348 = vpop.f32.mrf.mxu0
    %2349 = vdwg.mxu0
    %v2350 = vadd.f32 %v2096, %v2262
    %v2351 = vadd.f32 %v2097, %v2267
    %v2352 = vadd.f32 %v2098, %v2272
    %v2353 = vadd.f32 %v2099, %v2277
    %v2354 = vadd.f32 %v2100, %v2282
    %v2355 = vadd.f32 %v2101, %v2287
    %v2356 = vadd.f32 %v2102, %v2292
    %v2357 = vadd.f32 %v2103, %v2297
    %v2358 = vadd.f32 %v2104, %v2302
    %v2359 = vadd.f32 %v2105, %v2307
    %v2360 = vadd.f32 %v2106, %v2312
    %v2361 = vadd.f32 %v2107, %v2317
    %v2362 = vadd.f32 %v2108, %v2322
    %v2363 = vadd.f32 %v2109, %v2327
    %v2364 = vadd.f32 %v2110, %v2332
    %v2365 = vadd.f32 %v2111, %v2337
    %v2366 = vadd.f32 %v2112, %v2342
    %v2367 = vadd.f32 %v2113, %v2347
    %2369 = vset.pattern.permute.xlu0 0
    %2370 = vperm.xlu0 %2369, %v60
    %v2371 = vpop.permute.xlu0 %2370
    %2374 = vset.pattern.permute.xlu0 0
    %2375 = vperm.xlu0 %2374, %v61
    %v2376 = vpop.permute.xlu0 %2375
    %2379 = vset.pattern.permute.xlu0 0
    %2380 = vperm.xlu0 %2379, %v62
    %v2381 = vpop.permute.xlu0 %2380
    %2384 = vset.pattern.permute.xlu0 0
    %2385 = vperm.xlu0 %2384, %v63
    %v2386 = vpop.permute.xlu0 %2385
    %2389 = vset.pattern.permute.xlu0 0
    %2390 = vperm.xlu0 %2389, %v64
    %v2391 = vpop.permute.xlu0 %2390
    %2394 = vset.pattern.permute.xlu0 0
    %2395 = vperm.xlu0 %2394, %v65
    %v2396 = vpop.permute.xlu0 %2395
    %2399 = vset.pattern.permute.xlu0 0
    %2400 = vperm.xlu0 %2399, %v66
    %v2401 = vpop.permute.xlu0 %2400
    %2404 = vset.pattern.permute.xlu0 0
    %2405 = vperm.xlu0 %2404, %v67
    %v2406 = vpop.permute.xlu0 %2405
    %2409 = vset.pattern.permute.xlu0 0
    %2410 = vperm.xlu0 %2409, %v68
    %v2411 = vpop.permute.xlu0 %2410
    %2414 = vset.pattern.permute.xlu0 0
    %2415 = vperm.xlu0 %2414, %v69
    %v2416 = vpop.permute.xlu0 %2415
    %2419 = vset.pattern.permute.xlu0 0
    %2420 = vperm.xlu0 %2419, %v70
    %v2421 = vpop.permute.xlu0 %2420
    %2424 = vset.pattern.permute.xlu0 0
    %2425 = vperm.xlu0 %2424, %v71
    %v2426 = vpop.permute.xlu0 %2425
    %2429 = vset.pattern.permute.xlu0 0
    %2430 = vperm.xlu0 %2429, %v72
    %v2431 = vpop.permute.xlu0 %2430
    %2434 = vset.pattern.permute.xlu0 0
    %2435 = vperm.xlu0 %2434, %v73
    %v2436 = vpop.permute.xlu0 %2435
    %2439 = vset.pattern.permute.xlu0 0
    %2440 = vperm.xlu0 %2439, %v74
    %v2441 = vpop.permute.xlu0 %2440
    %2444 = vset.pattern.permute.xlu0 0
    %2445 = vperm.xlu0 %2444, %v75
    %v2446 = vpop.permute.xlu0 %2445
    %2449 = vset.pattern.permute.xlu0 0
    %2450 = vperm.xlu0 %2449, %v76
    %v2451 = vpop.permute.xlu0 %2450
    %2454 = vset.pattern.permute.xlu0 0
    %2455 = vperm.xlu0 %2454, %v77
    %v2456 = vpop.permute.xlu0 %2455
    %v2458 = vmul.f32 %v2350, %v2371
    %v2459 = vmul.f32 %v2351, %v2376
    %v2460 = vmul.f32 %v2352, %v2381
    %v2461 = vmul.f32 %v2353, %v2386
    %v2462 = vmul.f32 %v2354, %v2391
    %v2463 = vmul.f32 %v2355, %v2396
    %v2464 = vmul.f32 %v2356, %v2401
    %v2465 = vmul.f32 %v2357, %v2406
    %v2466 = vmul.f32 %v2358, %v2411
    %v2467 = vmul.f32 %v2359, %v2416
    %v2468 = vmul.f32 %v2360, %v2421
    %v2469 = vmul.f32 %v2361, %v2426
    %v2470 = vmul.f32 %v2362, %v2431
    %v2471 = vmul.f32 %v2363, %v2436
    %v2472 = vmul.f32 %v2364, %v2441
    %v2473 = vmul.f32 %v2365, %v2446
    %v2474 = vmul.f32 %v2366, %v2451
    %v2475 = vmul.f32 %v2367, %v2456
    %v2476 = vsel %vm98, %v2458, 0.0
    %v2477 = vsel %vm98, %v2459, 0.0
    %v2478 = vadd.f32 %v2476, %v2477
    %v2479 = vsel %vm98, %v2460, 0.0
    %v2480 = vadd.f32 %v2478, %v2479
    %v2481 = vsel %vm98, %v2461, 0.0
    %v2482 = vadd.f32 %v2480, %v2481
    %v2483 = vsel %vm98, %v2462, 0.0
    %v2484 = vadd.f32 %v2482, %v2483
    %v2485 = vsel %vm98, %v2463, 0.0
    %v2486 = vadd.f32 %v2484, %v2485
    %v2487 = vsel %vm98, %v2464, 0.0
    %v2488 = vadd.f32 %v2486, %v2487
    %v2489 = vsel %vm98, %v2465, 0.0
    %v2490 = vadd.f32 %v2488, %v2489
    %v2491 = vsel %vm98, %v2466, 0.0
    %v2492 = vadd.f32 %v2490, %v2491
    %v2493 = vsel %vm98, %v2467, 0.0
    %v2494 = vadd.f32 %v2492, %v2493
    %v2495 = vsel %vm98, %v2468, 0.0
    %v2496 = vadd.f32 %v2494, %v2495
    %v2497 = vsel %vm98, %v2469, 0.0
    %v2498 = vadd.f32 %v2496, %v2497
    %v2499 = vsel %vm98, %v2470, 0.0
    %v2500 = vadd.f32 %v2498, %v2499
    %v2501 = vsel %vm98, %v2471, 0.0
    %v2502 = vadd.f32 %v2500, %v2501
    %v2503 = vsel %vm98, %v2472, 0.0
    %v2504 = vadd.f32 %v2502, %v2503
    %v2505 = vsel %vm98, %v2473, 0.0
    %v2506 = vadd.f32 %v2504, %v2505
    %v2507 = vsel %vm98, %v2474, 0.0
    %v2508 = vadd.f32 %v2506, %v2507
    %vm2509 = vcmask 517120
    %v2510 = vsel %vm2509, %v2475, 0.0
    %v2511 = vadd.f32 %v2508, %v2510
    %v2512 = vrot.slane %v2511, 4
    %v2513 = vadd.f32 %v2511, %v2512
    %v2514 = vrot.slane %v2513, 2
    %v2515 = vadd.f32 %v2513, %v2514
    %v2516 = vrot.slane %v2515, 1
    %v2517 = vadd.f32 %v2515, %v2516
    %v2518 = vmul.f32 %v2458, %v2350
    %v2519 = vmul.f32 %v2459, %v2351
    %v2520 = vmul.f32 %v2460, %v2352
    %v2521 = vmul.f32 %v2461, %v2353
    %v2522 = vmul.f32 %v2462, %v2354
    %v2523 = vmul.f32 %v2463, %v2355
    %v2524 = vmul.f32 %v2464, %v2356
    %v2525 = vmul.f32 %v2465, %v2357
    %v2526 = vmul.f32 %v2466, %v2358
    %v2527 = vmul.f32 %v2467, %v2359
    %v2528 = vmul.f32 %v2468, %v2360
    %v2529 = vmul.f32 %v2469, %v2361
    %v2530 = vmul.f32 %v2470, %v2362
    %v2531 = vmul.f32 %v2471, %v2363
    %v2532 = vmul.f32 %v2472, %v2364
    %v2533 = vmul.f32 %v2473, %v2365
    %v2534 = vmul.f32 %v2474, %v2366
    %v2535 = vmul.f32 %v2475, %v2367
    %v2536 = vsel %vm98, %v2518, 0.0
    %v2537 = vsel %vm98, %v2519, 0.0
    %v2538 = vadd.f32 %v2536, %v2537
    %v2539 = vsel %vm98, %v2520, 0.0
    %v2540 = vadd.f32 %v2538, %v2539
    %v2541 = vsel %vm98, %v2521, 0.0
    %v2542 = vadd.f32 %v2540, %v2541
    %v2543 = vsel %vm98, %v2522, 0.0
    %v2544 = vadd.f32 %v2542, %v2543
    %v2545 = vsel %vm98, %v2523, 0.0
    %v2546 = vadd.f32 %v2544, %v2545
    %v2547 = vsel %vm98, %v2524, 0.0
    %v2548 = vadd.f32 %v2546, %v2547
    %v2549 = vsel %vm98, %v2525, 0.0
    %v2550 = vadd.f32 %v2548, %v2549
    %v2551 = vsel %vm98, %v2526, 0.0
    %v2552 = vadd.f32 %v2550, %v2551
    %v2553 = vsel %vm98, %v2527, 0.0
    %v2554 = vadd.f32 %v2552, %v2553
    %v2555 = vsel %vm98, %v2528, 0.0
    %v2556 = vadd.f32 %v2554, %v2555
    %v2557 = vsel %vm98, %v2529, 0.0
    %v2558 = vadd.f32 %v2556, %v2557
    %v2559 = vsel %vm98, %v2530, 0.0
    %v2560 = vadd.f32 %v2558, %v2559
    %v2561 = vsel %vm98, %v2531, 0.0
    %v2562 = vadd.f32 %v2560, %v2561
    %v2563 = vsel %vm98, %v2532, 0.0
    %v2564 = vadd.f32 %v2562, %v2563
    %v2565 = vsel %vm98, %v2533, 0.0
    %v2566 = vadd.f32 %v2564, %v2565
    %v2567 = vsel %vm98, %v2534, 0.0
    %v2568 = vadd.f32 %v2566, %v2567
    %v2569 = vsel %vm2509, %v2535, 0.0
    %v2570 = vadd.f32 %v2568, %v2569
    %v2571 = vrot.slane %v2570, 4
    %v2572 = vadd.f32 %v2570, %v2571
    %v2573 = vrot.slane %v2572, 2
    %v2574 = vadd.f32 %v2572, %v2573
    %v2575 = vrot.slane %v2574, 1
    %v2576 = vadd.f32 %v2574, %v2575
    %v2577 = vld [vmem:[%s8] sm:$0xff]
    %v2578 = vld [vmem:[%s8 + $0x8] sm:$0xff]
    %v2579 = vld [vmem:[%s8 + $0x10] sm:$0xff]
    %v2580 = vld [vmem:[%s8 + $0x18] sm:$0xff]
    %v2581 = vld [vmem:[%s8 + $0x20] sm:$0xff]
    %v2582 = vld [vmem:[%s8 + $0x28] sm:$0xff]
    %v2583 = vld [vmem:[%s8 + $0x30] sm:$0xff]
    %v2584 = vld [vmem:[%s8 + $0x38] sm:$0xff]
    %v2586 = vsel %vm98, %v2517, 0
    %2588 = vmatprep.subr.mxu0 0.0
    %2589 = vmatpush1.msra.mxu0 0.0
    %2590 = vmatprep.subr.mxu0 0.0
    %2591 = vmatpush1.msra.mxu0 0.0
    %2592 = vmatprep.subr.mxu0 0.0
    %2593 = vmatpush1.msra.mxu0 0.0
    %2594 = vmatprep.subr.mxu0 0.0
    %2595 = vmatpush1.msra.mxu0 0.0
    %2596 = vmatprep.subr.mxu0 0.0
    %2597 = vmatpush1.msra.mxu0 0.0
    %2598 = vmatprep.subr.mxu0 0.0
    %2599 = vmatpush1.msra.mxu0 0.0
    %2600 = vmatprep.subr.mxu0 0.0
    %2601 = vmatpush1.msra.mxu0 0.0
    %2602 = vmatprep.subr.mxu0 0.0
    %2603 = vmatpush1.msra.mxu0 0.0
    %2604 = vmatprep.subr.mxu0 0.0
    %2605 = vmatpush1.msra.mxu0 %v2584
    %2606 = vmatprep.subr.mxu0 0.0
    %2607 = vmatpush1.msra.mxu0 %v2583
    %2608 = vmatprep.subr.mxu0 0.0
    %2609 = vmatpush1.msra.mxu0 %v2582
    %2610 = vmatprep.subr.mxu0 0.0
    %2611 = vmatpush1.msra.mxu0 %v2581
    %2612 = vmatprep.subr.mxu0 0.0
    %2613 = vmatpush1.msra.mxu0 %v2580
    %2614 = vmatprep.subr.mxu0 0.0
    %2615 = vmatpush1.msra.mxu0 %v2579
    %2616 = vmatprep.subr.mxu0 0.0
    %2617 = vmatpush1.msra.mxu0 %v2578
    %2618 = vmatprep.subr.mxu0 0.0
    %2619 = vmatpush1.msra.mxu0 %v2577
    %2620 = vmatprep.subr.mxu0 0.0
    %2621 = vmatpush2.msra.mxu0 0.0
    %2622 = vmatprep.subr.mxu0 0.0
    %2623 = vmatpush2.msra.mxu0 0.0
    %2624 = vmatprep.subr.mxu0 0.0
    %2625 = vmatpush2.msra.mxu0 0.0
    %2626 = vmatprep.subr.mxu0 0.0
    %2627 = vmatpush2.msra.mxu0 0.0
    %2628 = vmatprep.subr.mxu0 0.0
    %2629 = vmatpush2.msra.mxu0 0.0
    %2630 = vmatprep.subr.mxu0 0.0
    %2631 = vmatpush2.msra.mxu0 0.0
    %2632 = vmatprep.subr.mxu0 0.0
    %2633 = vmatpush2.msra.mxu0 0.0
    %2634 = vmatprep.subr.mxu0 0.0
    %2635 = vmatpush2.msra.mxu0 0.0
    %2636 = vmatprep.subr.mxu0 0.0
    %2637 = vmatpush2.msra.mxu0 0.0
    %2638 = vmatprep.subr.mxu0 0.0
    %2639 = vmatpush2.msra.mxu0 0.0
    %2640 = vmatprep.subr.mxu0 0.0
    %2641 = vmatpush2.msra.mxu0 0.0
    %2642 = vmatprep.subr.mxu0 0.0
    %2643 = vmatpush2.msra.mxu0 0.0
    %2644 = vmatprep.subr.mxu0 0.0
    %2645 = vmatpush2.msra.mxu0 0.0
    %2646 = vmatprep.subr.mxu0 0.0
    %2647 = vmatpush2.msra.mxu0 0.0
    %2648 = vmatprep.subr.mxu0 0.0
    %2649 = vmatpush2.msra.mxu0 0.0
    %2650 = vmatprep.subr.mxu0 0.0
    %2651 = vmatpush2.msra.mxu0 0.0
    %2652 = vmatprep.mubr.f32.mxu0 0.0
    %2653 = vmatmul.mubr.f32.gmra.mxu0 %v2586
    %v2654 = vpop.f32.mrf.mxu0
    %v2655 = vadd.f32 0.0, %v2654
    %v2656 = vpop.f32.mrf.mxu0
    %2657 = vdwg.mxu0
    %v2659 = vsel %vm98, %v2576, 0
    %2661 = vmatprep.subr.mxu0 0.0
    %2662 = vmatpush1.msra.mxu0 0.0
    %2663 = vmatprep.subr.mxu0 0.0
    %2664 = vmatpush1.msra.mxu0 0.0
    %2665 = vmatprep.subr.mxu0 0.0
    %2666 = vmatpush1.msra.mxu0 0.0
    %2667 = vmatprep.subr.mxu0 0.0
    %2668 = vmatpush1.msra.mxu0 0.0
    %2669 = vmatprep.subr.mxu0 0.0
    %2670 = vmatpush1.msra.mxu0 0.0
    %2671 = vmatprep.subr.mxu0 0.0
    %2672 = vmatpush1.msra.mxu0 0.0
    %2673 = vmatprep.subr.mxu0 0.0
    %2674 = vmatpush1.msra.mxu0 0.0
    %2675 = vmatprep.subr.mxu0 0.0
    %2676 = vmatpush1.msra.mxu0 0.0
    %2677 = vmatprep.subr.mxu0 0.0
    %2678 = vmatpush1.msra.mxu0 %v2584
    %2679 = vmatprep.subr.mxu0 0.0
    %2680 = vmatpush1.msra.mxu0 %v2583
    %2681 = vmatprep.subr.mxu0 0.0
    %2682 = vmatpush1.msra.mxu0 %v2582
    %2683 = vmatprep.subr.mxu0 0.0
    %2684 = vmatpush1.msra.mxu0 %v2581
    %2685 = vmatprep.subr.mxu0 0.0
    %2686 = vmatpush1.msra.mxu0 %v2580
    %2687 = vmatprep.subr.mxu0 0.0
    %2688 = vmatpush1.msra.mxu0 %v2579
    %2689 = vmatprep.subr.mxu0 0.0
    %2690 = vmatpush1.msra.mxu0 %v2578
    %2691 = vmatprep.subr.mxu0 0.0
    %2692 = vmatpush1.msra.mxu0 %v2577
    %2693 = vmatprep.subr.mxu0 0.0
    %2694 = vmatpush2.msra.mxu0 0.0
    %2695 = vmatprep.subr.mxu0 0.0
    %2696 = vmatpush2.msra.mxu0 0.0
    %2697 = vmatprep.subr.mxu0 0.0
    %2698 = vmatpush2.msra.mxu0 0.0
    %2699 = vmatprep.subr.mxu0 0.0
    %2700 = vmatpush2.msra.mxu0 0.0
    %2701 = vmatprep.subr.mxu0 0.0
    %2702 = vmatpush2.msra.mxu0 0.0
    %2703 = vmatprep.subr.mxu0 0.0
    %2704 = vmatpush2.msra.mxu0 0.0
    %2705 = vmatprep.subr.mxu0 0.0
    %2706 = vmatpush2.msra.mxu0 0.0
    %2707 = vmatprep.subr.mxu0 0.0
    %2708 = vmatpush2.msra.mxu0 0.0
    %2709 = vmatprep.subr.mxu0 0.0
    %2710 = vmatpush2.msra.mxu0 0.0
    %2711 = vmatprep.subr.mxu0 0.0
    %2712 = vmatpush2.msra.mxu0 0.0
    %2713 = vmatprep.subr.mxu0 0.0
    %2714 = vmatpush2.msra.mxu0 0.0
    %2715 = vmatprep.subr.mxu0 0.0
    %2716 = vmatpush2.msra.mxu0 0.0
    %2717 = vmatprep.subr.mxu0 0.0
    %2718 = vmatpush2.msra.mxu0 0.0
    %2719 = vmatprep.subr.mxu0 0.0
    %2720 = vmatpush2.msra.mxu0 0.0
    %2721 = vmatprep.subr.mxu0 0.0
    %2722 = vmatpush2.msra.mxu0 0.0
    %2723 = vmatprep.subr.mxu0 0.0
    %2724 = vmatpush2.msra.mxu0 0.0
    %2725 = vmatprep.mubr.f32.mxu0 0.0
    %2726 = vmatmul.mubr.f32.gmra.mxu0 %v2659
    %v2727 = vpop.f32.mrf.mxu0
    %v2728 = vadd.f32 0.0, %v2727
    %v2729 = vpop.f32.mrf.mxu0
    %2730 = vdwg.mxu0
    %v2731 = vmul.f32 %v2655, 0.0013020834
    %v2732 = vmul.f32 %v2728, 0.0013020834
    %v2733 = vmul.f32 %v2731, %v2731
    %v2734 = vsub.f32 %v2732, %v2733
    %v2735 = vmax.f32 %v2734, 0.0
    %v2736 = vld [vmem:[%s3] sm:$0x1]
    %v2737 = vadd.f32 %v2735, 1e-05
    %v2738 = vrsqrt.pop %v2737
    %v2739 = vmul.f32 %v2736, %v2738
    %v2740 = vld [vmem:[%s4] sm:$0x1]
    %v2741 = vmul.f32 %v2731, %v2739
    %v2742 = vsub.f32 %v2740, %v2741
    %v2744 = vlaneseq
    %v2745 = vshrl.u32 %v2744, 7
    %v2746 = vsub.s32 0, %v2745
    %v2747 = vrot.slane %v2739, %v2746
    %v2749 = vmul.f32 %v2350, %v2747
    %v2750 = vmul.f32 %v2351, %v2747
    %v2751 = vmul.f32 %v2352, %v2747
    %v2752 = vmul.f32 %v2353, %v2747
    %v2753 = vmul.f32 %v2354, %v2747
    %v2754 = vmul.f32 %v2355, %v2747
    %v2755 = vmul.f32 %v2356, %v2747
    %v2756 = vmul.f32 %v2357, %v2747
    %v2757 = vmul.f32 %v2358, %v2747
    %v2758 = vmul.f32 %v2359, %v2747
    %v2759 = vmul.f32 %v2360, %v2747
    %v2760 = vmul.f32 %v2361, %v2747
    %v2761 = vmul.f32 %v2362, %v2747
    %v2762 = vmul.f32 %v2363, %v2747
    %v2763 = vmul.f32 %v2364, %v2747
    %v2764 = vmul.f32 %v2365, %v2747
    %v2765 = vmul.f32 %v2366, %v2747
    %v2766 = vmul.f32 %v2367, %v2747
    %v2768 = vlaneseq
    %v2769 = vshrl.u32 %v2768, 7
    %v2770 = vsub.s32 0, %v2769
    %v2771 = vrot.slane %v2742, %v2770
    %v2773 = vadd.f32 %v2749, %v2771
    %v2774 = vadd.f32 %v2750, %v2771
    %v2775 = vadd.f32 %v2751, %v2771
    %v2776 = vadd.f32 %v2752, %v2771
    %v2777 = vadd.f32 %v2753, %v2771
    %v2778 = vadd.f32 %v2754, %v2771
    %v2779 = vadd.f32 %v2755, %v2771
    %v2780 = vadd.f32 %v2756, %v2771
    %v2781 = vadd.f32 %v2757, %v2771
    %v2782 = vadd.f32 %v2758, %v2771
    %v2783 = vadd.f32 %v2759, %v2771
    %v2784 = vadd.f32 %v2760, %v2771
    %v2785 = vadd.f32 %v2761, %v2771
    %v2786 = vadd.f32 %v2762, %v2771
    %v2787 = vadd.f32 %v2763, %v2771
    %v2788 = vadd.f32 %v2764, %v2771
    %v2789 = vadd.f32 %v2765, %v2771
    %v2790 = vadd.f32 %v2766, %v2771
    %v2791 = vmul.f32 %v2773, 0.70710677
    %v2792 = vmul.f32 %v2774, 0.70710677
    %v2793 = vmul.f32 %v2775, 0.70710677
    %v2794 = vmul.f32 %v2776, 0.70710677
    %v2795 = vmul.f32 %v2777, 0.70710677
    %v2796 = vmul.f32 %v2778, 0.70710677
    %v2797 = vmul.f32 %v2779, 0.70710677
    %v2798 = vmul.f32 %v2780, 0.70710677
    %v2799 = vmul.f32 %v2781, 0.70710677
    %v2800 = vmul.f32 %v2782, 0.70710677
    %v2801 = vmul.f32 %v2783, 0.70710677
    %v2802 = vmul.f32 %v2784, 0.70710677
    %v2803 = vmul.f32 %v2785, 0.70710677
    %v2804 = vmul.f32 %v2786, 0.70710677
    %v2805 = vmul.f32 %v2787, 0.70710677
    %v2806 = vmul.f32 %v2788, 0.70710677
    %v2807 = vmul.f32 %v2789, 0.70710677
    %v2808 = vmul.f32 %v2790, 0.70710677
    %vm2809 = vcmp.ge.f32.partialorder %v2791, 0.0
    %vm2810 = vcmp.ge.f32.partialorder %v2792, 0.0
    %vm2811 = vcmp.ge.f32.partialorder %v2793, 0.0
    %vm2812 = vcmp.ge.f32.partialorder %v2794, 0.0
    %vm2813 = vcmp.ge.f32.partialorder %v2795, 0.0
    %vm2814 = vcmp.ge.f32.partialorder %v2796, 0.0
    %vm2815 = vcmp.ge.f32.partialorder %v2797, 0.0
    %vm2816 = vcmp.ge.f32.partialorder %v2798, 0.0
    %vm2817 = vcmp.ge.f32.partialorder %v2799, 0.0
    %vm2818 = vcmp.ge.f32.partialorder %v2800, 0.0
    %vm2819 = vcmp.ge.f32.partialorder %v2801, 0.0
    %vm2820 = vcmp.ge.f32.partialorder %v2802, 0.0
    %vm2821 = vcmp.ge.f32.partialorder %v2803, 0.0
    %vm2822 = vcmp.ge.f32.partialorder %v2804, 0.0
    %vm2823 = vcmp.ge.f32.partialorder %v2805, 0.0
    %vm2824 = vcmp.ge.f32.partialorder %v2806, 0.0
    %vm2825 = vcmp.ge.f32.partialorder %v2807, 0.0
    %vm2826 = vcmp.ge.f32.partialorder %v2808, 0.0
    %v2827 = vsel %vm2809, 1.0, -1.0
    %v2828 = vsel %vm2810, 1.0, -1.0
    %v2829 = vsel %vm2811, 1.0, -1.0
    %v2830 = vsel %vm2812, 1.0, -1.0
    %v2831 = vsel %vm2813, 1.0, -1.0
    %v2832 = vsel %vm2814, 1.0, -1.0
    %v2833 = vsel %vm2815, 1.0, -1.0
    %v2834 = vsel %vm2816, 1.0, -1.0
    %v2835 = vsel %vm2817, 1.0, -1.0
    %v2836 = vsel %vm2818, 1.0, -1.0
    %v2837 = vsel %vm2819, 1.0, -1.0
    %v2838 = vsel %vm2820, 1.0, -1.0
    %v2839 = vsel %vm2821, 1.0, -1.0
    %v2840 = vsel %vm2822, 1.0, -1.0
    %v2841 = vsel %vm2823, 1.0, -1.0
    %v2842 = vsel %vm2824, 1.0, -1.0
    %v2843 = vsel %vm2825, 1.0, -1.0
    %v2844 = vsel %vm2826, 1.0, -1.0
    %v2845 = vand.u32 2147483647, %v2791
    %v2846 = vand.u32 2147483647, %v2792
    %v2847 = vand.u32 2147483647, %v2793
    %v2848 = vand.u32 2147483647, %v2794
    %v2849 = vand.u32 2147483647, %v2795
    %v2850 = vand.u32 2147483647, %v2796
    %v2851 = vand.u32 2147483647, %v2797
    %v2852 = vand.u32 2147483647, %v2798
    %v2853 = vand.u32 2147483647, %v2799
    %v2854 = vand.u32 2147483647, %v2800
    %v2855 = vand.u32 2147483647, %v2801
    %v2856 = vand.u32 2147483647, %v2802
    %v2857 = vand.u32 2147483647, %v2803
    %v2858 = vand.u32 2147483647, %v2804
    %v2859 = vand.u32 2147483647, %v2805
    %v2860 = vand.u32 2147483647, %v2806
    %v2861 = vand.u32 2147483647, %v2807
    %v2862 = vand.u32 2147483647, %v2808
    %v2863 = vmul.f32 %v2845, 0.3275911
    %v2864 = vmul.f32 %v2846, 0.3275911
    %v2865 = vmul.f32 %v2847, 0.3275911
    %v2866 = vmul.f32 %v2848, 0.3275911
    %v2867 = vmul.f32 %v2849, 0.3275911
    %v2868 = vmul.f32 %v2850, 0.3275911
    %v2869 = vmul.f32 %v2851, 0.3275911
    %v2870 = vmul.f32 %v2852, 0.3275911
    %v2871 = vmul.f32 %v2853, 0.3275911
    %v2872 = vmul.f32 %v2854, 0.3275911
    %v2873 = vmul.f32 %v2855, 0.3275911
    %v2874 = vmul.f32 %v2856, 0.3275911
    %v2875 = vmul.f32 %v2857, 0.3275911
    %v2876 = vmul.f32 %v2858, 0.3275911
    %v2877 = vmul.f32 %v2859, 0.3275911
    %v2878 = vmul.f32 %v2860, 0.3275911
    %v2879 = vmul.f32 %v2861, 0.3275911
    %v2880 = vmul.f32 %v2862, 0.3275911
    %v2881 = vadd.f32 %v2863, 1.0
    %v2882 = vadd.f32 %v2864, 1.0
    %v2883 = vadd.f32 %v2865, 1.0
    %v2884 = vadd.f32 %v2866, 1.0
    %v2885 = vadd.f32 %v2867, 1.0
    %v2886 = vadd.f32 %v2868, 1.0
    %v2887 = vadd.f32 %v2869, 1.0
    %v2888 = vadd.f32 %v2870, 1.0
    %v2889 = vadd.f32 %v2871, 1.0
    %v2890 = vadd.f32 %v2872, 1.0
    %v2891 = vadd.f32 %v2873, 1.0
    %v2892 = vadd.f32 %v2874, 1.0
    %v2893 = vadd.f32 %v2875, 1.0
    %v2894 = vadd.f32 %v2876, 1.0
    %v2895 = vadd.f32 %v2877, 1.0
    %v2896 = vadd.f32 %v2878, 1.0
    %v2897 = vadd.f32 %v2879, 1.0
    %v2898 = vadd.f32 %v2880, 1.0
    %v2899 = vrcp.pop %v2881
    %v2900 = vrcp.pop %v2882
    %v2901 = vrcp.pop %v2883
    %v2902 = vrcp.pop %v2884
    %v2903 = vrcp.pop %v2885
    %v2904 = vrcp.pop %v2886
    %v2905 = vrcp.pop %v2887
    %v2906 = vrcp.pop %v2888
    %v2907 = vrcp.pop %v2889
    %v2908 = vrcp.pop %v2890
    %v2909 = vrcp.pop %v2891
    %v2910 = vrcp.pop %v2892
    %v2911 = vrcp.pop %v2893
    %v2912 = vrcp.pop %v2894
    %v2913 = vrcp.pop %v2895
    %v2914 = vrcp.pop %v2896
    %v2915 = vrcp.pop %v2897
    %v2916 = vrcp.pop %v2898
    %v2917 = vmul.f32 %v2881, %v2899
    %v2918 = vmul.f32 %v2882, %v2900
    %v2919 = vmul.f32 %v2883, %v2901
    %v2920 = vmul.f32 %v2884, %v2902
    %v2921 = vmul.f32 %v2885, %v2903
    %v2922 = vmul.f32 %v2886, %v2904
    %v2923 = vmul.f32 %v2887, %v2905
    %v2924 = vmul.f32 %v2888, %v2906
    %v2925 = vmul.f32 %v2889, %v2907
    %v2926 = vmul.f32 %v2890, %v2908
    %v2927 = vmul.f32 %v2891, %v2909
    %v2928 = vmul.f32 %v2892, %v2910
    %v2929 = vmul.f32 %v2893, %v2911
    %v2930 = vmul.f32 %v2894, %v2912
    %v2931 = vmul.f32 %v2895, %v2913
    %v2932 = vmul.f32 %v2896, %v2914
    %v2933 = vmul.f32 %v2897, %v2915
    %v2934 = vmul.f32 %v2898, %v2916
    %v2935 = vsub.f32 2.0, %v2917
    %v2936 = vsub.f32 2.0, %v2918
    %v2937 = vsub.f32 2.0, %v2919
    %v2938 = vsub.f32 2.0, %v2920
    %v2939 = vsub.f32 2.0, %v2921
    %v2940 = vsub.f32 2.0, %v2922
    %v2941 = vsub.f32 2.0, %v2923
    %v2942 = vsub.f32 2.0, %v2924
    %v2943 = vsub.f32 2.0, %v2925
    %v2944 = vsub.f32 2.0, %v2926
    %v2945 = vsub.f32 2.0, %v2927
    %v2946 = vsub.f32 2.0, %v2928
    %v2947 = vsub.f32 2.0, %v2929
    %v2948 = vsub.f32 2.0, %v2930
    %v2949 = vsub.f32 2.0, %v2931
    %v2950 = vsub.f32 2.0, %v2932
    %v2951 = vsub.f32 2.0, %v2933
    %v2952 = vsub.f32 2.0, %v2934
    %v2953 = vmul.f32 %v2899, %v2935
    %v2954 = vmul.f32 %v2900, %v2936
    %v2955 = vmul.f32 %v2901, %v2937
    %v2956 = vmul.f32 %v2902, %v2938
    %v2957 = vmul.f32 %v2903, %v2939
    %v2958 = vmul.f32 %v2904, %v2940
    %v2959 = vmul.f32 %v2905, %v2941
    %v2960 = vmul.f32 %v2906, %v2942
    %v2961 = vmul.f32 %v2907, %v2943
    %v2962 = vmul.f32 %v2908, %v2944
    %v2963 = vmul.f32 %v2909, %v2945
    %v2964 = vmul.f32 %v2910, %v2946
    %v2965 = vmul.f32 %v2911, %v2947
    %v2966 = vmul.f32 %v2912, %v2948
    %v2967 = vmul.f32 %v2913, %v2949
    %v2968 = vmul.f32 %v2914, %v2950
    %v2969 = vmul.f32 %v2915, %v2951
    %v2970 = vmul.f32 %v2916, %v2952
    %v2971 = vmul.f32 %v2953, 1.0614054
    %v2972 = vmul.f32 %v2954, 1.0614054
    %v2973 = vmul.f32 %v2955, 1.0614054
    %v2974 = vmul.f32 %v2956, 1.0614054
    %v2975 = vmul.f32 %v2957, 1.0614054
    %v2976 = vmul.f32 %v2958, 1.0614054
    %v2977 = vmul.f32 %v2959, 1.0614054
    %v2978 = vmul.f32 %v2960, 1.0614054
    %v2979 = vmul.f32 %v2961, 1.0614054
    %v2980 = vmul.f32 %v2962, 1.0614054
    %v2981 = vmul.f32 %v2963, 1.0614054
    %v2982 = vmul.f32 %v2964, 1.0614054
    %v2983 = vmul.f32 %v2965, 1.0614054
    %v2984 = vmul.f32 %v2966, 1.0614054
    %v2985 = vmul.f32 %v2967, 1.0614054
    %v2986 = vmul.f32 %v2968, 1.0614054
    %v2987 = vmul.f32 %v2969, 1.0614054
    %v2988 = vmul.f32 %v2970, 1.0614054
    %v2989 = vadd.f32 %v2971, -1.4531521
    %v2990 = vadd.f32 %v2972, -1.4531521
    %v2991 = vadd.f32 %v2973, -1.4531521
    %v2992 = vadd.f32 %v2974, -1.4531521
    %v2993 = vadd.f32 %v2975, -1.4531521
    %v2994 = vadd.f32 %v2976, -1.4531521
    %v2995 = vadd.f32 %v2977, -1.4531521
    %v2996 = vadd.f32 %v2978, -1.4531521
    %v2997 = vadd.f32 %v2979, -1.4531521
    %v2998 = vadd.f32 %v2980, -1.4531521
    %v2999 = vadd.f32 %v2981, -1.4531521
    %v3000 = vadd.f32 %v2982, -1.4531521
    %v3001 = vadd.f32 %v2983, -1.4531521
    %v3002 = vadd.f32 %v2984, -1.4531521
    %v3003 = vadd.f32 %v2985, -1.4531521
    %v3004 = vadd.f32 %v2986, -1.4531521
    %v3005 = vadd.f32 %v2987, -1.4531521
    %v3006 = vadd.f32 %v2988, -1.4531521
    %v3007 = vmul.f32 %v2989, %v2953
    %v3008 = vmul.f32 %v2990, %v2954
    %v3009 = vmul.f32 %v2991, %v2955
    %v3010 = vmul.f32 %v2992, %v2956
    %v3011 = vmul.f32 %v2993, %v2957
    %v3012 = vmul.f32 %v2994, %v2958
    %v3013 = vmul.f32 %v2995, %v2959
    %v3014 = vmul.f32 %v2996, %v2960
    %v3015 = vmul.f32 %v2997, %v2961
    %v3016 = vmul.f32 %v2998, %v2962
    %v3017 = vmul.f32 %v2999, %v2963
    %v3018 = vmul.f32 %v3000, %v2964
    %v3019 = vmul.f32 %v3001, %v2965
    %v3020 = vmul.f32 %v3002, %v2966
    %v3021 = vmul.f32 %v3003, %v2967
    %v3022 = vmul.f32 %v3004, %v2968
    %v3023 = vmul.f32 %v3005, %v2969
    %v3024 = vmul.f32 %v3006, %v2970
    %v3025 = vadd.f32 %v3007, 1.4214138
    %v3026 = vadd.f32 %v3008, 1.4214138
    %v3027 = vadd.f32 %v3009, 1.4214138
    %v3028 = vadd.f32 %v3010, 1.4214138
    %v3029 = vadd.f32 %v3011, 1.4214138
    %v3030 = vadd.f32 %v3012, 1.4214138
    %v3031 = vadd.f32 %v3013, 1.4214138
    %v3032 = vadd.f32 %v3014, 1.4214138
    %v3033 = vadd.f32 %v3015, 1.4214138
    %v3034 = vadd.f32 %v3016, 1.4214138
    %v3035 = vadd.f32 %v3017, 1.4214138
    %v3036 = vadd.f32 %v3018, 1.4214138
    %v3037 = vadd.f32 %v3019, 1.4214138
    %v3038 = vadd.f32 %v3020, 1.4214138
    %v3039 = vadd.f32 %v3021, 1.4214138
    %v3040 = vadd.f32 %v3022, 1.4214138
    %v3041 = vadd.f32 %v3023, 1.4214138
    %v3042 = vadd.f32 %v3024, 1.4214138
    %v3043 = vmul.f32 %v3025, %v2953
    %v3044 = vmul.f32 %v3026, %v2954
    %v3045 = vmul.f32 %v3027, %v2955
    %v3046 = vmul.f32 %v3028, %v2956
    %v3047 = vmul.f32 %v3029, %v2957
    %v3048 = vmul.f32 %v3030, %v2958
    %v3049 = vmul.f32 %v3031, %v2959
    %v3050 = vmul.f32 %v3032, %v2960
    %v3051 = vmul.f32 %v3033, %v2961
    %v3052 = vmul.f32 %v3034, %v2962
    %v3053 = vmul.f32 %v3035, %v2963
    %v3054 = vmul.f32 %v3036, %v2964
    %v3055 = vmul.f32 %v3037, %v2965
    %v3056 = vmul.f32 %v3038, %v2966
    %v3057 = vmul.f32 %v3039, %v2967
    %v3058 = vmul.f32 %v3040, %v2968
    %v3059 = vmul.f32 %v3041, %v2969
    %v3060 = vmul.f32 %v3042, %v2970
    %v3061 = vadd.f32 %v3043, -0.28449672
    %v3062 = vadd.f32 %v3044, -0.28449672
    %v3063 = vadd.f32 %v3045, -0.28449672
    %v3064 = vadd.f32 %v3046, -0.28449672
    %v3065 = vadd.f32 %v3047, -0.28449672
    %v3066 = vadd.f32 %v3048, -0.28449672
    %v3067 = vadd.f32 %v3049, -0.28449672
    %v3068 = vadd.f32 %v3050, -0.28449672
    %v3069 = vadd.f32 %v3051, -0.28449672
    %v3070 = vadd.f32 %v3052, -0.28449672
    %v3071 = vadd.f32 %v3053, -0.28449672
    %v3072 = vadd.f32 %v3054, -0.28449672
    %v3073 = vadd.f32 %v3055, -0.28449672
    %v3074 = vadd.f32 %v3056, -0.28449672
    %v3075 = vadd.f32 %v3057, -0.28449672
    %v3076 = vadd.f32 %v3058, -0.28449672
    %v3077 = vadd.f32 %v3059, -0.28449672
    %v3078 = vadd.f32 %v3060, -0.28449672
    %v3079 = vmul.f32 %v3061, %v2953
    %v3080 = vmul.f32 %v3062, %v2954
    %v3081 = vmul.f32 %v3063, %v2955
    %v3082 = vmul.f32 %v3064, %v2956
    %v3083 = vmul.f32 %v3065, %v2957
    %v3084 = vmul.f32 %v3066, %v2958
    %v3085 = vmul.f32 %v3067, %v2959
    %v3086 = vmul.f32 %v3068, %v2960
    %v3087 = vmul.f32 %v3069, %v2961
    %v3088 = vmul.f32 %v3070, %v2962
    %v3089 = vmul.f32 %v3071, %v2963
    %v3090 = vmul.f32 %v3072, %v2964
    %v3091 = vmul.f32 %v3073, %v2965
    %v3092 = vmul.f32 %v3074, %v2966
    %v3093 = vmul.f32 %v3075, %v2967
    %v3094 = vmul.f32 %v3076, %v2968
    %v3095 = vmul.f32 %v3077, %v2969
    %v3096 = vmul.f32 %v3078, %v2970
    %v3097 = vadd.f32 %v3079, 0.2548296
    %v3098 = vadd.f32 %v3080, 0.2548296
    %v3099 = vadd.f32 %v3081, 0.2548296
    %v3100 = vadd.f32 %v3082, 0.2548296
    %v3101 = vadd.f32 %v3083, 0.2548296
    %v3102 = vadd.f32 %v3084, 0.2548296
    %v3103 = vadd.f32 %v3085, 0.2548296
    %v3104 = vadd.f32 %v3086, 0.2548296
    %v3105 = vadd.f32 %v3087, 0.2548296
    %v3106 = vadd.f32 %v3088, 0.2548296
    %v3107 = vadd.f32 %v3089, 0.2548296
    %v3108 = vadd.f32 %v3090, 0.2548296
    %v3109 = vadd.f32 %v3091, 0.2548296
    %v3110 = vadd.f32 %v3092, 0.2548296
    %v3111 = vadd.f32 %v3093, 0.2548296
    %v3112 = vadd.f32 %v3094, 0.2548296
    %v3113 = vadd.f32 %v3095, 0.2548296
    %v3114 = vadd.f32 %v3096, 0.2548296
    %v3115 = vmul.f32 %v3097, %v2953
    %v3116 = vmul.f32 %v3098, %v2954
    %v3117 = vmul.f32 %v3099, %v2955
    %v3118 = vmul.f32 %v3100, %v2956
    %v3119 = vmul.f32 %v3101, %v2957
    %v3120 = vmul.f32 %v3102, %v2958
    %v3121 = vmul.f32 %v3103, %v2959
    %v3122 = vmul.f32 %v3104, %v2960
    %v3123 = vmul.f32 %v3105, %v2961
    %v3124 = vmul.f32 %v3106, %v2962
    %v3125 = vmul.f32 %v3107, %v2963
    %v3126 = vmul.f32 %v3108, %v2964
    %v3127 = vmul.f32 %v3109, %v2965
    %v3128 = vmul.f32 %v3110, %v2966
    %v3129 = vmul.f32 %v3111, %v2967
    %v3130 = vmul.f32 %v3112, %v2968
    %v3131 = vmul.f32 %v3113, %v2969
    %v3132 = vmul.f32 %v3114, %v2970
    %v3133 = vmul.f32 %v2791, %v2791
    %v3134 = vmul.f32 %v2792, %v2792
    %v3135 = vmul.f32 %v2793, %v2793
    %v3136 = vmul.f32 %v2794, %v2794
    %v3137 = vmul.f32 %v2795, %v2795
    %v3138 = vmul.f32 %v2796, %v2796
    %v3139 = vmul.f32 %v2797, %v2797
    %v3140 = vmul.f32 %v2798, %v2798
    %v3141 = vmul.f32 %v2799, %v2799
    %v3142 = vmul.f32 %v2800, %v2800
    %v3143 = vmul.f32 %v2801, %v2801
    %v3144 = vmul.f32 %v2802, %v2802
    %v3145 = vmul.f32 %v2803, %v2803
    %v3146 = vmul.f32 %v2804, %v2804
    %v3147 = vmul.f32 %v2805, %v2805
    %v3148 = vmul.f32 %v2806, %v2806
    %v3149 = vmul.f32 %v2807, %v2807
    %v3150 = vmul.f32 %v2808, %v2808
    %v3151 = vsub.f32 0.0, %v3133
    %v3152 = vsub.f32 0.0, %v3134
    %v3153 = vsub.f32 0.0, %v3135
    %v3154 = vsub.f32 0.0, %v3136
    %v3155 = vsub.f32 0.0, %v3137
    %v3156 = vsub.f32 0.0, %v3138
    %v3157 = vsub.f32 0.0, %v3139
    %v3158 = vsub.f32 0.0, %v3140
    %v3159 = vsub.f32 0.0, %v3141
    %v3160 = vsub.f32 0.0, %v3142
    %v3161 = vsub.f32 0.0, %v3143
    %v3162 = vsub.f32 0.0, %v3144
    %v3163 = vsub.f32 0.0, %v3145
    %v3164 = vsub.f32 0.0, %v3146
    %v3165 = vsub.f32 0.0, %v3147
    %v3166 = vsub.f32 0.0, %v3148
    %v3167 = vsub.f32 0.0, %v3149
    %v3168 = vsub.f32 0.0, %v3150
    %v3169 = vmul.f32 %v3151, 1.442695
    %v3170 = vpow.pop %v3169
    %v3171 = vmul.f32 %v3152, 1.442695
    %v3172 = vpow.pop %v3171
    %v3173 = vmul.f32 %v3153, 1.442695
    %v3174 = vpow.pop %v3173
    %v3175 = vmul.f32 %v3154, 1.442695
    %v3176 = vpow.pop %v3175
    %v3177 = vmul.f32 %v3155, 1.442695
    %v3178 = vpow.pop %v3177
    %v3179 = vmul.f32 %v3156, 1.442695
    %v3180 = vpow.pop %v3179
    %v3181 = vmul.f32 %v3157, 1.442695
    %v3182 = vpow.pop %v3181
    %v3183 = vmul.f32 %v3158, 1.442695
    %v3184 = vpow.pop %v3183
    %v3185 = vmul.f32 %v3159, 1.442695
    %v3186 = vpow.pop %v3185
    %v3187 = vmul.f32 %v3160, 1.442695
    %v3188 = vpow.pop %v3187
    %v3189 = vmul.f32 %v3161, 1.442695
    %v3190 = vpow.pop %v3189
    %v3191 = vmul.f32 %v3162, 1.442695
    %v3192 = vpow.pop %v3191
    %v3193 = vmul.f32 %v3163, 1.442695
    %v3194 = vpow.pop %v3193
    %v3195 = vmul.f32 %v3164, 1.442695
    %v3196 = vpow.pop %v3195
    %v3197 = vmul.f32 %v3165, 1.442695
    %v3198 = vpow.pop %v3197
    %v3199 = vmul.f32 %v3166, 1.442695
    %v3200 = vpow.pop %v3199
    %v3201 = vmul.f32 %v3167, 1.442695
    %v3202 = vpow.pop %v3201
    %v3203 = vmul.f32 %v3168, 1.442695
    %v3204 = vpow.pop %v3203
    %v3205 = vmul.f32 %v3115, %v3170
    %v3206 = vmul.f32 %v3116, %v3172
    %v3207 = vmul.f32 %v3117, %v3174
    %v3208 = vmul.f32 %v3118, %v3176
    %v3209 = vmul.f32 %v3119, %v3178
    %v3210 = vmul.f32 %v3120, %v3180
    %v3211 = vmul.f32 %v3121, %v3182
    %v3212 = vmul.f32 %v3122, %v3184
    %v3213 = vmul.f32 %v3123, %v3186
    %v3214 = vmul.f32 %v3124, %v3188
    %v3215 = vmul.f32 %v3125, %v3190
    %v3216 = vmul.f32 %v3126, %v3192
    %v3217 = vmul.f32 %v3127, %v3194
    %v3218 = vmul.f32 %v3128, %v3196
    %v3219 = vmul.f32 %v3129, %v3198
    %v3220 = vmul.f32 %v3130, %v3200
    %v3221 = vmul.f32 %v3131, %v3202
    %v3222 = vmul.f32 %v3132, %v3204
    %v3223 = vsub.f32 1.0, %v3205
    %v3224 = vsub.f32 1.0, %v3206
    %v3225 = vsub.f32 1.0, %v3207
    %v3226 = vsub.f32 1.0, %v3208
    %v3227 = vsub.f32 1.0, %v3209
    %v3228 = vsub.f32 1.0, %v3210
    %v3229 = vsub.f32 1.0, %v3211
    %v3230 = vsub.f32 1.0, %v3212
    %v3231 = vsub.f32 1.0, %v3213
    %v3232 = vsub.f32 1.0, %v3214
    %v3233 = vsub.f32 1.0, %v3215
    %v3234 = vsub.f32 1.0, %v3216
    %v3235 = vsub.f32 1.0, %v3217
    %v3236 = vsub.f32 1.0, %v3218
    %v3237 = vsub.f32 1.0, %v3219
    %v3238 = vsub.f32 1.0, %v3220
    %v3239 = vsub.f32 1.0, %v3221
    %v3240 = vsub.f32 1.0, %v3222
    %v3241 = vmul.f32 %v2827, %v3223
    %v3242 = vmul.f32 %v2828, %v3224
    %v3243 = vmul.f32 %v2829, %v3225
    %v3244 = vmul.f32 %v2830, %v3226
    %v3245 = vmul.f32 %v2831, %v3227
    %v3246 = vmul.f32 %v2832, %v3228
    %v3247 = vmul.f32 %v2833, %v3229
    %v3248 = vmul.f32 %v2834, %v3230
    %v3249 = vmul.f32 %v2835, %v3231
    %v3250 = vmul.f32 %v2836, %v3232
    %v3251 = vmul.f32 %v2837, %v3233
    %v3252 = vmul.f32 %v2838, %v3234
    %v3253 = vmul.f32 %v2839, %v3235
    %v3254 = vmul.f32 %v2840, %v3236
    %v3255 = vmul.f32 %v2841, %v3237
    %v3256 = vmul.f32 %v2842, %v3238
    %v3257 = vmul.f32 %v2843, %v3239
    %v3258 = vmul.f32 %v2844, %v3240
    %v3259 = vmul.f32 %v2773, 0.5
    %v3260 = vmul.f32 %v2774, 0.5
    %v3261 = vmul.f32 %v2775, 0.5
    %v3262 = vmul.f32 %v2776, 0.5
    %v3263 = vmul.f32 %v2777, 0.5
    %v3264 = vmul.f32 %v2778, 0.5
    %v3265 = vmul.f32 %v2779, 0.5
    %v3266 = vmul.f32 %v2780, 0.5
    %v3267 = vmul.f32 %v2781, 0.5
    %v3268 = vmul.f32 %v2782, 0.5
    %v3269 = vmul.f32 %v2783, 0.5
    %v3270 = vmul.f32 %v2784, 0.5
    %v3271 = vmul.f32 %v2785, 0.5
    %v3272 = vmul.f32 %v2786, 0.5
    %v3273 = vmul.f32 %v2787, 0.5
    %v3274 = vmul.f32 %v2788, 0.5
    %v3275 = vmul.f32 %v2789, 0.5
    %v3276 = vmul.f32 %v2790, 0.5
    %v3277 = vadd.f32 %v3241, 1.0
    %v3278 = vadd.f32 %v3242, 1.0
    %v3279 = vadd.f32 %v3243, 1.0
    %v3280 = vadd.f32 %v3244, 1.0
    %v3281 = vadd.f32 %v3245, 1.0
    %v3282 = vadd.f32 %v3246, 1.0
    %v3283 = vadd.f32 %v3247, 1.0
    %v3284 = vadd.f32 %v3248, 1.0
    %v3285 = vadd.f32 %v3249, 1.0
    %v3286 = vadd.f32 %v3250, 1.0
    %v3287 = vadd.f32 %v3251, 1.0
    %v3288 = vadd.f32 %v3252, 1.0
    %v3289 = vadd.f32 %v3253, 1.0
    %v3290 = vadd.f32 %v3254, 1.0
    %v3291 = vadd.f32 %v3255, 1.0
    %v3292 = vadd.f32 %v3256, 1.0
    %v3293 = vadd.f32 %v3257, 1.0
    %v3294 = vadd.f32 %v3258, 1.0
    %v3295 = vmul.f32 %v3259, %v3277
    %v3296 = vmul.f32 %v3260, %v3278
    %v3297 = vmul.f32 %v3261, %v3279
    %v3298 = vmul.f32 %v3262, %v3280
    %v3299 = vmul.f32 %v3263, %v3281
    %v3300 = vmul.f32 %v3264, %v3282
    %v3301 = vmul.f32 %v3265, %v3283
    %v3302 = vmul.f32 %v3266, %v3284
    %v3303 = vmul.f32 %v3267, %v3285
    %v3304 = vmul.f32 %v3268, %v3286
    %v3305 = vmul.f32 %v3269, %v3287
    %v3306 = vmul.f32 %v3270, %v3288
    %v3307 = vmul.f32 %v3271, %v3289
    %v3308 = vmul.f32 %v3272, %v3290
    %v3309 = vmul.f32 %v3273, %v3291
    %v3310 = vmul.f32 %v3274, %v3292
    %v3311 = vmul.f32 %v3275, %v3293
    %v3312 = vmul.f32 %v3276, %v3294
    %3313 = vst.msk [vmem:[#allocation2] sm:$0xff] %vm98, 0.0
    %vm3314 = vcmask 518144
    %3315 = vst.msk [vmem:[#allocation2 + $0x8] sm:$0x7] %vm3314, 0.0
    %3316 = vst.msk [vmem:[#allocation2 + $0x95] sm:$0xff] %vm98, 0.0
    %3317 = vst.msk [vmem:[#allocation2 + $0x9d] sm:$0x7] %vm3314, 0.0
    %v3318 = vmul.f32 %v3295, %v2371
    %v3319 = vmul.f32 %v3296, %v2376
    %v3320 = vmul.f32 %v3297, %v2381
    %v3321 = vmul.f32 %v3298, %v2386
    %v3322 = vmul.f32 %v3299, %v2391
    %v3323 = vmul.f32 %v3300, %v2396
    %v3324 = vmul.f32 %v3301, %v2401
    %v3325 = vmul.f32 %v3302, %v2406
    %v3326 = vmul.f32 %v3303, %v2411
    %v3327 = vmul.f32 %v3304, %v2416
    %v3328 = vmul.f32 %v3305, %v2421
    %v3329 = vmul.f32 %v3306, %v2426
    %v3330 = vmul.f32 %v3307, %v2431
    %v3331 = vmul.f32 %v3308, %v2436
    %v3332 = vmul.f32 %v3309, %v2441
    %v3333 = vmul.f32 %v3310, %v2446
    %v3334 = vmul.f32 %v3311, %v2451
    %v3335 = vmul.f32 %v3312, %v2456
    %3336 = vst.msk [vmem:[#allocation2 + $0xb] sm:$0xff] %vm98, %v3318
    %3337 = vst.msk [vmem:[#allocation2 + $0x13] sm:$0xff] %vm98, %v3319
    %3338 = vst.msk [vmem:[#allocation2 + $0x1b] sm:$0xff] %vm98, %v3320
    %3339 = vst.msk [vmem:[#allocation2 + $0x23] sm:$0xff] %vm98, %v3321
    %3340 = vst.msk [vmem:[#allocation2 + $0x2b] sm:$0xff] %vm98, %v3322
    %3341 = vst.msk [vmem:[#allocation2 + $0x33] sm:$0xff] %vm98, %v3323
    %3342 = vst.msk [vmem:[#allocation2 + $0x3b] sm:$0xff] %vm98, %v3324
    %3343 = vst.msk [vmem:[#allocation2 + $0x43] sm:$0xff] %vm98, %v3325
    %3344 = vst.msk [vmem:[#allocation2 + $0x4b] sm:$0xff] %vm98, %v3326
    %3345 = vst.msk [vmem:[#allocation2 + $0x53] sm:$0xff] %vm98, %v3327
    %3346 = vst.msk [vmem:[#allocation2 + $0x5b] sm:$0xff] %vm98, %v3328
    %3347 = vst.msk [vmem:[#allocation2 + $0x63] sm:$0xff] %vm98, %v3329
    %3348 = vst.msk [vmem:[#allocation2 + $0x6b] sm:$0xff] %vm98, %v3330
    %3349 = vst.msk [vmem:[#allocation2 + $0x73] sm:$0xff] %vm98, %v3331
    %3350 = vst.msk [vmem:[#allocation2 + $0x7b] sm:$0xff] %vm98, %v3332
    %3351 = vst.msk [vmem:[#allocation2 + $0x83] sm:$0xff] %vm98, %v3333
    %3352 = vst.msk [vmem:[#allocation2 + $0x8b] sm:$0xff] %vm98, %v3334
    %3353 = vst.msk [vmem:[#allocation2 + $0x93] sm:$0x3] %vm2509, %v3335
    %v3354 = vld [vmem:[#allocation2] sm:$0xff]
    %v3355 = vld [vmem:[#allocation2 + $0x8] sm:$0xff]
    %v3356 = vld [vmem:[#allocation2 + $0x10] sm:$0xff]
    %v3357 = vld [vmem:[#allocation2 + $0x18] sm:$0xff]
    %v3358 = vld [vmem:[#allocation2 + $0x20] sm:$0xff]
    %v3359 = vld [vmem:[#allocation2 + $0x28] sm:$0xff]
    %v3360 = vld [vmem:[#allocation2 + $0x30] sm:$0xff]
    %v3361 = vld [vmem:[#allocation2 + $0x38] sm:$0xff]
    %v3362 = vld [vmem:[#allocation2 + $0x40] sm:$0xff]
    %v3363 = vld [vmem:[#allocation2 + $0x48] sm:$0xff]
    %v3364 = vld [vmem:[#allocation2 + $0x50] sm:$0xff]
    %v3365 = vld [vmem:[#allocation2 + $0x58] sm:$0xff]
    %v3366 = vld [vmem:[#allocation2 + $0x60] sm:$0xff]
    %v3367 = vld [vmem:[#allocation2 + $0x68] sm:$0xff]
    %v3368 = vld [vmem:[#allocation2 + $0x70] sm:$0xff]
    %v3369 = vld [vmem:[#allocation2 + $0x78] sm:$0xff]
    %v3370 = vld [vmem:[#allocation2 + $0x80] sm:$0xff]
    %v3371 = vld [vmem:[#allocation2 + $0x88] sm:$0x3]
    %v3372 = vld [vmem:[#allocation5] sm:$0xff]
    %v3373 = vld [vmem:[#allocation5 + $0x8] sm:$0xff]
    %v3374 = vld [vmem:[#allocation5 + $0x10] sm:$0xff]
    %v3375 = vld [vmem:[#allocation5 + $0x18] sm:$0xff]
    %v3376 = vld [vmem:[#allocation5 + $0x20] sm:$0xff]
    %v3377 = vld [vmem:[#allocation5 + $0x28] sm:$0xff]
    %v3378 = vld [vmem:[#allocation5 + $0x30] sm:$0xff]
    %v3379 = vld [vmem:[#allocation5 + $0x38] sm:$0xff]
    %v3380 = vld [vmem:[#allocation2 + $0x1] sm:$0xff]
    %v3381 = vld [vmem:[#allocation2 + $0x9] sm:$0xff]
    %v3382 = vld [vmem:[#allocation2 + $0x11] sm:$0xff]
    %v3383 = vld [vmem:[#allocation2 + $0x19] sm:$0xff]
    %v3384 = vld [vmem:[#allocation2 + $0x21] sm:$0xff]
    %v3385 = vld [vmem:[#allocation2 + $0x29] sm:$0xff]
    %v3386 = vld [vmem:[#allocation2 + $0x31] sm:$0xff]
    %v3387 = vld [vmem:[#allocation2 + $0x39] sm:$0xff]
    %v3388 = vld [vmem:[#allocation2 + $0x41] sm:$0xff]
    %v3389 = vld [vmem:[#allocation2 + $0x49] sm:$0xff]
    %v3390 = vld [vmem:[#allocation2 + $0x51] sm:$0xff]
    %v3391 = vld [vmem:[#allocation2 + $0x59] sm:$0xff]
    %v3392 = vld [vmem:[#allocation2 + $0x61] sm:$0xff]
    %v3393 = vld [vmem:[#allocation2 + $0x69] sm:$0xff]
    %v3394 = vld [vmem:[#allocation2 + $0x71] sm:$0xff]
    %v3395 = vld [vmem:[#allocation2 + $0x79] sm:$0xff]
    %v3396 = vld [vmem:[#allocation2 + $0x81] sm:$0xff]
    %v3397 = vld [vmem:[#allocation2 + $0x89] sm:$0x3]
    %s3398 = scalar_lea.vmem [#allocation5], 64
    %v3399 = vld [vmem:[%s3398] sm:$0xff]
    %v3400 = vld [vmem:[%s3398 + $0x8] sm:$0xff]
    %v3401 = vld [vmem:[%s3398 + $0x10] sm:$0xff]
    %v3402 = vld [vmem:[%s3398 + $0x18] sm:$0xff]
    %v3403 = vld [vmem:[%s3398 + $0x20] sm:$0xff]
    %v3404 = vld [vmem:[%s3398 + $0x28] sm:$0xff]
    %v3405 = vld [vmem:[%s3398 + $0x30] sm:$0xff]
    %v3406 = vld [vmem:[%s3398 + $0x38] sm:$0xff]
    %v3408 = vsel %vm98, %v3380, 0
    %v3411 = vsel %vm98, %v3381, 0
    %v3414 = vsel %vm98, %v3382, 0
    %v3417 = vsel %vm98, %v3383, 0
    %v3420 = vsel %vm98, %v3384, 0
    %v3423 = vsel %vm98, %v3385, 0
    %v3426 = vsel %vm98, %v3386, 0
    %v3429 = vsel %vm98, %v3387, 0
    %v3432 = vsel %vm98, %v3388, 0
    %v3435 = vsel %vm98, %v3389, 0
    %v3438 = vsel %vm98, %v3390, 0
    %v3441 = vsel %vm98, %v3391, 0
    %v3444 = vsel %vm98, %v3392, 0
    %v3447 = vsel %vm98, %v3393, 0
    %v3450 = vsel %vm98, %v3394, 0
    %v3453 = vsel %vm98, %v3395, 0
    %v3456 = vsel %vm98, %v3396, 0
    %v3459 = vsel %vm98, %v3397, 0
    %3461 = vmatprep.subr.mxu0 0.0
    %3462 = vmatpush1.msra.mxu0 0.0
    %3463 = vmatprep.subr.mxu0 0.0
    %3464 = vmatpush1.msra.mxu0 0.0
    %3465 = vmatprep.subr.mxu0 0.0
    %3466 = vmatpush1.msra.mxu0 0.0
    %3467 = vmatprep.subr.mxu0 0.0
    %3468 = vmatpush1.msra.mxu0 0.0
    %3469 = vmatprep.subr.mxu0 0.0
    %3470 = vmatpush1.msra.mxu0 0.0
    %3471 = vmatprep.subr.mxu0 0.0
    %3472 = vmatpush1.msra.mxu0 0.0
    %3473 = vmatprep.subr.mxu0 0.0
    %3474 = vmatpush1.msra.mxu0 0.0
    %3475 = vmatprep.subr.mxu0 0.0
    %3476 = vmatpush1.msra.mxu0 0.0
    %3477 = vmatprep.subr.mxu0 0.0
    %3478 = vmatpush1.msra.mxu0 %v3406
    %3479 = vmatprep.subr.mxu0 0.0
    %3480 = vmatpush1.msra.mxu0 %v3405
    %3481 = vmatprep.subr.mxu0 0.0
    %3482 = vmatpush1.msra.mxu0 %v3404
    %3483 = vmatprep.subr.mxu0 0.0
    %3484 = vmatpush1.msra.mxu0 %v3403
    %3485 = vmatprep.subr.mxu0 0.0
    %3486 = vmatpush1.msra.mxu0 %v3402
    %3487 = vmatprep.subr.mxu0 0.0
    %3488 = vmatpush1.msra.mxu0 %v3401
    %3489 = vmatprep.subr.mxu0 0.0
    %3490 = vmatpush1.msra.mxu0 %v3400
    %3491 = vmatprep.subr.mxu0 0.0
    %3492 = vmatpush1.msra.mxu0 %v3399
    %3493 = vmatprep.subr.mxu0 0.0
    %3494 = vmatpush2.msra.mxu0 0.0
    %3495 = vmatprep.subr.mxu0 0.0
    %3496 = vmatpush2.msra.mxu0 0.0
    %3497 = vmatprep.subr.mxu0 0.0
    %3498 = vmatpush2.msra.mxu0 0.0
    %3499 = vmatprep.subr.mxu0 0.0
    %3500 = vmatpush2.msra.mxu0 0.0
    %3501 = vmatprep.subr.mxu0 0.0
    %3502 = vmatpush2.msra.mxu0 0.0
    %3503 = vmatprep.subr.mxu0 0.0
    %3504 = vmatpush2.msra.mxu0 0.0
    %3505 = vmatprep.subr.mxu0 0.0
    %3506 = vmatpush2.msra.mxu0 0.0
    %3507 = vmatprep.subr.mxu0 0.0
    %3508 = vmatpush2.msra.mxu0 0.0
    %3509 = vmatprep.subr.mxu0 0.0
    %3510 = vmatpush2.msra.mxu0 0.0
    %3511 = vmatprep.subr.mxu0 0.0
    %3512 = vmatpush2.msra.mxu0 0.0
    %3513 = vmatprep.subr.mxu0 0.0
    %3514 = vmatpush2.msra.mxu0 0.0
    %3515 = vmatprep.subr.mxu0 0.0
    %3516 = vmatpush2.msra.mxu0 0.0
    %3517 = vmatprep.subr.mxu0 0.0
    %3518 = vmatpush2.msra.mxu0 0.0
    %3519 = vmatprep.subr.mxu0 0.0
    %3520 = vmatpush2.msra.mxu0 0.0
    %3521 = vmatprep.subr.mxu0 0.0
    %3522 = vmatpush2.msra.mxu0 0.0
    %3523 = vmatprep.subr.mxu0 0.0
    %3524 = vmatpush2.msra.mxu0 0.0
    %3525 = vmatprep.mubr.f32.mxu0 0.0
    %3526 = vmatmul.mubr.f32.gmra.mxu0 %v3408
    %v3527 = vpop.f32.mrf.mxu0
    %v3528 = vadd.f32 0.0, %v3527
    %v3529 = vpop.f32.mrf.mxu0
    %3530 = vmatprep.mubr.f32.mxu0 0.0
    %3531 = vmatmul.mubr.f32.gmra.mxu0 %v3411
    %v3532 = vpop.f32.mrf.mxu0
    %v3533 = vadd.f32 0.0, %v3532
    %v3534 = vpop.f32.mrf.mxu0
    %3535 = vmatprep.mubr.f32.mxu0 0.0
    %3536 = vmatmul.mubr.f32.gmra.mxu0 %v3414
    %v3537 = vpop.f32.mrf.mxu0
    %v3538 = vadd.f32 0.0, %v3537
    %v3539 = vpop.f32.mrf.mxu0
    %3540 = vmatprep.mubr.f32.mxu0 0.0
    %3541 = vmatmul.mubr.f32.gmra.mxu0 %v3417
    %v3542 = vpop.f32.mrf.mxu0
    %v3543 = vadd.f32 0.0, %v3542
    %v3544 = vpop.f32.mrf.mxu0
    %3545 = vmatprep.mubr.f32.mxu0 0.0
    %3546 = vmatmul.mubr.f32.gmra.mxu0 %v3420
    %v3547 = vpop.f32.mrf.mxu0
    %v3548 = vadd.f32 0.0, %v3547
    %v3549 = vpop.f32.mrf.mxu0
    %3550 = vmatprep.mubr.f32.mxu0 0.0
    %3551 = vmatmul.mubr.f32.gmra.mxu0 %v3423
    %v3552 = vpop.f32.mrf.mxu0
    %v3553 = vadd.f32 0.0, %v3552
    %v3554 = vpop.f32.mrf.mxu0
    %3555 = vmatprep.mubr.f32.mxu0 0.0
    %3556 = vmatmul.mubr.f32.gmra.mxu0 %v3426
    %v3557 = vpop.f32.mrf.mxu0
    %v3558 = vadd.f32 0.0, %v3557
    %v3559 = vpop.f32.mrf.mxu0
    %3560 = vmatprep.mubr.f32.mxu0 0.0
    %3561 = vmatmul.mubr.f32.gmra.mxu0 %v3429
    %v3562 = vpop.f32.mrf.mxu0
    %v3563 = vadd.f32 0.0, %v3562
    %v3564 = vpop.f32.mrf.mxu0
    %3565 = vmatprep.mubr.f32.mxu0 0.0
    %3566 = vmatmul.mubr.f32.gmra.mxu0 %v3432
    %v3567 = vpop.f32.mrf.mxu0
    %v3568 = vadd.f32 0.0, %v3567
    %v3569 = vpop.f32.mrf.mxu0
    %3570 = vmatprep.mubr.f32.mxu0 0.0
    %3571 = vmatmul.mubr.f32.gmra.mxu0 %v3435
    %v3572 = vpop.f32.mrf.mxu0
    %v3573 = vadd.f32 0.0, %v3572
    %v3574 = vpop.f32.mrf.mxu0
    %3575 = vmatprep.mubr.f32.mxu0 0.0
    %3576 = vmatmul.mubr.f32.gmra.mxu0 %v3438
    %v3577 = vpop.f32.mrf.mxu0
    %v3578 = vadd.f32 0.0, %v3577
    %v3579 = vpop.f32.mrf.mxu0
    %3580 = vmatprep.mubr.f32.mxu0 0.0
    %3581 = vmatmul.mubr.f32.gmra.mxu0 %v3441
    %v3582 = vpop.f32.mrf.mxu0
    %v3583 = vadd.f32 0.0, %v3582
    %v3584 = vpop.f32.mrf.mxu0
    %3585 = vmatprep.mubr.f32.mxu0 0.0
    %3586 = vmatmul.mubr.f32.gmra.mxu0 %v3444
    %v3587 = vpop.f32.mrf.mxu0
    %v3588 = vadd.f32 0.0, %v3587
    %v3589 = vpop.f32.mrf.mxu0
    %3590 = vmatprep.mubr.f32.mxu0 0.0
    %3591 = vmatmul.mubr.f32.gmra.mxu0 %v3447
    %v3592 = vpop.f32.mrf.mxu0
    %v3593 = vadd.f32 0.0, %v3592
    %v3594 = vpop.f32.mrf.mxu0
    %3595 = vmatprep.mubr.f32.mxu0 0.0
    %3596 = vmatmul.mubr.f32.gmra.mxu0 %v3450
    %v3597 = vpop.f32.mrf.mxu0
    %v3598 = vadd.f32 0.0, %v3597
    %v3599 = vpop.f32.mrf.mxu0
    %3600 = vmatprep.mubr.f32.mxu0 0.0
    %3601 = vmatmul.mubr.f32.gmra.mxu0 %v3453
    %v3602 = vpop.f32.mrf.mxu0
    %v3603 = vadd.f32 0.0, %v3602
    %v3604 = vpop.f32.mrf.mxu0
    %3605 = vmatprep.mubr.f32.mxu0 0.0
    %3606 = vmatmul.mubr.f32.gmra.mxu0 %v3456
    %v3607 = vpop.f32.mrf.mxu0
    %v3608 = vadd.f32 0.0, %v3607
    %v3609 = vpop.f32.mrf.mxu0
    %3610 = vmatprep.mubr.f32.mxu0 0.0
    %3611 = vmatmul.mubr.f32.gmra.mxu0 %v3459
    %v3612 = vpop.f32.mrf.mxu0
    %v3613 = vadd.f32 0.0, %v3612
    %v3614 = vpop.f32.mrf.mxu0
    %3615 = vdwg.mxu0
    %v3617 = vsel %vm98, %v3354, 0
    %v3620 = vsel %vm98, %v3355, 0
    %v3623 = vsel %vm98, %v3356, 0
    %v3626 = vsel %vm98, %v3357, 0
    %v3629 = vsel %vm98, %v3358, 0
    %v3632 = vsel %vm98, %v3359, 0
    %v3635 = vsel %vm98, %v3360, 0
    %v3638 = vsel %vm98, %v3361, 0
    %v3641 = vsel %vm98, %v3362, 0
    %v3644 = vsel %vm98, %v3363, 0
    %v3647 = vsel %vm98, %v3364, 0
    %v3650 = vsel %vm98, %v3365, 0
    %v3653 = vsel %vm98, %v3366, 0
    %v3656 = vsel %vm98, %v3367, 0
    %v3659 = vsel %vm98, %v3368, 0
    %v3662 = vsel %vm98, %v3369, 0
    %v3665 = vsel %vm98, %v3370, 0
    %v3668 = vsel %vm98, %v3371, 0
    %3670 = vmatprep.subr.mxu0 0.0
    %3671 = vmatpush1.msra.mxu0 0.0
    %3672 = vmatprep.subr.mxu0 0.0
    %3673 = vmatpush1.msra.mxu0 0.0
    %3674 = vmatprep.subr.mxu0 0.0
    %3675 = vmatpush1.msra.mxu0 0.0
    %3676 = vmatprep.subr.mxu0 0.0
    %3677 = vmatpush1.msra.mxu0 0.0
    %3678 = vmatprep.subr.mxu0 0.0
    %3679 = vmatpush1.msra.mxu0 0.0
    %3680 = vmatprep.subr.mxu0 0.0
    %3681 = vmatpush1.msra.mxu0 0.0
    %3682 = vmatprep.subr.mxu0 0.0
    %3683 = vmatpush1.msra.mxu0 0.0
    %3684 = vmatprep.subr.mxu0 0.0
    %3685 = vmatpush1.msra.mxu0 0.0
    %3686 = vmatprep.subr.mxu0 0.0
    %3687 = vmatpush1.msra.mxu0 %v3379
    %3688 = vmatprep.subr.mxu0 0.0
    %3689 = vmatpush1.msra.mxu0 %v3378
    %3690 = vmatprep.subr.mxu0 0.0
    %3691 = vmatpush1.msra.mxu0 %v3377
    %3692 = vmatprep.subr.mxu0 0.0
    %3693 = vmatpush1.msra.mxu0 %v3376
    %3694 = vmatprep.subr.mxu0 0.0
    %3695 = vmatpush1.msra.mxu0 %v3375
    %3696 = vmatprep.subr.mxu0 0.0
    %3697 = vmatpush1.msra.mxu0 %v3374
    %3698 = vmatprep.subr.mxu0 0.0
    %3699 = vmatpush1.msra.mxu0 %v3373
    %3700 = vmatprep.subr.mxu0 0.0
    %3701 = vmatpush1.msra.mxu0 %v3372
    %3702 = vmatprep.subr.mxu0 0.0
    %3703 = vmatpush2.msra.mxu0 0.0
    %3704 = vmatprep.subr.mxu0 0.0
    %3705 = vmatpush2.msra.mxu0 0.0
    %3706 = vmatprep.subr.mxu0 0.0
    %3707 = vmatpush2.msra.mxu0 0.0
    %3708 = vmatprep.subr.mxu0 0.0
    %3709 = vmatpush2.msra.mxu0 0.0
    %3710 = vmatprep.subr.mxu0 0.0
    %3711 = vmatpush2.msra.mxu0 0.0
    %3712 = vmatprep.subr.mxu0 0.0
    %3713 = vmatpush2.msra.mxu0 0.0
    %3714 = vmatprep.subr.mxu0 0.0
    %3715 = vmatpush2.msra.mxu0 0.0
    %3716 = vmatprep.subr.mxu0 0.0
    %3717 = vmatpush2.msra.mxu0 0.0
    %3718 = vmatprep.subr.mxu0 0.0
    %3719 = vmatpush2.msra.mxu0 0.0
    %3720 = vmatprep.subr.mxu0 0.0
    %3721 = vmatpush2.msra.mxu0 0.0
    %3722 = vmatprep.subr.mxu0 0.0
    %3723 = vmatpush2.msra.mxu0 0.0
    %3724 = vmatprep.subr.mxu0 0.0
    %3725 = vmatpush2.msra.mxu0 0.0
    %3726 = vmatprep.subr.mxu0 0.0
    %3727 = vmatpush2.msra.mxu0 0.0
    %3728 = vmatprep.subr.mxu0 0.0
    %3729 = vmatpush2.msra.mxu0 0.0
    %3730 = vmatprep.subr.mxu0 0.0
    %3731 = vmatpush2.msra.mxu0 0.0
    %3732 = vmatprep.subr.mxu0 0.0
    %3733 = vmatpush2.msra.mxu0 0.0
    %3734 = vmatprep.mubr.f32.mxu0 0.0
    %3735 = vmatmul.mubr.f32.gmra.mxu0 %v3617
    %v3736 = vpop.f32.mrf.mxu0
    %v3737 = vadd.f32 %v3528, %v3736
    %v3738 = vpop.f32.mrf.mxu0
    %3739 = vmatprep.mubr.f32.mxu0 0.0
    %3740 = vmatmul.mubr.f32.gmra.mxu0 %v3620
    %v3741 = vpop.f32.mrf.mxu0
    %v3742 = vadd.f32 %v3533, %v3741
    %v3743 = vpop.f32.mrf.mxu0
    %3744 = vmatprep.mubr.f32.mxu0 0.0
    %3745 = vmatmul.mubr.f32.gmra.mxu0 %v3623
    %v3746 = vpop.f32.mrf.mxu0
    %v3747 = vadd.f32 %v3538, %v3746
    %v3748 = vpop.f32.mrf.mxu0
    %3749 = vmatprep.mubr.f32.mxu0 0.0
    %3750 = vmatmul.mubr.f32.gmra.mxu0 %v3626
    %v3751 = vpop.f32.mrf.mxu0
    %v3752 = vadd.f32 %v3543, %v3751
    %v3753 = vpop.f32.mrf.mxu0
    %3754 = vmatprep.mubr.f32.mxu0 0.0
    %3755 = vmatmul.mubr.f32.gmra.mxu0 %v3629
    %v3756 = vpop.f32.mrf.mxu0
    %v3757 = vadd.f32 %v3548, %v3756
    %v3758 = vpop.f32.mrf.mxu0
    %3759 = vmatprep.mubr.f32.mxu0 0.0
    %3760 = vmatmul.mubr.f32.gmra.mxu0 %v3632
    %v3761 = vpop.f32.mrf.mxu0
    %v3762 = vadd.f32 %v3553, %v3761
    %v3763 = vpop.f32.mrf.mxu0
    %3764 = vmatprep.mubr.f32.mxu0 0.0
    %3765 = vmatmul.mubr.f32.gmra.mxu0 %v3635
    %v3766 = vpop.f32.mrf.mxu0
    %v3767 = vadd.f32 %v3558, %v3766
    %v3768 = vpop.f32.mrf.mxu0
    %3769 = vmatprep.mubr.f32.mxu0 0.0
    %3770 = vmatmul.mubr.f32.gmra.mxu0 %v3638
    %v3771 = vpop.f32.mrf.mxu0
    %v3772 = vadd.f32 %v3563, %v3771
    %v3773 = vpop.f32.mrf.mxu0
    %3774 = vmatprep.mubr.f32.mxu0 0.0
    %3775 = vmatmul.mubr.f32.gmra.mxu0 %v3641
    %v3776 = vpop.f32.mrf.mxu0
    %v3777 = vadd.f32 %v3568, %v3776
    %v3778 = vpop.f32.mrf.mxu0
    %3779 = vmatprep.mubr.f32.mxu0 0.0
    %3780 = vmatmul.mubr.f32.gmra.mxu0 %v3644
    %v3781 = vpop.f32.mrf.mxu0
    %v3782 = vadd.f32 %v3573, %v3781
    %v3783 = vpop.f32.mrf.mxu0
    %3784 = vmatprep.mubr.f32.mxu0 0.0
    %3785 = vmatmul.mubr.f32.gmra.mxu0 %v3647
    %v3786 = vpop.f32.mrf.mxu0
    %v3787 = vadd.f32 %v3578, %v3786
    %v3788 = vpop.f32.mrf.mxu0
    %3789 = vmatprep.mubr.f32.mxu0 0.0
    %3790 = vmatmul.mubr.f32.gmra.mxu0 %v3650
    %v3791 = vpop.f32.mrf.mxu0
    %v3792 = vadd.f32 %v3583, %v3791
    %v3793 = vpop.f32.mrf.mxu0
    %3794 = vmatprep.mubr.f32.mxu0 0.0
    %3795 = vmatmul.mubr.f32.gmra.mxu0 %v3653
    %v3796 = vpop.f32.mrf.mxu0
    %v3797 = vadd.f32 %v3588, %v3796
    %v3798 = vpop.f32.mrf.mxu0
    %3799 = vmatprep.mubr.f32.mxu0 0.0
    %3800 = vmatmul.mubr.f32.gmra.mxu0 %v3656
    %v3801 = vpop.f32.mrf.mxu0
    %v3802 = vadd.f32 %v3593, %v3801
    %v3803 = vpop.f32.mrf.mxu0
    %3804 = vmatprep.mubr.f32.mxu0 0.0
    %3805 = vmatmul.mubr.f32.gmra.mxu0 %v3659
    %v3806 = vpop.f32.mrf.mxu0
    %v3807 = vadd.f32 %v3598, %v3806
    %v3808 = vpop.f32.mrf.mxu0
    %3809 = vmatprep.mubr.f32.mxu0 0.0
    %3810 = vmatmul.mubr.f32.gmra.mxu0 %v3662
    %v3811 = vpop.f32.mrf.mxu0
    %v3812 = vadd.f32 %v3603, %v3811
    %v3813 = vpop.f32.mrf.mxu0
    %3814 = vmatprep.mubr.f32.mxu0 0.0
    %3815 = vmatmul.mubr.f32.gmra.mxu0 %v3665
    %v3816 = vpop.f32.mrf.mxu0
    %v3817 = vadd.f32 %v3608, %v3816
    %v3818 = vpop.f32.mrf.mxu0
    %3819 = vmatprep.mubr.f32.mxu0 0.0
    %3820 = vmatmul.mubr.f32.gmra.mxu0 %v3668
    %v3821 = vpop.f32.mrf.mxu0
    %v3822 = vadd.f32 %v3613, %v3821
    %v3823 = vpop.f32.mrf.mxu0
    %3824 = vdwg.mxu0
    %v3825 = vld [vmem:[#allocation2 + $0x2] sm:$0xff]
    %v3826 = vld [vmem:[#allocation2 + $0xa] sm:$0xff]
    %v3827 = vld [vmem:[#allocation2 + $0x12] sm:$0xff]
    %v3828 = vld [vmem:[#allocation2 + $0x1a] sm:$0xff]
    %v3829 = vld [vmem:[#allocation2 + $0x22] sm:$0xff]
    %v3830 = vld [vmem:[#allocation2 + $0x2a] sm:$0xff]
    %v3831 = vld [vmem:[#allocation2 + $0x32] sm:$0xff]
    %v3832 = vld [vmem:[#allocation2 + $0x3a] sm:$0xff]
    %v3833 = vld [vmem:[#allocation2 + $0x42] sm:$0xff]
    %v3834 = vld [vmem:[#allocation2 + $0x4a] sm:$0xff]
    %v3835 = vld [vmem:[#allocation2 + $0x52] sm:$0xff]
    %v3836 = vld [vmem:[#allocation2 + $0x5a] sm:$0xff]
    %v3837 = vld [vmem:[#allocation2 + $0x62] sm:$0xff]
    %v3838 = vld [vmem:[#allocation2 + $0x6a] sm:$0xff]
    %v3839 = vld [vmem:[#allocation2 + $0x72] sm:$0xff]
    %v3840 = vld [vmem:[#allocation2 + $0x7a] sm:$0xff]
    %v3841 = vld [vmem:[#allocation2 + $0x82] sm:$0xff]
    %v3842 = vld [vmem:[#allocation2 + $0x8a] sm:$0x3]
    %s3843 = scalar_lea.vmem [#allocation5], 128
    %v3844 = vld [vmem:[%s3843] sm:$0xff]
    %v3845 = vld [vmem:[%s3843 + $0x8] sm:$0xff]
    %v3846 = vld [vmem:[%s3843 + $0x10] sm:$0xff]
    %v3847 = vld [vmem:[%s3843 + $0x18] sm:$0xff]
    %v3848 = vld [vmem:[%s3843 + $0x20] sm:$0xff]
    %v3849 = vld [vmem:[%s3843 + $0x28] sm:$0xff]
    %v3850 = vld [vmem:[%s3843 + $0x30] sm:$0xff]
    %v3851 = vld [vmem:[%s3843 + $0x38] sm:$0xff]
    %v3853 = vsel %vm98, %v3825, 0
    %v3856 = vsel %vm98, %v3826, 0
    %v3859 = vsel %vm98, %v3827, 0
    %v3862 = vsel %vm98, %v3828, 0
    %v3865 = vsel %vm98, %v3829, 0
    %v3868 = vsel %vm98, %v3830, 0
    %v3871 = vsel %vm98, %v3831, 0
    %v3874 = vsel %vm98, %v3832, 0
    %v3877 = vsel %vm98, %v3833, 0
    %v3880 = vsel %vm98, %v3834, 0
    %v3883 = vsel %vm98, %v3835, 0
    %v3886 = vsel %vm98, %v3836, 0
    %v3889 = vsel %vm98, %v3837, 0
    %v3892 = vsel %vm98, %v3838, 0
    %v3895 = vsel %vm98, %v3839, 0
    %v3898 = vsel %vm98, %v3840, 0
    %v3901 = vsel %vm98, %v3841, 0
    %v3904 = vsel %vm98, %v3842, 0
    %3906 = vmatprep.subr.mxu0 0.0
    %3907 = vmatpush1.msra.mxu0 0.0
    %3908 = vmatprep.subr.mxu0 0.0
    %3909 = vmatpush1.msra.mxu0 0.0
    %3910 = vmatprep.subr.mxu0 0.0
    %3911 = vmatpush1.msra.mxu0 0.0
    %3912 = vmatprep.subr.mxu0 0.0
    %3913 = vmatpush1.msra.mxu0 0.0
    %3914 = vmatprep.subr.mxu0 0.0
    %3915 = vmatpush1.msra.mxu0 0.0
    %3916 = vmatprep.subr.mxu0 0.0
    %3917 = vmatpush1.msra.mxu0 0.0
    %3918 = vmatprep.subr.mxu0 0.0
    %3919 = vmatpush1.msra.mxu0 0.0
    %3920 = vmatprep.subr.mxu0 0.0
    %3921 = vmatpush1.msra.mxu0 0.0
    %3922 = vmatprep.subr.mxu0 0.0
    %3923 = vmatpush1.msra.mxu0 %v3851
    %3924 = vmatprep.subr.mxu0 0.0
    %3925 = vmatpush1.msra.mxu0 %v3850
    %3926 = vmatprep.subr.mxu0 0.0
    %3927 = vmatpush1.msra.mxu0 %v3849
    %3928 = vmatprep.subr.mxu0 0.0
    %3929 = vmatpush1.msra.mxu0 %v3848
    %3930 = vmatprep.subr.mxu0 0.0
    %3931 = vmatpush1.msra.mxu0 %v3847
    %3932 = vmatprep.subr.mxu0 0.0
    %3933 = vmatpush1.msra.mxu0 %v3846
    %3934 = vmatprep.subr.mxu0 0.0
    %3935 = vmatpush1.msra.mxu0 %v3845
    %3936 = vmatprep.subr.mxu0 0.0
    %3937 = vmatpush1.msra.mxu0 %v3844
    %3938 = vmatprep.subr.mxu0 0.0
    %3939 = vmatpush2.msra.mxu0 0.0
    %3940 = vmatprep.subr.mxu0 0.0
    %3941 = vmatpush2.msra.mxu0 0.0
    %3942 = vmatprep.subr.mxu0 0.0
    %3943 = vmatpush2.msra.mxu0 0.0
    %3944 = vmatprep.subr.mxu0 0.0
    %3945 = vmatpush2.msra.mxu0 0.0
    %3946 = vmatprep.subr.mxu0 0.0
    %3947 = vmatpush2.msra.mxu0 0.0
    %3948 = vmatprep.subr.mxu0 0.0
    %3949 = vmatpush2.msra.mxu0 0.0
    %3950 = vmatprep.subr.mxu0 0.0
    %3951 = vmatpush2.msra.mxu0 0.0
    %3952 = vmatprep.subr.mxu0 0.0
    %3953 = vmatpush2.msra.mxu0 0.0
    %3954 = vmatprep.subr.mxu0 0.0
    %3955 = vmatpush2.msra.mxu0 0.0
    %3956 = vmatprep.subr.mxu0 0.0
    %3957 = vmatpush2.msra.mxu0 0.0
    %3958 = vmatprep.subr.mxu0 0.0
    %3959 = vmatpush2.msra.mxu0 0.0
    %3960 = vmatprep.subr.mxu0 0.0
    %3961 = vmatpush2.msra.mxu0 0.0
    %3962 = vmatprep.subr.mxu0 0.0
    %3963 = vmatpush2.msra.mxu0 0.0
    %3964 = vmatprep.subr.mxu0 0.0
    %3965 = vmatpush2.msra.mxu0 0.0
    %3966 = vmatprep.subr.mxu0 0.0
    %3967 = vmatpush2.msra.mxu0 0.0
    %3968 = vmatprep.subr.mxu0 0.0
    %3969 = vmatpush2.msra.mxu0 0.0
    %3970 = vmatprep.mubr.f32.mxu0 0.0
    %3971 = vmatmul.mubr.f32.gmra.mxu0 %v3853
    %v3972 = vpop.f32.mrf.mxu0
    %v3973 = vadd.f32 0.0, %v3972
    %v3974 = vpop.f32.mrf.mxu0
    %3975 = vmatprep.mubr.f32.mxu0 0.0
    %3976 = vmatmul.mubr.f32.gmra.mxu0 %v3856
    %v3977 = vpop.f32.mrf.mxu0
    %v3978 = vadd.f32 0.0, %v3977
    %v3979 = vpop.f32.mrf.mxu0
    %3980 = vmatprep.mubr.f32.mxu0 0.0
    %3981 = vmatmul.mubr.f32.gmra.mxu0 %v3859
    %v3982 = vpop.f32.mrf.mxu0
    %v3983 = vadd.f32 0.0, %v3982
    %v3984 = vpop.f32.mrf.mxu0
    %3985 = vmatprep.mubr.f32.mxu0 0.0
    %3986 = vmatmul.mubr.f32.gmra.mxu0 %v3862
    %v3987 = vpop.f32.mrf.mxu0
    %v3988 = vadd.f32 0.0, %v3987
    %v3989 = vpop.f32.mrf.mxu0
    %3990 = vmatprep.mubr.f32.mxu0 0.0
    %3991 = vmatmul.mubr.f32.gmra.mxu0 %v3865
    %v3992 = vpop.f32.mrf.mxu0
    %v3993 = vadd.f32 0.0, %v3992
    %v3994 = vpop.f32.mrf.mxu0
    %3995 = vmatprep.mubr.f32.mxu0 0.0
    %3996 = vmatmul.mubr.f32.gmra.mxu0 %v3868
    %v3997 = vpop.f32.mrf.mxu0
    %v3998 = vadd.f32 0.0, %v3997
    %v3999 = vpop.f32.mrf.mxu0
    %4000 = vmatprep.mubr.f32.mxu0 0.0
    %4001 = vmatmul.mubr.f32.gmra.mxu0 %v3871
    %v4002 = vpop.f32.mrf.mxu0
    %v4003 = vadd.f32 0.0, %v4002
    %v4004 = vpop.f32.mrf.mxu0
    %4005 = vmatprep.mubr.f32.mxu0 0.0
    %4006 = vmatmul.mubr.f32.gmra.mxu0 %v3874
    %v4007 = vpop.f32.mrf.mxu0
    %v4008 = vadd.f32 0.0, %v4007
    %v4009 = vpop.f32.mrf.mxu0
    %4010 = vmatprep.mubr.f32.mxu0 0.0
    %4011 = vmatmul.mubr.f32.gmra.mxu0 %v3877
    %v4012 = vpop.f32.mrf.mxu0
    %v4013 = vadd.f32 0.0, %v4012
    %v4014 = vpop.f32.mrf.mxu0
    %4015 = vmatprep.mubr.f32.mxu0 0.0
    %4016 = vmatmul.mubr.f32.gmra.mxu0 %v3880
    %v4017 = vpop.f32.mrf.mxu0
    %v4018 = vadd.f32 0.0, %v4017
    %v4019 = vpop.f32.mrf.mxu0
    %4020 = vmatprep.mubr.f32.mxu0 0.0
    %4021 = vmatmul.mubr.f32.gmra.mxu0 %v3883
    %v4022 = vpop.f32.mrf.mxu0
    %v4023 = vadd.f32 0.0, %v4022
    %v4024 = vpop.f32.mrf.mxu0
    %4025 = vmatprep.mubr.f32.mxu0 0.0
    %4026 = vmatmul.mubr.f32.gmra.mxu0 %v3886
    %v4027 = vpop.f32.mrf.mxu0
    %v4028 = vadd.f32 0.0, %v4027
    %v4029 = vpop.f32.mrf.mxu0
    %4030 = vmatprep.mubr.f32.mxu0 0.0
    %4031 = vmatmul.mubr.f32.gmra.mxu0 %v3889
    %v4032 = vpop.f32.mrf.mxu0
    %v4033 = vadd.f32 0.0, %v4032
    %v4034 = vpop.f32.mrf.mxu0
    %4035 = vmatprep.mubr.f32.mxu0 0.0
    %4036 = vmatmul.mubr.f32.gmra.mxu0 %v3892
    %v4037 = vpop.f32.mrf.mxu0
    %v4038 = vadd.f32 0.0, %v4037
    %v4039 = vpop.f32.mrf.mxu0
    %4040 = vmatprep.mubr.f32.mxu0 0.0
    %4041 = vmatmul.mubr.f32.gmra.mxu0 %v3895
    %v4042 = vpop.f32.mrf.mxu0
    %v4043 = vadd.f32 0.0, %v4042
    %v4044 = vpop.f32.mrf.mxu0
    %4045 = vmatprep.mubr.f32.mxu0 0.0
    %4046 = vmatmul.mubr.f32.gmra.mxu0 %v3898
    %v4047 = vpop.f32.mrf.mxu0
    %v4048 = vadd.f32 0.0, %v4047
    %v4049 = vpop.f32.mrf.mxu0
    %4050 = vmatprep.mubr.f32.mxu0 0.0
    %4051 = vmatmul.mubr.f32.gmra.mxu0 %v3901
    %v4052 = vpop.f32.mrf.mxu0
    %v4053 = vadd.f32 0.0, %v4052
    %v4054 = vpop.f32.mrf.mxu0
    %4055 = vmatprep.mubr.f32.mxu0 0.0
    %4056 = vmatmul.mubr.f32.gmra.mxu0 %v3904
    %v4057 = vpop.f32.mrf.mxu0
    %v4058 = vadd.f32 0.0, %v4057
    %v4059 = vpop.f32.mrf.mxu0
    %4060 = vdwg.mxu0
    %v4061 = vadd.f32 %v3737, %v3973
    %v4062 = vadd.f32 %v3742, %v3978
    %v4063 = vadd.f32 %v3747, %v3983
    %v4064 = vadd.f32 %v3752, %v3988
    %v4065 = vadd.f32 %v3757, %v3993
    %v4066 = vadd.f32 %v3762, %v3998
    %v4067 = vadd.f32 %v3767, %v4003
    %v4068 = vadd.f32 %v3772, %v4008
    %v4069 = vadd.f32 %v3777, %v4013
    %v4070 = vadd.f32 %v3782, %v4018
    %v4071 = vadd.f32 %v3787, %v4023
    %v4072 = vadd.f32 %v3792, %v4028
    %v4073 = vadd.f32 %v3797, %v4033
    %v4074 = vadd.f32 %v3802, %v4038
    %v4075 = vadd.f32 %v3807, %v4043
    %v4076 = vadd.f32 %v3812, %v4048
    %v4077 = vadd.f32 %v3817, %v4053
    %v4078 = vadd.f32 %v3822, %v4058
    %v4079 = vld [vmem:[#allocation2 + $0xa] sm:$0xff]
    %v4080 = vld [vmem:[#allocation2 + $0x12] sm:$0xff]
    %v4081 = vld [vmem:[#allocation2 + $0x1a] sm:$0xff]
    %v4082 = vld [vmem:[#allocation2 + $0x22] sm:$0xff]
    %v4083 = vld [vmem:[#allocation2 + $0x2a] sm:$0xff]
    %v4084 = vld [vmem:[#allocation2 + $0x32] sm:$0xff]
    %v4085 = vld [vmem:[#allocation2 + $0x3a] sm:$0xff]
    %v4086 = vld [vmem:[#allocation2 + $0x42] sm:$0xff]
    %v4087 = vld [vmem:[#allocation2 + $0x4a] sm:$0xff]
    %v4088 = vld [vmem:[#allocation2 + $0x52] sm:$0xff]
    %v4089 = vld [vmem:[#allocation2 + $0x5a] sm:$0xff]
    %v4090 = vld [vmem:[#allocation2 + $0x62] sm:$0xff]
    %v4091 = vld [vmem:[#allocation2 + $0x6a] sm:$0xff]
    %v4092 = vld [vmem:[#allocation2 + $0x72] sm:$0xff]
    %v4093 = vld [vmem:[#allocation2 + $0x7a] sm:$0xff]
    %v4094 = vld [vmem:[#allocation2 + $0x82] sm:$0xff]
    %v4095 = vld [vmem:[#allocation2 + $0x8a] sm:$0xff]
    %v4096 = vld [vmem:[#allocation2 + $0x92] sm:$0x3]
    %s4097 = scalar_lea.vmem [#allocation5], 192
    %v4098 = vld [vmem:[%s4097] sm:$0xff]
    %v4099 = vld [vmem:[%s4097 + $0x8] sm:$0xff]
    %v4100 = vld [vmem:[%s4097 + $0x10] sm:$0xff]
    %v4101 = vld [vmem:[%s4097 + $0x18] sm:$0xff]
    %v4102 = vld [vmem:[%s4097 + $0x20] sm:$0xff]
    %v4103 = vld [vmem:[%s4097 + $0x28] sm:$0xff]
    %v4104 = vld [vmem:[%s4097 + $0x30] sm:$0xff]
    %v4105 = vld [vmem:[%s4097 + $0x38] sm:$0xff]
    %v4107 = vsel %vm98, %v4079, 0
    %v4110 = vsel %vm98, %v4080, 0
    %v4113 = vsel %vm98, %v4081, 0
    %v4116 = vsel %vm98, %v4082, 0
    %v4119 = vsel %vm98, %v4083, 0
    %v4122 = vsel %vm98, %v4084, 0
    %v4125 = vsel %vm98, %v4085, 0
    %v4128 = vsel %vm98, %v4086, 0
    %v4131 = vsel %vm98, %v4087, 0
    %v4134 = vsel %vm98, %v4088, 0
    %v4137 = vsel %vm98, %v4089, 0
    %v4140 = vsel %vm98, %v4090, 0
    %v4143 = vsel %vm98, %v4091, 0
    %v4146 = vsel %vm98, %v4092, 0
    %v4149 = vsel %vm98, %v4093, 0
    %v4152 = vsel %vm98, %v4094, 0
    %v4155 = vsel %vm98, %v4095, 0
    %v4158 = vsel %vm98, %v4096, 0
    %4160 = vmatprep.subr.mxu0 0.0
    %4161 = vmatpush1.msra.mxu0 0.0
    %4162 = vmatprep.subr.mxu0 0.0
    %4163 = vmatpush1.msra.mxu0 0.0
    %4164 = vmatprep.subr.mxu0 0.0
    %4165 = vmatpush1.msra.mxu0 0.0
    %4166 = vmatprep.subr.mxu0 0.0
    %4167 = vmatpush1.msra.mxu0 0.0
    %4168 = vmatprep.subr.mxu0 0.0
    %4169 = vmatpush1.msra.mxu0 0.0
    %4170 = vmatprep.subr.mxu0 0.0
    %4171 = vmatpush1.msra.mxu0 0.0
    %4172 = vmatprep.subr.mxu0 0.0
    %4173 = vmatpush1.msra.mxu0 0.0
    %4174 = vmatprep.subr.mxu0 0.0
    %4175 = vmatpush1.msra.mxu0 0.0
    %4176 = vmatprep.subr.mxu0 0.0
    %4177 = vmatpush1.msra.mxu0 %v4105
    %4178 = vmatprep.subr.mxu0 0.0
    %4179 = vmatpush1.msra.mxu0 %v4104
    %4180 = vmatprep.subr.mxu0 0.0
    %4181 = vmatpush1.msra.mxu0 %v4103
    %4182 = vmatprep.subr.mxu0 0.0
    %4183 = vmatpush1.msra.mxu0 %v4102
    %4184 = vmatprep.subr.mxu0 0.0
    %4185 = vmatpush1.msra.mxu0 %v4101
    %4186 = vmatprep.subr.mxu0 0.0
    %4187 = vmatpush1.msra.mxu0 %v4100
    %4188 = vmatprep.subr.mxu0 0.0
    %4189 = vmatpush1.msra.mxu0 %v4099
    %4190 = vmatprep.subr.mxu0 0.0
    %4191 = vmatpush1.msra.mxu0 %v4098
    %4192 = vmatprep.subr.mxu0 0.0
    %4193 = vmatpush2.msra.mxu0 0.0
    %4194 = vmatprep.subr.mxu0 0.0
    %4195 = vmatpush2.msra.mxu0 0.0
    %4196 = vmatprep.subr.mxu0 0.0
    %4197 = vmatpush2.msra.mxu0 0.0
    %4198 = vmatprep.subr.mxu0 0.0
    %4199 = vmatpush2.msra.mxu0 0.0
    %4200 = vmatprep.subr.mxu0 0.0
    %4201 = vmatpush2.msra.mxu0 0.0
    %4202 = vmatprep.subr.mxu0 0.0
    %4203 = vmatpush2.msra.mxu0 0.0
    %4204 = vmatprep.subr.mxu0 0.0
    %4205 = vmatpush2.msra.mxu0 0.0
    %4206 = vmatprep.subr.mxu0 0.0
    %4207 = vmatpush2.msra.mxu0 0.0
    %4208 = vmatprep.subr.mxu0 0.0
    %4209 = vmatpush2.msra.mxu0 0.0
    %4210 = vmatprep.subr.mxu0 0.0
    %4211 = vmatpush2.msra.mxu0 0.0
    %4212 = vmatprep.subr.mxu0 0.0
    %4213 = vmatpush2.msra.mxu0 0.0
    %4214 = vmatprep.subr.mxu0 0.0
    %4215 = vmatpush2.msra.mxu0 0.0
    %4216 = vmatprep.subr.mxu0 0.0
    %4217 = vmatpush2.msra.mxu0 0.0
    %4218 = vmatprep.subr.mxu0 0.0
    %4219 = vmatpush2.msra.mxu0 0.0
    %4220 = vmatprep.subr.mxu0 0.0
    %4221 = vmatpush2.msra.mxu0 0.0
    %4222 = vmatprep.subr.mxu0 0.0
    %4223 = vmatpush2.msra.mxu0 0.0
    %4224 = vmatprep.mubr.f32.mxu0 0.0
    %4225 = vmatmul.mubr.f32.gmra.mxu0 %v4107
    %v4226 = vpop.f32.mrf.mxu0
    %v4227 = vadd.f32 0.0, %v4226
    %v4228 = vpop.f32.mrf.mxu0
    %4229 = vmatprep.mubr.f32.mxu0 0.0
    %4230 = vmatmul.mubr.f32.gmra.mxu0 %v4110
    %v4231 = vpop.f32.mrf.mxu0
    %v4232 = vadd.f32 0.0, %v4231
    %v4233 = vpop.f32.mrf.mxu0
    %4234 = vmatprep.mubr.f32.mxu0 0.0
    %4235 = vmatmul.mubr.f32.gmra.mxu0 %v4113
    %v4236 = vpop.f32.mrf.mxu0
    %v4237 = vadd.f32 0.0, %v4236
    %v4238 = vpop.f32.mrf.mxu0
    %4239 = vmatprep.mubr.f32.mxu0 0.0
    %4240 = vmatmul.mubr.f32.gmra.mxu0 %v4116
    %v4241 = vpop.f32.mrf.mxu0
    %v4242 = vadd.f32 0.0, %v4241
    %v4243 = vpop.f32.mrf.mxu0
    %4244 = vmatprep.mubr.f32.mxu0 0.0
    %4245 = vmatmul.mubr.f32.gmra.mxu0 %v4119
    %v4246 = vpop.f32.mrf.mxu0
    %v4247 = vadd.f32 0.0, %v4246
    %v4248 = vpop.f32.mrf.mxu0
    %4249 = vmatprep.mubr.f32.mxu0 0.0
    %4250 = vmatmul.mubr.f32.gmra.mxu0 %v4122
    %v4251 = vpop.f32.mrf.mxu0
    %v4252 = vadd.f32 0.0, %v4251
    %v4253 = vpop.f32.mrf.mxu0
    %4254 = vmatprep.mubr.f32.mxu0 0.0
    %4255 = vmatmul.mubr.f32.gmra.mxu0 %v4125
    %v4256 = vpop.f32.mrf.mxu0
    %v4257 = vadd.f32 0.0, %v4256
    %v4258 = vpop.f32.mrf.mxu0
    %4259 = vmatprep.mubr.f32.mxu0 0.0
    %4260 = vmatmul.mubr.f32.gmra.mxu0 %v4128
    %v4261 = vpop.f32.mrf.mxu0
    %v4262 = vadd.f32 0.0, %v4261
    %v4263 = vpop.f32.mrf.mxu0
    %4264 = vmatprep.mubr.f32.mxu0 0.0
    %4265 = vmatmul.mubr.f32.gmra.mxu0 %v4131
    %v4266 = vpop.f32.mrf.mxu0
    %v4267 = vadd.f32 0.0, %v4266
    %v4268 = vpop.f32.mrf.mxu0
    %4269 = vmatprep.mubr.f32.mxu0 0.0
    %4270 = vmatmul.mubr.f32.gmra.mxu0 %v4134
    %v4271 = vpop.f32.mrf.mxu0
    %v4272 = vadd.f32 0.0, %v4271
    %v4273 = vpop.f32.mrf.mxu0
    %4274 = vmatprep.mubr.f32.mxu0 0.0
    %4275 = vmatmul.mubr.f32.gmra.mxu0 %v4137
    %v4276 = vpop.f32.mrf.mxu0
    %v4277 = vadd.f32 0.0, %v4276
    %v4278 = vpop.f32.mrf.mxu0
    %4279 = vmatprep.mubr.f32.mxu0 0.0
    %4280 = vmatmul.mubr.f32.gmra.mxu0 %v4140
    %v4281 = vpop.f32.mrf.mxu0
    %v4282 = vadd.f32 0.0, %v4281
    %v4283 = vpop.f32.mrf.mxu0
    %4284 = vmatprep.mubr.f32.mxu0 0.0
    %4285 = vmatmul.mubr.f32.gmra.mxu0 %v4143
    %v4286 = vpop.f32.mrf.mxu0
    %v4287 = vadd.f32 0.0, %v4286
    %v4288 = vpop.f32.mrf.mxu0
    %4289 = vmatprep.mubr.f32.mxu0 0.0
    %4290 = vmatmul.mubr.f32.gmra.mxu0 %v4146
    %v4291 = vpop.f32.mrf.mxu0
    %v4292 = vadd.f32 0.0, %v4291
    %v4293 = vpop.f32.mrf.mxu0
    %4294 = vmatprep.mubr.f32.mxu0 0.0
    %4295 = vmatmul.mubr.f32.gmra.mxu0 %v4149
    %v4296 = vpop.f32.mrf.mxu0
    %v4297 = vadd.f32 0.0, %v4296
    %v4298 = vpop.f32.mrf.mxu0
    %4299 = vmatprep.mubr.f32.mxu0 0.0
    %4300 = vmatmul.mubr.f32.gmra.mxu0 %v4152
    %v4301 = vpop.f32.mrf.mxu0
    %v4302 = vadd.f32 0.0, %v4301
    %v4303 = vpop.f32.mrf.mxu0
    %4304 = vmatprep.mubr.f32.mxu0 0.0
    %4305 = vmatmul.mubr.f32.gmra.mxu0 %v4155
    %v4306 = vpop.f32.mrf.mxu0
    %v4307 = vadd.f32 0.0, %v4306
    %v4308 = vpop.f32.mrf.mxu0
    %4309 = vmatprep.mubr.f32.mxu0 0.0
    %4310 = vmatmul.mubr.f32.gmra.mxu0 %v4158
    %v4311 = vpop.f32.mrf.mxu0
    %v4312 = vadd.f32 0.0, %v4311
    %v4313 = vpop.f32.mrf.mxu0
    %4314 = vdwg.mxu0
    %v4315 = vadd.f32 %v4061, %v4227
    %v4316 = vadd.f32 %v4062, %v4232
    %v4317 = vadd.f32 %v4063, %v4237
    %v4318 = vadd.f32 %v4064, %v4242
    %v4319 = vadd.f32 %v4065, %v4247
    %v4320 = vadd.f32 %v4066, %v4252
    %v4321 = vadd.f32 %v4067, %v4257
    %v4322 = vadd.f32 %v4068, %v4262
    %v4323 = vadd.f32 %v4069, %v4267
    %v4324 = vadd.f32 %v4070, %v4272
    %v4325 = vadd.f32 %v4071, %v4277
    %v4326 = vadd.f32 %v4072, %v4282
    %v4327 = vadd.f32 %v4073, %v4287
    %v4328 = vadd.f32 %v4074, %v4292
    %v4329 = vadd.f32 %v4075, %v4297
    %v4330 = vadd.f32 %v4076, %v4302
    %v4331 = vadd.f32 %v4077, %v4307
    %v4332 = vadd.f32 %v4078, %v4312
    %v4333 = vld [vmem:[#allocation2 + $0xb] sm:$0xff]
    %v4334 = vld [vmem:[#allocation2 + $0x13] sm:$0xff]
    %v4335 = vld [vmem:[#allocation2 + $0x1b] sm:$0xff]
    %v4336 = vld [vmem:[#allocation2 + $0x23] sm:$0xff]
    %v4337 = vld [vmem:[#allocation2 + $0x2b] sm:$0xff]
    %v4338 = vld [vmem:[#allocation2 + $0x33] sm:$0xff]
    %v4339 = vld [vmem:[#allocation2 + $0x3b] sm:$0xff]
    %v4340 = vld [vmem:[#allocation2 + $0x43] sm:$0xff]
    %v4341 = vld [vmem:[#allocation2 + $0x4b] sm:$0xff]
    %v4342 = vld [vmem:[#allocation2 + $0x53] sm:$0xff]
    %v4343 = vld [vmem:[#allocation2 + $0x5b] sm:$0xff]
    %v4344 = vld [vmem:[#allocation2 + $0x63] sm:$0xff]
    %v4345 = vld [vmem:[#allocation2 + $0x6b] sm:$0xff]
    %v4346 = vld [vmem:[#allocation2 + $0x73] sm:$0xff]
    %v4347 = vld [vmem:[#allocation2 + $0x7b] sm:$0xff]
    %v4348 = vld [vmem:[#allocation2 + $0x83] sm:$0xff]
    %v4349 = vld [vmem:[#allocation2 + $0x8b] sm:$0xff]
    %v4350 = vld [vmem:[#allocation2 + $0x93] sm:$0x3]
    %s4351 = scalar_lea.vmem [#allocation5], 256
    %v4352 = vld [vmem:[%s4351] sm:$0xff]
    %v4353 = vld [vmem:[%s4351 + $0x8] sm:$0xff]
    %v4354 = vld [vmem:[%s4351 + $0x10] sm:$0xff]
    %v4355 = vld [vmem:[%s4351 + $0x18] sm:$0xff]
    %v4356 = vld [vmem:[%s4351 + $0x20] sm:$0xff]
    %v4357 = vld [vmem:[%s4351 + $0x28] sm:$0xff]
    %v4358 = vld [vmem:[%s4351 + $0x30] sm:$0xff]
    %v4359 = vld [vmem:[%s4351 + $0x38] sm:$0xff]
    %v4361 = vsel %vm98, %v4333, 0
    %v4364 = vsel %vm98, %v4334, 0
    %v4367 = vsel %vm98, %v4335, 0
    %v4370 = vsel %vm98, %v4336, 0
    %v4373 = vsel %vm98, %v4337, 0
    %v4376 = vsel %vm98, %v4338, 0
    %v4379 = vsel %vm98, %v4339, 0
    %v4382 = vsel %vm98, %v4340, 0
    %v4385 = vsel %vm98, %v4341, 0
    %v4388 = vsel %vm98, %v4342, 0
    %v4391 = vsel %vm98, %v4343, 0
    %v4394 = vsel %vm98, %v4344, 0
    %v4397 = vsel %vm98, %v4345, 0
    %v4400 = vsel %vm98, %v4346, 0
    %v4403 = vsel %vm98, %v4347, 0
    %v4406 = vsel %vm98, %v4348, 0
    %v4409 = vsel %vm98, %v4349, 0
    %v4412 = vsel %vm98, %v4350, 0
    %4414 = vmatprep.subr.mxu0 0.0
    %4415 = vmatpush1.msra.mxu0 0.0
    %4416 = vmatprep.subr.mxu0 0.0
    %4417 = vmatpush1.msra.mxu0 0.0
    %4418 = vmatprep.subr.mxu0 0.0
    %4419 = vmatpush1.msra.mxu0 0.0
    %4420 = vmatprep.subr.mxu0 0.0
    %4421 = vmatpush1.msra.mxu0 0.0
    %4422 = vmatprep.subr.mxu0 0.0
    %4423 = vmatpush1.msra.mxu0 0.0
    %4424 = vmatprep.subr.mxu0 0.0
    %4425 = vmatpush1.msra.mxu0 0.0
    %4426 = vmatprep.subr.mxu0 0.0
    %4427 = vmatpush1.msra.mxu0 0.0
    %4428 = vmatprep.subr.mxu0 0.0
    %4429 = vmatpush1.msra.mxu0 0.0
    %4430 = vmatprep.subr.mxu0 0.0
    %4431 = vmatpush1.msra.mxu0 %v4359
    %4432 = vmatprep.subr.mxu0 0.0
    %4433 = vmatpush1.msra.mxu0 %v4358
    %4434 = vmatprep.subr.mxu0 0.0
    %4435 = vmatpush1.msra.mxu0 %v4357
    %4436 = vmatprep.subr.mxu0 0.0
    %4437 = vmatpush1.msra.mxu0 %v4356
    %4438 = vmatprep.subr.mxu0 0.0
    %4439 = vmatpush1.msra.mxu0 %v4355
    %4440 = vmatprep.subr.mxu0 0.0
    %4441 = vmatpush1.msra.mxu0 %v4354
    %4442 = vmatprep.subr.mxu0 0.0
    %4443 = vmatpush1.msra.mxu0 %v4353
    %4444 = vmatprep.subr.mxu0 0.0
    %4445 = vmatpush1.msra.mxu0 %v4352
    %4446 = vmatprep.subr.mxu0 0.0
    %4447 = vmatpush2.msra.mxu0 0.0
    %4448 = vmatprep.subr.mxu0 0.0
    %4449 = vmatpush2.msra.mxu0 0.0
    %4450 = vmatprep.subr.mxu0 0.0
    %4451 = vmatpush2.msra.mxu0 0.0
    %4452 = vmatprep.subr.mxu0 0.0
    %4453 = vmatpush2.msra.mxu0 0.0
    %4454 = vmatprep.subr.mxu0 0.0
    %4455 = vmatpush2.msra.mxu0 0.0
    %4456 = vmatprep.subr.mxu0 0.0
    %4457 = vmatpush2.msra.mxu0 0.0
    %4458 = vmatprep.subr.mxu0 0.0
    %4459 = vmatpush2.msra.mxu0 0.0
    %4460 = vmatprep.subr.mxu0 0.0
    %4461 = vmatpush2.msra.mxu0 0.0
    %4462 = vmatprep.subr.mxu0 0.0
    %4463 = vmatpush2.msra.mxu0 0.0
    %4464 = vmatprep.subr.mxu0 0.0
    %4465 = vmatpush2.msra.mxu0 0.0
    %4466 = vmatprep.subr.mxu0 0.0
    %4467 = vmatpush2.msra.mxu0 0.0
    %4468 = vmatprep.subr.mxu0 0.0
    %4469 = vmatpush2.msra.mxu0 0.0
    %4470 = vmatprep.subr.mxu0 0.0
    %4471 = vmatpush2.msra.mxu0 0.0
    %4472 = vmatprep.subr.mxu0 0.0
    %4473 = vmatpush2.msra.mxu0 0.0
    %4474 = vmatprep.subr.mxu0 0.0
    %4475 = vmatpush2.msra.mxu0 0.0
    %4476 = vmatprep.subr.mxu0 0.0
    %4477 = vmatpush2.msra.mxu0 0.0
    %4478 = vmatprep.mubr.f32.mxu0 0.0
    %4479 = vmatmul.mubr.f32.gmra.mxu0 %v4361
    %v4480 = vpop.f32.mrf.mxu0
    %v4481 = vadd.f32 0.0, %v4480
    %v4482 = vpop.f32.mrf.mxu0
    %4483 = vmatprep.mubr.f32.mxu0 0.0
    %4484 = vmatmul.mubr.f32.gmra.mxu0 %v4364
    %v4485 = vpop.f32.mrf.mxu0
    %v4486 = vadd.f32 0.0, %v4485
    %v4487 = vpop.f32.mrf.mxu0
    %4488 = vmatprep.mubr.f32.mxu0 0.0
    %4489 = vmatmul.mubr.f32.gmra.mxu0 %v4367
    %v4490 = vpop.f32.mrf.mxu0
    %v4491 = vadd.f32 0.0, %v4490
    %v4492 = vpop.f32.mrf.mxu0
    %4493 = vmatprep.mubr.f32.mxu0 0.0
    %4494 = vmatmul.mubr.f32.gmra.mxu0 %v4370
    %v4495 = vpop.f32.mrf.mxu0
    %v4496 = vadd.f32 0.0, %v4495
    %v4497 = vpop.f32.mrf.mxu0
    %4498 = vmatprep.mubr.f32.mxu0 0.0
    %4499 = vmatmul.mubr.f32.gmra.mxu0 %v4373
    %v4500 = vpop.f32.mrf.mxu0
    %v4501 = vadd.f32 0.0, %v4500
    %v4502 = vpop.f32.mrf.mxu0
    %4503 = vmatprep.mubr.f32.mxu0 0.0
    %4504 = vmatmul.mubr.f32.gmra.mxu0 %v4376
    %v4505 = vpop.f32.mrf.mxu0
    %v4506 = vadd.f32 0.0, %v4505
    %v4507 = vpop.f32.mrf.mxu0
    %4508 = vmatprep.mubr.f32.mxu0 0.0
    %4509 = vmatmul.mubr.f32.gmra.mxu0 %v4379
    %v4510 = vpop.f32.mrf.mxu0
    %v4511 = vadd.f32 0.0, %v4510
    %v4512 = vpop.f32.mrf.mxu0
    %4513 = vmatprep.mubr.f32.mxu0 0.0
    %4514 = vmatmul.mubr.f32.gmra.mxu0 %v4382
    %v4515 = vpop.f32.mrf.mxu0
    %v4516 = vadd.f32 0.0, %v4515
    %v4517 = vpop.f32.mrf.mxu0
    %4518 = vmatprep.mubr.f32.mxu0 0.0
    %4519 = vmatmul.mubr.f32.gmra.mxu0 %v4385
    %v4520 = vpop.f32.mrf.mxu0
    %v4521 = vadd.f32 0.0, %v4520
    %v4522 = vpop.f32.mrf.mxu0
    %4523 = vmatprep.mubr.f32.mxu0 0.0
    %4524 = vmatmul.mubr.f32.gmra.mxu0 %v4388
    %v4525 = vpop.f32.mrf.mxu0
    %v4526 = vadd.f32 0.0, %v4525
    %v4527 = vpop.f32.mrf.mxu0
    %4528 = vmatprep.mubr.f32.mxu0 0.0
    %4529 = vmatmul.mubr.f32.gmra.mxu0 %v4391
    %v4530 = vpop.f32.mrf.mxu0
    %v4531 = vadd.f32 0.0, %v4530
    %v4532 = vpop.f32.mrf.mxu0
    %4533 = vmatprep.mubr.f32.mxu0 0.0
    %4534 = vmatmul.mubr.f32.gmra.mxu0 %v4394
    %v4535 = vpop.f32.mrf.mxu0
    %v4536 = vadd.f32 0.0, %v4535
    %v4537 = vpop.f32.mrf.mxu0
    %4538 = vmatprep.mubr.f32.mxu0 0.0
    %4539 = vmatmul.mubr.f32.gmra.mxu0 %v4397
    %v4540 = vpop.f32.mrf.mxu0
    %v4541 = vadd.f32 0.0, %v4540
    %v4542 = vpop.f32.mrf.mxu0
    %4543 = vmatprep.mubr.f32.mxu0 0.0
    %4544 = vmatmul.mubr.f32.gmra.mxu0 %v4400
    %v4545 = vpop.f32.mrf.mxu0
    %v4546 = vadd.f32 0.0, %v4545
    %v4547 = vpop.f32.mrf.mxu0
    %4548 = vmatprep.mubr.f32.mxu0 0.0
    %4549 = vmatmul.mubr.f32.gmra.mxu0 %v4403
    %v4550 = vpop.f32.mrf.mxu0
    %v4551 = vadd.f32 0.0, %v4550
    %v4552 = vpop.f32.mrf.mxu0
    %4553 = vmatprep.mubr.f32.mxu0 0.0
    %4554 = vmatmul.mubr.f32.gmra.mxu0 %v4406
    %v4555 = vpop.f32.mrf.mxu0
    %v4556 = vadd.f32 0.0, %v4555
    %v4557 = vpop.f32.mrf.mxu0
    %4558 = vmatprep.mubr.f32.mxu0 0.0
    %4559 = vmatmul.mubr.f32.gmra.mxu0 %v4409
    %v4560 = vpop.f32.mrf.mxu0
    %v4561 = vadd.f32 0.0, %v4560
    %v4562 = vpop.f32.mrf.mxu0
    %4563 = vmatprep.mubr.f32.mxu0 0.0
    %4564 = vmatmul.mubr.f32.gmra.mxu0 %v4412
    %v4565 = vpop.f32.mrf.mxu0
    %v4566 = vadd.f32 0.0, %v4565
    %v4567 = vpop.f32.mrf.mxu0
    %4568 = vdwg.mxu0
    %v4569 = vadd.f32 %v4315, %v4481
    %v4570 = vadd.f32 %v4316, %v4486
    %v4571 = vadd.f32 %v4317, %v4491
    %v4572 = vadd.f32 %v4318, %v4496
    %v4573 = vadd.f32 %v4319, %v4501
    %v4574 = vadd.f32 %v4320, %v4506
    %v4575 = vadd.f32 %v4321, %v4511
    %v4576 = vadd.f32 %v4322, %v4516
    %v4577 = vadd.f32 %v4323, %v4521
    %v4578 = vadd.f32 %v4324, %v4526
    %v4579 = vadd.f32 %v4325, %v4531
    %v4580 = vadd.f32 %v4326, %v4536
    %v4581 = vadd.f32 %v4327, %v4541
    %v4582 = vadd.f32 %v4328, %v4546
    %v4583 = vadd.f32 %v4329, %v4551
    %v4584 = vadd.f32 %v4330, %v4556
    %v4585 = vadd.f32 %v4331, %v4561
    %v4586 = vadd.f32 %v4332, %v4566
    %v4587 = vld [vmem:[#allocation2 + $0xc] sm:$0xff]
    %v4588 = vld [vmem:[#allocation2 + $0x14] sm:$0xff]
    %v4589 = vld [vmem:[#allocation2 + $0x1c] sm:$0xff]
    %v4590 = vld [vmem:[#allocation2 + $0x24] sm:$0xff]
    %v4591 = vld [vmem:[#allocation2 + $0x2c] sm:$0xff]
    %v4592 = vld [vmem:[#allocation2 + $0x34] sm:$0xff]
    %v4593 = vld [vmem:[#allocation2 + $0x3c] sm:$0xff]
    %v4594 = vld [vmem:[#allocation2 + $0x44] sm:$0xff]
    %v4595 = vld [vmem:[#allocation2 + $0x4c] sm:$0xff]
    %v4596 = vld [vmem:[#allocation2 + $0x54] sm:$0xff]
    %v4597 = vld [vmem:[#allocation2 + $0x5c] sm:$0xff]
    %v4598 = vld [vmem:[#allocation2 + $0x64] sm:$0xff]
    %v4599 = vld [vmem:[#allocation2 + $0x6c] sm:$0xff]
    %v4600 = vld [vmem:[#allocation2 + $0x74] sm:$0xff]
    %v4601 = vld [vmem:[#allocation2 + $0x7c] sm:$0xff]
    %v4602 = vld [vmem:[#allocation2 + $0x84] sm:$0xff]
    %v4603 = vld [vmem:[#allocation2 + $0x8c] sm:$0xff]
    %v4604 = vld [vmem:[#allocation2 + $0x94] sm:$0x3]
    %s4605 = scalar_lea.vmem [#allocation5], 320
    %v4606 = vld [vmem:[%s4605] sm:$0xff]
    %v4607 = vld [vmem:[%s4605 + $0x8] sm:$0xff]
    %v4608 = vld [vmem:[%s4605 + $0x10] sm:$0xff]
    %v4609 = vld [vmem:[%s4605 + $0x18] sm:$0xff]
    %v4610 = vld [vmem:[%s4605 + $0x20] sm:$0xff]
    %v4611 = vld [vmem:[%s4605 + $0x28] sm:$0xff]
    %v4612 = vld [vmem:[%s4605 + $0x30] sm:$0xff]
    %v4613 = vld [vmem:[%s4605 + $0x38] sm:$0xff]
    %v4615 = vsel %vm98, %v4587, 0
    %v4618 = vsel %vm98, %v4588, 0
    %v4621 = vsel %vm98, %v4589, 0
    %v4624 = vsel %vm98, %v4590, 0
    %v4627 = vsel %vm98, %v4591, 0
    %v4630 = vsel %vm98, %v4592, 0
    %v4633 = vsel %vm98, %v4593, 0
    %v4636 = vsel %vm98, %v4594, 0
    %v4639 = vsel %vm98, %v4595, 0
    %v4642 = vsel %vm98, %v4596, 0
    %v4645 = vsel %vm98, %v4597, 0
    %v4648 = vsel %vm98, %v4598, 0
    %v4651 = vsel %vm98, %v4599, 0
    %v4654 = vsel %vm98, %v4600, 0
    %v4657 = vsel %vm98, %v4601, 0
    %v4660 = vsel %vm98, %v4602, 0
    %v4663 = vsel %vm98, %v4603, 0
    %v4666 = vsel %vm98, %v4604, 0
    %4668 = vmatprep.subr.mxu0 0.0
    %4669 = vmatpush1.msra.mxu0 0.0
    %4670 = vmatprep.subr.mxu0 0.0
    %4671 = vmatpush1.msra.mxu0 0.0
    %4672 = vmatprep.subr.mxu0 0.0
    %4673 = vmatpush1.msra.mxu0 0.0
    %4674 = vmatprep.subr.mxu0 0.0
    %4675 = vmatpush1.msra.mxu0 0.0
    %4676 = vmatprep.subr.mxu0 0.0
    %4677 = vmatpush1.msra.mxu0 0.0
    %4678 = vmatprep.subr.mxu0 0.0
    %4679 = vmatpush1.msra.mxu0 0.0
    %4680 = vmatprep.subr.mxu0 0.0
    %4681 = vmatpush1.msra.mxu0 0.0
    %4682 = vmatprep.subr.mxu0 0.0
    %4683 = vmatpush1.msra.mxu0 0.0
    %4684 = vmatprep.subr.mxu0 0.0
    %4685 = vmatpush1.msra.mxu0 %v4613
    %4686 = vmatprep.subr.mxu0 0.0
    %4687 = vmatpush1.msra.mxu0 %v4612
    %4688 = vmatprep.subr.mxu0 0.0
    %4689 = vmatpush1.msra.mxu0 %v4611
    %4690 = vmatprep.subr.mxu0 0.0
    %4691 = vmatpush1.msra.mxu0 %v4610
    %4692 = vmatprep.subr.mxu0 0.0
    %4693 = vmatpush1.msra.mxu0 %v4609
    %4694 = vmatprep.subr.mxu0 0.0
    %4695 = vmatpush1.msra.mxu0 %v4608
    %4696 = vmatprep.subr.mxu0 0.0
    %4697 = vmatpush1.msra.mxu0 %v4607
    %4698 = vmatprep.subr.mxu0 0.0
    %4699 = vmatpush1.msra.mxu0 %v4606
    %4700 = vmatprep.subr.mxu0 0.0
    %4701 = vmatpush2.msra.mxu0 0.0
    %4702 = vmatprep.subr.mxu0 0.0
    %4703 = vmatpush2.msra.mxu0 0.0
    %4704 = vmatprep.subr.mxu0 0.0
    %4705 = vmatpush2.msra.mxu0 0.0
    %4706 = vmatprep.subr.mxu0 0.0
    %4707 = vmatpush2.msra.mxu0 0.0
    %4708 = vmatprep.subr.mxu0 0.0
    %4709 = vmatpush2.msra.mxu0 0.0
    %4710 = vmatprep.subr.mxu0 0.0
    %4711 = vmatpush2.msra.mxu0 0.0
    %4712 = vmatprep.subr.mxu0 0.0
    %4713 = vmatpush2.msra.mxu0 0.0
    %4714 = vmatprep.subr.mxu0 0.0
    %4715 = vmatpush2.msra.mxu0 0.0
    %4716 = vmatprep.subr.mxu0 0.0
    %4717 = vmatpush2.msra.mxu0 0.0
    %4718 = vmatprep.subr.mxu0 0.0
    %4719 = vmatpush2.msra.mxu0 0.0
    %4720 = vmatprep.subr.mxu0 0.0
    %4721 = vmatpush2.msra.mxu0 0.0
    %4722 = vmatprep.subr.mxu0 0.0
    %4723 = vmatpush2.msra.mxu0 0.0
    %4724 = vmatprep.subr.mxu0 0.0
    %4725 = vmatpush2.msra.mxu0 0.0
    %4726 = vmatprep.subr.mxu0 0.0
    %4727 = vmatpush2.msra.mxu0 0.0
    %4728 = vmatprep.subr.mxu0 0.0
    %4729 = vmatpush2.msra.mxu0 0.0
    %4730 = vmatprep.subr.mxu0 0.0
    %4731 = vmatpush2.msra.mxu0 0.0
    %4732 = vmatprep.mubr.f32.mxu0 0.0
    %4733 = vmatmul.mubr.f32.gmra.mxu0 %v4615
    %v4734 = vpop.f32.mrf.mxu0
    %v4735 = vadd.f32 0.0, %v4734
    %v4736 = vpop.f32.mrf.mxu0
    %4737 = vmatprep.mubr.f32.mxu0 0.0
    %4738 = vmatmul.mubr.f32.gmra.mxu0 %v4618
    %v4739 = vpop.f32.mrf.mxu0
    %v4740 = vadd.f32 0.0, %v4739
    %v4741 = vpop.f32.mrf.mxu0
    %4742 = vmatprep.mubr.f32.mxu0 0.0
    %4743 = vmatmul.mubr.f32.gmra.mxu0 %v4621
    %v4744 = vpop.f32.mrf.mxu0
    %v4745 = vadd.f32 0.0, %v4744
    %v4746 = vpop.f32.mrf.mxu0
    %4747 = vmatprep.mubr.f32.mxu0 0.0
    %4748 = vmatmul.mubr.f32.gmra.mxu0 %v4624
    %v4749 = vpop.f32.mrf.mxu0
    %v4750 = vadd.f32 0.0, %v4749
    %v4751 = vpop.f32.mrf.mxu0
    %4752 = vmatprep.mubr.f32.mxu0 0.0
    %4753 = vmatmul.mubr.f32.gmra.mxu0 %v4627
    %v4754 = vpop.f32.mrf.mxu0
    %v4755 = vadd.f32 0.0, %v4754
    %v4756 = vpop.f32.mrf.mxu0
    %4757 = vmatprep.mubr.f32.mxu0 0.0
    %4758 = vmatmul.mubr.f32.gmra.mxu0 %v4630
    %v4759 = vpop.f32.mrf.mxu0
    %v4760 = vadd.f32 0.0, %v4759
    %v4761 = vpop.f32.mrf.mxu0
    %4762 = vmatprep.mubr.f32.mxu0 0.0
    %4763 = vmatmul.mubr.f32.gmra.mxu0 %v4633
    %v4764 = vpop.f32.mrf.mxu0
    %v4765 = vadd.f32 0.0, %v4764
    %v4766 = vpop.f32.mrf.mxu0
    %4767 = vmatprep.mubr.f32.mxu0 0.0
    %4768 = vmatmul.mubr.f32.gmra.mxu0 %v4636
    %v4769 = vpop.f32.mrf.mxu0
    %v4770 = vadd.f32 0.0, %v4769
    %v4771 = vpop.f32.mrf.mxu0
    %4772 = vmatprep.mubr.f32.mxu0 0.0
    %4773 = vmatmul.mubr.f32.gmra.mxu0 %v4639
    %v4774 = vpop.f32.mrf.mxu0
    %v4775 = vadd.f32 0.0, %v4774
    %v4776 = vpop.f32.mrf.mxu0
    %4777 = vmatprep.mubr.f32.mxu0 0.0
    %4778 = vmatmul.mubr.f32.gmra.mxu0 %v4642
    %v4779 = vpop.f32.mrf.mxu0
    %v4780 = vadd.f32 0.0, %v4779
    %v4781 = vpop.f32.mrf.mxu0
    %4782 = vmatprep.mubr.f32.mxu0 0.0
    %4783 = vmatmul.mubr.f32.gmra.mxu0 %v4645
    %v4784 = vpop.f32.mrf.mxu0
    %v4785 = vadd.f32 0.0, %v4784
    %v4786 = vpop.f32.mrf.mxu0
    %4787 = vmatprep.mubr.f32.mxu0 0.0
    %4788 = vmatmul.mubr.f32.gmra.mxu0 %v4648
    %v4789 = vpop.f32.mrf.mxu0
    %v4790 = vadd.f32 0.0, %v4789
    %v4791 = vpop.f32.mrf.mxu0
    %4792 = vmatprep.mubr.f32.mxu0 0.0
    %4793 = vmatmul.mubr.f32.gmra.mxu0 %v4651
    %v4794 = vpop.f32.mrf.mxu0
    %v4795 = vadd.f32 0.0, %v4794
    %v4796 = vpop.f32.mrf.mxu0
    %4797 = vmatprep.mubr.f32.mxu0 0.0
    %4798 = vmatmul.mubr.f32.gmra.mxu0 %v4654
    %v4799 = vpop.f32.mrf.mxu0
    %v4800 = vadd.f32 0.0, %v4799
    %v4801 = vpop.f32.mrf.mxu0
    %4802 = vmatprep.mubr.f32.mxu0 0.0
    %4803 = vmatmul.mubr.f32.gmra.mxu0 %v4657
    %v4804 = vpop.f32.mrf.mxu0
    %v4805 = vadd.f32 0.0, %v4804
    %v4806 = vpop.f32.mrf.mxu0
    %4807 = vmatprep.mubr.f32.mxu0 0.0
    %4808 = vmatmul.mubr.f32.gmra.mxu0 %v4660
    %v4809 = vpop.f32.mrf.mxu0
    %v4810 = vadd.f32 0.0, %v4809
    %v4811 = vpop.f32.mrf.mxu0
    %4812 = vmatprep.mubr.f32.mxu0 0.0
    %4813 = vmatmul.mubr.f32.gmra.mxu0 %v4663
    %v4814 = vpop.f32.mrf.mxu0
    %v4815 = vadd.f32 0.0, %v4814
    %v4816 = vpop.f32.mrf.mxu0
    %4817 = vmatprep.mubr.f32.mxu0 0.0
    %4818 = vmatmul.mubr.f32.gmra.mxu0 %v4666
    %v4819 = vpop.f32.mrf.mxu0
    %v4820 = vadd.f32 0.0, %v4819
    %v4821 = vpop.f32.mrf.mxu0
    %4822 = vdwg.mxu0
    %v4823 = vadd.f32 %v4569, %v4735
    %v4824 = vadd.f32 %v4570, %v4740
    %v4825 = vadd.f32 %v4571, %v4745
    %v4826 = vadd.f32 %v4572, %v4750
    %v4827 = vadd.f32 %v4573, %v4755
    %v4828 = vadd.f32 %v4574, %v4760
    %v4829 = vadd.f32 %v4575, %v4765
    %v4830 = vadd.f32 %v4576, %v4770
    %v4831 = vadd.f32 %v4577, %v4775
    %v4832 = vadd.f32 %v4578, %v4780
    %v4833 = vadd.f32 %v4579, %v4785
    %v4834 = vadd.f32 %v4580, %v4790
    %v4835 = vadd.f32 %v4581, %v4795
    %v4836 = vadd.f32 %v4582, %v4800
    %v4837 = vadd.f32 %v4583, %v4805
    %v4838 = vadd.f32 %v4584, %v4810
    %v4839 = vadd.f32 %v4585, %v4815
    %v4840 = vadd.f32 %v4586, %v4820
    %v4841 = vld [vmem:[#allocation2 + $0x14] sm:$0xff]
    %v4842 = vld [vmem:[#allocation2 + $0x1c] sm:$0xff]
    %v4843 = vld [vmem:[#allocation2 + $0x24] sm:$0xff]
    %v4844 = vld [vmem:[#allocation2 + $0x2c] sm:$0xff]
    %v4845 = vld [vmem:[#allocation2 + $0x34] sm:$0xff]
    %v4846 = vld [vmem:[#allocation2 + $0x3c] sm:$0xff]
    %v4847 = vld [vmem:[#allocation2 + $0x44] sm:$0xff]
    %v4848 = vld [vmem:[#allocation2 + $0x4c] sm:$0xff]
    %v4849 = vld [vmem:[#allocation2 + $0x54] sm:$0xff]
    %v4850 = vld [vmem:[#allocation2 + $0x5c] sm:$0xff]
    %v4851 = vld [vmem:[#allocation2 + $0x64] sm:$0xff]
    %v4852 = vld [vmem:[#allocation2 + $0x6c] sm:$0xff]
    %v4853 = vld [vmem:[#allocation2 + $0x74] sm:$0xff]
    %v4854 = vld [vmem:[#allocation2 + $0x7c] sm:$0xff]
    %v4855 = vld [vmem:[#allocation2 + $0x84] sm:$0xff]
    %v4856 = vld [vmem:[#allocation2 + $0x8c] sm:$0xff]
    %v4857 = vld [vmem:[#allocation2 + $0x94] sm:$0xff]
    %v4858 = vld [vmem:[#allocation2 + $0x9c] sm:$0x3]
    %s4859 = scalar_lea.vmem [#allocation5], 384
    %v4860 = vld [vmem:[%s4859] sm:$0xff]
    %v4861 = vld [vmem:[%s4859 + $0x8] sm:$0xff]
    %v4862 = vld [vmem:[%s4859 + $0x10] sm:$0xff]
    %v4863 = vld [vmem:[%s4859 + $0x18] sm:$0xff]
    %v4864 = vld [vmem:[%s4859 + $0x20] sm:$0xff]
    %v4865 = vld [vmem:[%s4859 + $0x28] sm:$0xff]
    %v4866 = vld [vmem:[%s4859 + $0x30] sm:$0xff]
    %v4867 = vld [vmem:[%s4859 + $0x38] sm:$0xff]
    %v4869 = vsel %vm98, %v4841, 0
    %v4872 = vsel %vm98, %v4842, 0
    %v4875 = vsel %vm98, %v4843, 0
    %v4878 = vsel %vm98, %v4844, 0
    %v4881 = vsel %vm98, %v4845, 0
    %v4884 = vsel %vm98, %v4846, 0
    %v4887 = vsel %vm98, %v4847, 0
    %v4890 = vsel %vm98, %v4848, 0
    %v4893 = vsel %vm98, %v4849, 0
    %v4896 = vsel %vm98, %v4850, 0
    %v4899 = vsel %vm98, %v4851, 0
    %v4902 = vsel %vm98, %v4852, 0
    %v4905 = vsel %vm98, %v4853, 0
    %v4908 = vsel %vm98, %v4854, 0
    %v4911 = vsel %vm98, %v4855, 0
    %v4914 = vsel %vm98, %v4856, 0
    %v4917 = vsel %vm98, %v4857, 0
    %v4920 = vsel %vm98, %v4858, 0
    %4922 = vmatprep.subr.mxu0 0.0
    %4923 = vmatpush1.msra.mxu0 0.0
    %4924 = vmatprep.subr.mxu0 0.0
    %4925 = vmatpush1.msra.mxu0 0.0
    %4926 = vmatprep.subr.mxu0 0.0
    %4927 = vmatpush1.msra.mxu0 0.0
    %4928 = vmatprep.subr.mxu0 0.0
    %4929 = vmatpush1.msra.mxu0 0.0
    %4930 = vmatprep.subr.mxu0 0.0
    %4931 = vmatpush1.msra.mxu0 0.0
    %4932 = vmatprep.subr.mxu0 0.0
    %4933 = vmatpush1.msra.mxu0 0.0
    %4934 = vmatprep.subr.mxu0 0.0
    %4935 = vmatpush1.msra.mxu0 0.0
    %4936 = vmatprep.subr.mxu0 0.0
    %4937 = vmatpush1.msra.mxu0 0.0
    %4938 = vmatprep.subr.mxu0 0.0
    %4939 = vmatpush1.msra.mxu0 %v4867
    %4940 = vmatprep.subr.mxu0 0.0
    %4941 = vmatpush1.msra.mxu0 %v4866
    %4942 = vmatprep.subr.mxu0 0.0
    %4943 = vmatpush1.msra.mxu0 %v4865
    %4944 = vmatprep.subr.mxu0 0.0
    %4945 = vmatpush1.msra.mxu0 %v4864
    %4946 = vmatprep.subr.mxu0 0.0
    %4947 = vmatpush1.msra.mxu0 %v4863
    %4948 = vmatprep.subr.mxu0 0.0
    %4949 = vmatpush1.msra.mxu0 %v4862
    %4950 = vmatprep.subr.mxu0 0.0
    %4951 = vmatpush1.msra.mxu0 %v4861
    %4952 = vmatprep.subr.mxu0 0.0
    %4953 = vmatpush1.msra.mxu0 %v4860
    %4954 = vmatprep.subr.mxu0 0.0
    %4955 = vmatpush2.msra.mxu0 0.0
    %4956 = vmatprep.subr.mxu0 0.0
    %4957 = vmatpush2.msra.mxu0 0.0
    %4958 = vmatprep.subr.mxu0 0.0
    %4959 = vmatpush2.msra.mxu0 0.0
    %4960 = vmatprep.subr.mxu0 0.0
    %4961 = vmatpush2.msra.mxu0 0.0
    %4962 = vmatprep.subr.mxu0 0.0
    %4963 = vmatpush2.msra.mxu0 0.0
    %4964 = vmatprep.subr.mxu0 0.0
    %4965 = vmatpush2.msra.mxu0 0.0
    %4966 = vmatprep.subr.mxu0 0.0
    %4967 = vmatpush2.msra.mxu0 0.0
    %4968 = vmatprep.subr.mxu0 0.0
    %4969 = vmatpush2.msra.mxu0 0.0
    %4970 = vmatprep.subr.mxu0 0.0
    %4971 = vmatpush2.msra.mxu0 0.0
    %4972 = vmatprep.subr.mxu0 0.0
    %4973 = vmatpush2.msra.mxu0 0.0
    %4974 = vmatprep.subr.mxu0 0.0
    %4975 = vmatpush2.msra.mxu0 0.0
    %4976 = vmatprep.subr.mxu0 0.0
    %4977 = vmatpush2.msra.mxu0 0.0
    %4978 = vmatprep.subr.mxu0 0.0
    %4979 = vmatpush2.msra.mxu0 0.0
    %4980 = vmatprep.subr.mxu0 0.0
    %4981 = vmatpush2.msra.mxu0 0.0
    %4982 = vmatprep.subr.mxu0 0.0
    %4983 = vmatpush2.msra.mxu0 0.0
    %4984 = vmatprep.subr.mxu0 0.0
    %4985 = vmatpush2.msra.mxu0 0.0
    %4986 = vmatprep.mubr.f32.mxu0 0.0
    %4987 = vmatmul.mubr.f32.gmra.mxu0 %v4869
    %v4988 = vpop.f32.mrf.mxu0
    %v4989 = vadd.f32 0.0, %v4988
    %v4990 = vpop.f32.mrf.mxu0
    %4991 = vmatprep.mubr.f32.mxu0 0.0
    %4992 = vmatmul.mubr.f32.gmra.mxu0 %v4872
    %v4993 = vpop.f32.mrf.mxu0
    %v4994 = vadd.f32 0.0, %v4993
    %v4995 = vpop.f32.mrf.mxu0
    %4996 = vmatprep.mubr.f32.mxu0 0.0
    %4997 = vmatmul.mubr.f32.gmra.mxu0 %v4875
    %v4998 = vpop.f32.mrf.mxu0
    %v4999 = vadd.f32 0.0, %v4998
    %v5000 = vpop.f32.mrf.mxu0
    %5001 = vmatprep.mubr.f32.mxu0 0.0
    %5002 = vmatmul.mubr.f32.gmra.mxu0 %v4878
    %v5003 = vpop.f32.mrf.mxu0
    %v5004 = vadd.f32 0.0, %v5003
    %v5005 = vpop.f32.mrf.mxu0
    %5006 = vmatprep.mubr.f32.mxu0 0.0
    %5007 = vmatmul.mubr.f32.gmra.mxu0 %v4881
    %v5008 = vpop.f32.mrf.mxu0
    %v5009 = vadd.f32 0.0, %v5008
    %v5010 = vpop.f32.mrf.mxu0
    %5011 = vmatprep.mubr.f32.mxu0 0.0
    %5012 = vmatmul.mubr.f32.gmra.mxu0 %v4884
    %v5013 = vpop.f32.mrf.mxu0
    %v5014 = vadd.f32 0.0, %v5013
    %v5015 = vpop.f32.mrf.mxu0
    %5016 = vmatprep.mubr.f32.mxu0 0.0
    %5017 = vmatmul.mubr.f32.gmra.mxu0 %v4887
    %v5018 = vpop.f32.mrf.mxu0
    %v5019 = vadd.f32 0.0, %v5018
    %v5020 = vpop.f32.mrf.mxu0
    %5021 = vmatprep.mubr.f32.mxu0 0.0
    %5022 = vmatmul.mubr.f32.gmra.mxu0 %v4890
    %v5023 = vpop.f32.mrf.mxu0
    %v5024 = vadd.f32 0.0, %v5023
    %v5025 = vpop.f32.mrf.mxu0
    %5026 = vmatprep.mubr.f32.mxu0 0.0
    %5027 = vmatmul.mubr.f32.gmra.mxu0 %v4893
    %v5028 = vpop.f32.mrf.mxu0
    %v5029 = vadd.f32 0.0, %v5028
    %v5030 = vpop.f32.mrf.mxu0
    %5031 = vmatprep.mubr.f32.mxu0 0.0
    %5032 = vmatmul.mubr.f32.gmra.mxu0 %v4896
    %v5033 = vpop.f32.mrf.mxu0
    %v5034 = vadd.f32 0.0, %v5033
    %v5035 = vpop.f32.mrf.mxu0
    %5036 = vmatprep.mubr.f32.mxu0 0.0
    %5037 = vmatmul.mubr.f32.gmra.mxu0 %v4899
    %v5038 = vpop.f32.mrf.mxu0
    %v5039 = vadd.f32 0.0, %v5038
    %v5040 = vpop.f32.mrf.mxu0
    %5041 = vmatprep.mubr.f32.mxu0 0.0
    %5042 = vmatmul.mubr.f32.gmra.mxu0 %v4902
    %v5043 = vpop.f32.mrf.mxu0
    %v5044 = vadd.f32 0.0, %v5043
    %v5045 = vpop.f32.mrf.mxu0
    %5046 = vmatprep.mubr.f32.mxu0 0.0
    %5047 = vmatmul.mubr.f32.gmra.mxu0 %v4905
    %v5048 = vpop.f32.mrf.mxu0
    %v5049 = vadd.f32 0.0, %v5048
    %v5050 = vpop.f32.mrf.mxu0
    %5051 = vmatprep.mubr.f32.mxu0 0.0
    %5052 = vmatmul.mubr.f32.gmra.mxu0 %v4908
    %v5053 = vpop.f32.mrf.mxu0
    %v5054 = vadd.f32 0.0, %v5053
    %v5055 = vpop.f32.mrf.mxu0
    %5056 = vmatprep.mubr.f32.mxu0 0.0
    %5057 = vmatmul.mubr.f32.gmra.mxu0 %v4911
    %v5058 = vpop.f32.mrf.mxu0
    %v5059 = vadd.f32 0.0, %v5058
    %v5060 = vpop.f32.mrf.mxu0
    %5061 = vmatprep.mubr.f32.mxu0 0.0
    %5062 = vmatmul.mubr.f32.gmra.mxu0 %v4914
    %v5063 = vpop.f32.mrf.mxu0
    %v5064 = vadd.f32 0.0, %v5063
    %v5065 = vpop.f32.mrf.mxu0
    %5066 = vmatprep.mubr.f32.mxu0 0.0
    %5067 = vmatmul.mubr.f32.gmra.mxu0 %v4917
    %v5068 = vpop.f32.mrf.mxu0
    %v5069 = vadd.f32 0.0, %v5068
    %v5070 = vpop.f32.mrf.mxu0
    %5071 = vmatprep.mubr.f32.mxu0 0.0
    %5072 = vmatmul.mubr.f32.gmra.mxu0 %v4920
    %v5073 = vpop.f32.mrf.mxu0
    %v5074 = vadd.f32 0.0, %v5073
    %v5075 = vpop.f32.mrf.mxu0
    %5076 = vdwg.mxu0
    %v5077 = vadd.f32 %v4823, %v4989
    %v5078 = vadd.f32 %v4824, %v4994
    %v5079 = vadd.f32 %v4825, %v4999
    %v5080 = vadd.f32 %v4826, %v5004
    %v5081 = vadd.f32 %v4827, %v5009
    %v5082 = vadd.f32 %v4828, %v5014
    %v5083 = vadd.f32 %v4829, %v5019
    %v5084 = vadd.f32 %v4830, %v5024
    %v5085 = vadd.f32 %v4831, %v5029
    %v5086 = vadd.f32 %v4832, %v5034
    %v5087 = vadd.f32 %v4833, %v5039
    %v5088 = vadd.f32 %v4834, %v5044
    %v5089 = vadd.f32 %v4835, %v5049
    %v5090 = vadd.f32 %v4836, %v5054
    %v5091 = vadd.f32 %v4837, %v5059
    %v5092 = vadd.f32 %v4838, %v5064
    %v5093 = vadd.f32 %v4839, %v5069
    %v5094 = vadd.f32 %v4840, %v5074
    %v5095 = vld [vmem:[#allocation2 + $0x15] sm:$0xff]
    %v5096 = vld [vmem:[#allocation2 + $0x1d] sm:$0xff]
    %v5097 = vld [vmem:[#allocation2 + $0x25] sm:$0xff]
    %v5098 = vld [vmem:[#allocation2 + $0x2d] sm:$0xff]
    %v5099 = vld [vmem:[#allocation2 + $0x35] sm:$0xff]
    %v5100 = vld [vmem:[#allocation2 + $0x3d] sm:$0xff]
    %v5101 = vld [vmem:[#allocation2 + $0x45] sm:$0xff]
    %v5102 = vld [vmem:[#allocation2 + $0x4d] sm:$0xff]
    %v5103 = vld [vmem:[#allocation2 + $0x55] sm:$0xff]
    %v5104 = vld [vmem:[#allocation2 + $0x5d] sm:$0xff]
    %v5105 = vld [vmem:[#allocation2 + $0x65] sm:$0xff]
    %v5106 = vld [vmem:[#allocation2 + $0x6d] sm:$0xff]
    %v5107 = vld [vmem:[#allocation2 + $0x75] sm:$0xff]
    %v5108 = vld [vmem:[#allocation2 + $0x7d] sm:$0xff]
    %v5109 = vld [vmem:[#allocation2 + $0x85] sm:$0xff]
    %v5110 = vld [vmem:[#allocation2 + $0x8d] sm:$0xff]
    %v5111 = vld [vmem:[#allocation2 + $0x95] sm:$0xff]
    %v5112 = vld [vmem:[#allocation2 + $0x9d] sm:$0x3]
    %s5113 = scalar_lea.vmem [#allocation5], 448
    %v5114 = vld [vmem:[%s5113] sm:$0xff]
    %v5115 = vld [vmem:[%s5113 + $0x8] sm:$0xff]
    %v5116 = vld [vmem:[%s5113 + $0x10] sm:$0xff]
    %v5117 = vld [vmem:[%s5113 + $0x18] sm:$0xff]
    %v5118 = vld [vmem:[%s5113 + $0x20] sm:$0xff]
    %v5119 = vld [vmem:[%s5113 + $0x28] sm:$0xff]
    %v5120 = vld [vmem:[%s5113 + $0x30] sm:$0xff]
    %v5121 = vld [vmem:[%s5113 + $0x38] sm:$0xff]
    %v5123 = vsel %vm98, %v5095, 0
    %v5126 = vsel %vm98, %v5096, 0
    %v5129 = vsel %vm98, %v5097, 0
    %v5132 = vsel %vm98, %v5098, 0
    %v5135 = vsel %vm98, %v5099, 0
    %v5138 = vsel %vm98, %v5100, 0
    %v5141 = vsel %vm98, %v5101, 0
    %v5144 = vsel %vm98, %v5102, 0
    %v5147 = vsel %vm98, %v5103, 0
    %v5150 = vsel %vm98, %v5104, 0
    %v5153 = vsel %vm98, %v5105, 0
    %v5156 = vsel %vm98, %v5106, 0
    %v5159 = vsel %vm98, %v5107, 0
    %v5162 = vsel %vm98, %v5108, 0
    %v5165 = vsel %vm98, %v5109, 0
    %v5168 = vsel %vm98, %v5110, 0
    %v5171 = vsel %vm98, %v5111, 0
    %v5174 = vsel %vm98, %v5112, 0
    %5176 = vmatprep.subr.mxu0 0.0
    %5177 = vmatpush1.msra.mxu0 0.0
    %5178 = vmatprep.subr.mxu0 0.0
    %5179 = vmatpush1.msra.mxu0 0.0
    %5180 = vmatprep.subr.mxu0 0.0
    %5181 = vmatpush1.msra.mxu0 0.0
    %5182 = vmatprep.subr.mxu0 0.0
    %5183 = vmatpush1.msra.mxu0 0.0
    %5184 = vmatprep.subr.mxu0 0.0
    %5185 = vmatpush1.msra.mxu0 0.0
    %5186 = vmatprep.subr.mxu0 0.0
    %5187 = vmatpush1.msra.mxu0 0.0
    %5188 = vmatprep.subr.mxu0 0.0
    %5189 = vmatpush1.msra.mxu0 0.0
    %5190 = vmatprep.subr.mxu0 0.0
    %5191 = vmatpush1.msra.mxu0 0.0
    %5192 = vmatprep.subr.mxu0 0.0
    %5193 = vmatpush1.msra.mxu0 %v5121
    %5194 = vmatprep.subr.mxu0 0.0
    %5195 = vmatpush1.msra.mxu0 %v5120
    %5196 = vmatprep.subr.mxu0 0.0
    %5197 = vmatpush1.msra.mxu0 %v5119
    %5198 = vmatprep.subr.mxu0 0.0
    %5199 = vmatpush1.msra.mxu0 %v5118
    %5200 = vmatprep.subr.mxu0 0.0
    %5201 = vmatpush1.msra.mxu0 %v5117
    %5202 = vmatprep.subr.mxu0 0.0
    %5203 = vmatpush1.msra.mxu0 %v5116
    %5204 = vmatprep.subr.mxu0 0.0
    %5205 = vmatpush1.msra.mxu0 %v5115
    %5206 = vmatprep.subr.mxu0 0.0
    %5207 = vmatpush1.msra.mxu0 %v5114
    %5208 = vmatprep.subr.mxu0 0.0
    %5209 = vmatpush2.msra.mxu0 0.0
    %5210 = vmatprep.subr.mxu0 0.0
    %5211 = vmatpush2.msra.mxu0 0.0
    %5212 = vmatprep.subr.mxu0 0.0
    %5213 = vmatpush2.msra.mxu0 0.0
    %5214 = vmatprep.subr.mxu0 0.0
    %5215 = vmatpush2.msra.mxu0 0.0
    %5216 = vmatprep.subr.mxu0 0.0
    %5217 = vmatpush2.msra.mxu0 0.0
    %5218 = vmatprep.subr.mxu0 0.0
    %5219 = vmatpush2.msra.mxu0 0.0
    %5220 = vmatprep.subr.mxu0 0.0
    %5221 = vmatpush2.msra.mxu0 0.0
    %5222 = vmatprep.subr.mxu0 0.0
    %5223 = vmatpush2.msra.mxu0 0.0
    %5224 = vmatprep.subr.mxu0 0.0
    %5225 = vmatpush2.msra.mxu0 0.0
    %5226 = vmatprep.subr.mxu0 0.0
    %5227 = vmatpush2.msra.mxu0 0.0
    %5228 = vmatprep.subr.mxu0 0.0
    %5229 = vmatpush2.msra.mxu0 0.0
    %5230 = vmatprep.subr.mxu0 0.0
    %5231 = vmatpush2.msra.mxu0 0.0
    %5232 = vmatprep.subr.mxu0 0.0
    %5233 = vmatpush2.msra.mxu0 0.0
    %5234 = vmatprep.subr.mxu0 0.0
    %5235 = vmatpush2.msra.mxu0 0.0
    %5236 = vmatprep.subr.mxu0 0.0
    %5237 = vmatpush2.msra.mxu0 0.0
    %5238 = vmatprep.subr.mxu0 0.0
    %5239 = vmatpush2.msra.mxu0 0.0
    %5240 = vmatprep.mubr.f32.mxu0 0.0
    %5241 = vmatmul.mubr.f32.gmra.mxu0 %v5123
    %v5242 = vpop.f32.mrf.mxu0
    %v5243 = vadd.f32 0.0, %v5242
    %v5244 = vpop.f32.mrf.mxu0
    %5245 = vmatprep.mubr.f32.mxu0 0.0
    %5246 = vmatmul.mubr.f32.gmra.mxu0 %v5126
    %v5247 = vpop.f32.mrf.mxu0
    %v5248 = vadd.f32 0.0, %v5247
    %v5249 = vpop.f32.mrf.mxu0
    %5250 = vmatprep.mubr.f32.mxu0 0.0
    %5251 = vmatmul.mubr.f32.gmra.mxu0 %v5129
    %v5252 = vpop.f32.mrf.mxu0
    %v5253 = vadd.f32 0.0, %v5252
    %v5254 = vpop.f32.mrf.mxu0
    %5255 = vmatprep.mubr.f32.mxu0 0.0
    %5256 = vmatmul.mubr.f32.gmra.mxu0 %v5132
    %v5257 = vpop.f32.mrf.mxu0
    %v5258 = vadd.f32 0.0, %v5257
    %v5259 = vpop.f32.mrf.mxu0
    %5260 = vmatprep.mubr.f32.mxu0 0.0
    %5261 = vmatmul.mubr.f32.gmra.mxu0 %v5135
    %v5262 = vpop.f32.mrf.mxu0
    %v5263 = vadd.f32 0.0, %v5262
    %v5264 = vpop.f32.mrf.mxu0
    %5265 = vmatprep.mubr.f32.mxu0 0.0
    %5266 = vmatmul.mubr.f32.gmra.mxu0 %v5138
    %v5267 = vpop.f32.mrf.mxu0
    %v5268 = vadd.f32 0.0, %v5267
    %v5269 = vpop.f32.mrf.mxu0
    %5270 = vmatprep.mubr.f32.mxu0 0.0
    %5271 = vmatmul.mubr.f32.gmra.mxu0 %v5141
    %v5272 = vpop.f32.mrf.mxu0
    %v5273 = vadd.f32 0.0, %v5272
    %v5274 = vpop.f32.mrf.mxu0
    %5275 = vmatprep.mubr.f32.mxu0 0.0
    %5276 = vmatmul.mubr.f32.gmra.mxu0 %v5144
    %v5277 = vpop.f32.mrf.mxu0
    %v5278 = vadd.f32 0.0, %v5277
    %v5279 = vpop.f32.mrf.mxu0
    %5280 = vmatprep.mubr.f32.mxu0 0.0
    %5281 = vmatmul.mubr.f32.gmra.mxu0 %v5147
    %v5282 = vpop.f32.mrf.mxu0
    %v5283 = vadd.f32 0.0, %v5282
    %v5284 = vpop.f32.mrf.mxu0
    %5285 = vmatprep.mubr.f32.mxu0 0.0
    %5286 = vmatmul.mubr.f32.gmra.mxu0 %v5150
    %v5287 = vpop.f32.mrf.mxu0
    %v5288 = vadd.f32 0.0, %v5287
    %v5289 = vpop.f32.mrf.mxu0
    %5290 = vmatprep.mubr.f32.mxu0 0.0
    %5291 = vmatmul.mubr.f32.gmra.mxu0 %v5153
    %v5292 = vpop.f32.mrf.mxu0
    %v5293 = vadd.f32 0.0, %v5292
    %v5294 = vpop.f32.mrf.mxu0
    %5295 = vmatprep.mubr.f32.mxu0 0.0
    %5296 = vmatmul.mubr.f32.gmra.mxu0 %v5156
    %v5297 = vpop.f32.mrf.mxu0
    %v5298 = vadd.f32 0.0, %v5297
    %v5299 = vpop.f32.mrf.mxu0
    %5300 = vmatprep.mubr.f32.mxu0 0.0
    %5301 = vmatmul.mubr.f32.gmra.mxu0 %v5159
    %v5302 = vpop.f32.mrf.mxu0
    %v5303 = vadd.f32 0.0, %v5302
    %v5304 = vpop.f32.mrf.mxu0
    %5305 = vmatprep.mubr.f32.mxu0 0.0
    %5306 = vmatmul.mubr.f32.gmra.mxu0 %v5162
    %v5307 = vpop.f32.mrf.mxu0
    %v5308 = vadd.f32 0.0, %v5307
    %v5309 = vpop.f32.mrf.mxu0
    %5310 = vmatprep.mubr.f32.mxu0 0.0
    %5311 = vmatmul.mubr.f32.gmra.mxu0 %v5165
    %v5312 = vpop.f32.mrf.mxu0
    %v5313 = vadd.f32 0.0, %v5312
    %v5314 = vpop.f32.mrf.mxu0
    %5315 = vmatprep.mubr.f32.mxu0 0.0
    %5316 = vmatmul.mubr.f32.gmra.mxu0 %v5168
    %v5317 = vpop.f32.mrf.mxu0
    %v5318 = vadd.f32 0.0, %v5317
    %v5319 = vpop.f32.mrf.mxu0
    %5320 = vmatprep.mubr.f32.mxu0 0.0
    %5321 = vmatmul.mubr.f32.gmra.mxu0 %v5171
    %v5322 = vpop.f32.mrf.mxu0
    %v5323 = vadd.f32 0.0, %v5322
    %v5324 = vpop.f32.mrf.mxu0
    %5325 = vmatprep.mubr.f32.mxu0 0.0
    %5326 = vmatmul.mubr.f32.gmra.mxu0 %v5174
    %v5327 = vpop.f32.mrf.mxu0
    %v5328 = vadd.f32 0.0, %v5327
    %v5329 = vpop.f32.mrf.mxu0
    %5330 = vdwg.mxu0
    %v5331 = vadd.f32 %v5077, %v5243
    %v5332 = vadd.f32 %v5078, %v5248
    %v5333 = vadd.f32 %v5079, %v5253
    %v5334 = vadd.f32 %v5080, %v5258
    %v5335 = vadd.f32 %v5081, %v5263
    %v5336 = vadd.f32 %v5082, %v5268
    %v5337 = vadd.f32 %v5083, %v5273
    %v5338 = vadd.f32 %v5084, %v5278
    %v5339 = vadd.f32 %v5085, %v5283
    %v5340 = vadd.f32 %v5086, %v5288
    %v5341 = vadd.f32 %v5087, %v5293
    %v5342 = vadd.f32 %v5088, %v5298
    %v5343 = vadd.f32 %v5089, %v5303
    %v5344 = vadd.f32 %v5090, %v5308
    %v5345 = vadd.f32 %v5091, %v5313
    %v5346 = vadd.f32 %v5092, %v5318
    %v5347 = vadd.f32 %v5093, %v5323
    %v5348 = vadd.f32 %v5094, %v5328
    %v5349 = vld [vmem:[#allocation2 + $0x16] sm:$0xff]
    %v5350 = vld [vmem:[#allocation2 + $0x1e] sm:$0xff]
    %v5351 = vld [vmem:[#allocation2 + $0x26] sm:$0xff]
    %v5352 = vld [vmem:[#allocation2 + $0x2e] sm:$0xff]
    %v5353 = vld [vmem:[#allocation2 + $0x36] sm:$0xff]
    %v5354 = vld [vmem:[#allocation2 + $0x3e] sm:$0xff]
    %v5355 = vld [vmem:[#allocation2 + $0x46] sm:$0xff]
    %v5356 = vld [vmem:[#allocation2 + $0x4e] sm:$0xff]
    %v5357 = vld [vmem:[#allocation2 + $0x56] sm:$0xff]
    %v5358 = vld [vmem:[#allocation2 + $0x5e] sm:$0xff]
    %v5359 = vld [vmem:[#allocation2 + $0x66] sm:$0xff]
    %v5360 = vld [vmem:[#allocation2 + $0x6e] sm:$0xff]
    %v5361 = vld [vmem:[#allocation2 + $0x76] sm:$0xff]
    %v5362 = vld [vmem:[#allocation2 + $0x7e] sm:$0xff]
    %v5363 = vld [vmem:[#allocation2 + $0x86] sm:$0xff]
    %v5364 = vld [vmem:[#allocation2 + $0x8e] sm:$0xff]
    %v5365 = vld [vmem:[#allocation2 + $0x96] sm:$0xff]
    %v5366 = vld [vmem:[#allocation2 + $0x9e] sm:$0x3]
    %s5367 = scalar_lea.vmem [#allocation5], 512
    %v5368 = vld [vmem:[%s5367] sm:$0xff]
    %v5369 = vld [vmem:[%s5367 + $0x8] sm:$0xff]
    %v5370 = vld [vmem:[%s5367 + $0x10] sm:$0xff]
    %v5371 = vld [vmem:[%s5367 + $0x18] sm:$0xff]
    %v5372 = vld [vmem:[%s5367 + $0x20] sm:$0xff]
    %v5373 = vld [vmem:[%s5367 + $0x28] sm:$0xff]
    %v5374 = vld [vmem:[%s5367 + $0x30] sm:$0xff]
    %v5375 = vld [vmem:[%s5367 + $0x38] sm:$0xff]
    %v5377 = vsel %vm98, %v5349, 0
    %v5380 = vsel %vm98, %v5350, 0
    %v5383 = vsel %vm98, %v5351, 0
    %v5386 = vsel %vm98, %v5352, 0
    %v5389 = vsel %vm98, %v5353, 0
    %v5392 = vsel %vm98, %v5354, 0
    %v5395 = vsel %vm98, %v5355, 0
    %v5398 = vsel %vm98, %v5356, 0
    %v5401 = vsel %vm98, %v5357, 0
    %v5404 = vsel %vm98, %v5358, 0
    %v5407 = vsel %vm98, %v5359, 0
    %v5410 = vsel %vm98, %v5360, 0
    %v5413 = vsel %vm98, %v5361, 0
    %v5416 = vsel %vm98, %v5362, 0
    %v5419 = vsel %vm98, %v5363, 0
    %v5422 = vsel %vm98, %v5364, 0
    %v5425 = vsel %vm98, %v5365, 0
    %v5428 = vsel %vm98, %v5366, 0
    %5430 = vmatprep.subr.mxu0 0.0
    %5431 = vmatpush1.msra.mxu0 0.0
    %5432 = vmatprep.subr.mxu0 0.0
    %5433 = vmatpush1.msra.mxu0 0.0
    %5434 = vmatprep.subr.mxu0 0.0
    %5435 = vmatpush1.msra.mxu0 0.0
    %5436 = vmatprep.subr.mxu0 0.0
    %5437 = vmatpush1.msra.mxu0 0.0
    %5438 = vmatprep.subr.mxu0 0.0
    %5439 = vmatpush1.msra.mxu0 0.0
    %5440 = vmatprep.subr.mxu0 0.0
    %5441 = vmatpush1.msra.mxu0 0.0
    %5442 = vmatprep.subr.mxu0 0.0
    %5443 = vmatpush1.msra.mxu0 0.0
    %5444 = vmatprep.subr.mxu0 0.0
    %5445 = vmatpush1.msra.mxu0 0.0
    %5446 = vmatprep.subr.mxu0 0.0
    %5447 = vmatpush1.msra.mxu0 %v5375
    %5448 = vmatprep.subr.mxu0 0.0
    %5449 = vmatpush1.msra.mxu0 %v5374
    %5450 = vmatprep.subr.mxu0 0.0
    %5451 = vmatpush1.msra.mxu0 %v5373
    %5452 = vmatprep.subr.mxu0 0.0
    %5453 = vmatpush1.msra.mxu0 %v5372
    %5454 = vmatprep.subr.mxu0 0.0
    %5455 = vmatpush1.msra.mxu0 %v5371
    %5456 = vmatprep.subr.mxu0 0.0
    %5457 = vmatpush1.msra.mxu0 %v5370
    %5458 = vmatprep.subr.mxu0 0.0
    %5459 = vmatpush1.msra.mxu0 %v5369
    %5460 = vmatprep.subr.mxu0 0.0
    %5461 = vmatpush1.msra.mxu0 %v5368
    %5462 = vmatprep.subr.mxu0 0.0
    %5463 = vmatpush2.msra.mxu0 0.0
    %5464 = vmatprep.subr.mxu0 0.0
    %5465 = vmatpush2.msra.mxu0 0.0
    %5466 = vmatprep.subr.mxu0 0.0
    %5467 = vmatpush2.msra.mxu0 0.0
    %5468 = vmatprep.subr.mxu0 0.0
    %5469 = vmatpush2.msra.mxu0 0.0
    %5470 = vmatprep.subr.mxu0 0.0
    %5471 = vmatpush2.msra.mxu0 0.0
    %5472 = vmatprep.subr.mxu0 0.0
    %5473 = vmatpush2.msra.mxu0 0.0
    %5474 = vmatprep.subr.mxu0 0.0
    %5475 = vmatpush2.msra.mxu0 0.0
    %5476 = vmatprep.subr.mxu0 0.0
    %5477 = vmatpush2.msra.mxu0 0.0
    %5478 = vmatprep.subr.mxu0 0.0
    %5479 = vmatpush2.msra.mxu0 0.0
    %5480 = vmatprep.subr.mxu0 0.0
    %5481 = vmatpush2.msra.mxu0 0.0
    %5482 = vmatprep.subr.mxu0 0.0
    %5483 = vmatpush2.msra.mxu0 0.0
    %5484 = vmatprep.subr.mxu0 0.0
    %5485 = vmatpush2.msra.mxu0 0.0
    %5486 = vmatprep.subr.mxu0 0.0
    %5487 = vmatpush2.msra.mxu0 0.0
    %5488 = vmatprep.subr.mxu0 0.0
    %5489 = vmatpush2.msra.mxu0 0.0
    %5490 = vmatprep.subr.mxu0 0.0
    %5491 = vmatpush2.msra.mxu0 0.0
    %5492 = vmatprep.subr.mxu0 0.0
    %5493 = vmatpush2.msra.mxu0 0.0
    %5494 = vmatprep.mubr.f32.mxu0 0.0
    %5495 = vmatmul.mubr.f32.gmra.mxu0 %v5377
    %v5496 = vpop.f32.mrf.mxu0
    %v5497 = vadd.f32 0.0, %v5496
    %v5498 = vpop.f32.mrf.mxu0
    %5499 = vmatprep.mubr.f32.mxu0 0.0
    %5500 = vmatmul.mubr.f32.gmra.mxu0 %v5380
    %v5501 = vpop.f32.mrf.mxu0
    %v5502 = vadd.f32 0.0, %v5501
    %v5503 = vpop.f32.mrf.mxu0
    %5504 = vmatprep.mubr.f32.mxu0 0.0
    %5505 = vmatmul.mubr.f32.gmra.mxu0 %v5383
    %v5506 = vpop.f32.mrf.mxu0
    %v5507 = vadd.f32 0.0, %v5506
    %v5508 = vpop.f32.mrf.mxu0
    %5509 = vmatprep.mubr.f32.mxu0 0.0
    %5510 = vmatmul.mubr.f32.gmra.mxu0 %v5386
    %v5511 = vpop.f32.mrf.mxu0
    %v5512 = vadd.f32 0.0, %v5511
    %v5513 = vpop.f32.mrf.mxu0
    %5514 = vmatprep.mubr.f32.mxu0 0.0
    %5515 = vmatmul.mubr.f32.gmra.mxu0 %v5389
    %v5516 = vpop.f32.mrf.mxu0
    %v5517 = vadd.f32 0.0, %v5516
    %v5518 = vpop.f32.mrf.mxu0
    %5519 = vmatprep.mubr.f32.mxu0 0.0
    %5520 = vmatmul.mubr.f32.gmra.mxu0 %v5392
    %v5521 = vpop.f32.mrf.mxu0
    %v5522 = vadd.f32 0.0, %v5521
    %v5523 = vpop.f32.mrf.mxu0
    %5524 = vmatprep.mubr.f32.mxu0 0.0
    %5525 = vmatmul.mubr.f32.gmra.mxu0 %v5395
    %v5526 = vpop.f32.mrf.mxu0
    %v5527 = vadd.f32 0.0, %v5526
    %v5528 = vpop.f32.mrf.mxu0
    %5529 = vmatprep.mubr.f32.mxu0 0.0
    %5530 = vmatmul.mubr.f32.gmra.mxu0 %v5398
    %v5531 = vpop.f32.mrf.mxu0
    %v5532 = vadd.f32 0.0, %v5531
    %v5533 = vpop.f32.mrf.mxu0
    %5534 = vmatprep.mubr.f32.mxu0 0.0
    %5535 = vmatmul.mubr.f32.gmra.mxu0 %v5401
    %v5536 = vpop.f32.mrf.mxu0
    %v5537 = vadd.f32 0.0, %v5536
    %v5538 = vpop.f32.mrf.mxu0
    %5539 = vmatprep.mubr.f32.mxu0 0.0
    %5540 = vmatmul.mubr.f32.gmra.mxu0 %v5404
    %v5541 = vpop.f32.mrf.mxu0
    %v5542 = vadd.f32 0.0, %v5541
    %v5543 = vpop.f32.mrf.mxu0
    %5544 = vmatprep.mubr.f32.mxu0 0.0
    %5545 = vmatmul.mubr.f32.gmra.mxu0 %v5407
    %v5546 = vpop.f32.mrf.mxu0
    %v5547 = vadd.f32 0.0, %v5546
    %v5548 = vpop.f32.mrf.mxu0
    %5549 = vmatprep.mubr.f32.mxu0 0.0
    %5550 = vmatmul.mubr.f32.gmra.mxu0 %v5410
    %v5551 = vpop.f32.mrf.mxu0
    %v5552 = vadd.f32 0.0, %v5551
    %v5553 = vpop.f32.mrf.mxu0
    %5554 = vmatprep.mubr.f32.mxu0 0.0
    %5555 = vmatmul.mubr.f32.gmra.mxu0 %v5413
    %v5556 = vpop.f32.mrf.mxu0
    %v5557 = vadd.f32 0.0, %v5556
    %v5558 = vpop.f32.mrf.mxu0
    %5559 = vmatprep.mubr.f32.mxu0 0.0
    %5560 = vmatmul.mubr.f32.gmra.mxu0 %v5416
    %v5561 = vpop.f32.mrf.mxu0
    %v5562 = vadd.f32 0.0, %v5561
    %v5563 = vpop.f32.mrf.mxu0
    %5564 = vmatprep.mubr.f32.mxu0 0.0
    %5565 = vmatmul.mubr.f32.gmra.mxu0 %v5419
    %v5566 = vpop.f32.mrf.mxu0
    %v5567 = vadd.f32 0.0, %v5566
    %v5568 = vpop.f32.mrf.mxu0
    %5569 = vmatprep.mubr.f32.mxu0 0.0
    %5570 = vmatmul.mubr.f32.gmra.mxu0 %v5422
    %v5571 = vpop.f32.mrf.mxu0
    %v5572 = vadd.f32 0.0, %v5571
    %v5573 = vpop.f32.mrf.mxu0
    %5574 = vmatprep.mubr.f32.mxu0 0.0
    %5575 = vmatmul.mubr.f32.gmra.mxu0 %v5425
    %v5576 = vpop.f32.mrf.mxu0
    %v5577 = vadd.f32 0.0, %v5576
    %v5578 = vpop.f32.mrf.mxu0
    %5579 = vmatprep.mubr.f32.mxu0 0.0
    %5580 = vmatmul.mubr.f32.gmra.mxu0 %v5428
    %v5581 = vpop.f32.mrf.mxu0
    %v5582 = vadd.f32 0.0, %v5581
    %v5583 = vpop.f32.mrf.mxu0
    %5584 = vdwg.mxu0
    %v5585 = vadd.f32 %v5331, %v5497
    %v5586 = vadd.f32 %v5332, %v5502
    %v5587 = vadd.f32 %v5333, %v5507
    %v5588 = vadd.f32 %v5334, %v5512
    %v5589 = vadd.f32 %v5335, %v5517
    %v5590 = vadd.f32 %v5336, %v5522
    %v5591 = vadd.f32 %v5337, %v5527
    %v5592 = vadd.f32 %v5338, %v5532
    %v5593 = vadd.f32 %v5339, %v5537
    %v5594 = vadd.f32 %v5340, %v5542
    %v5595 = vadd.f32 %v5341, %v5547
    %v5596 = vadd.f32 %v5342, %v5552
    %v5597 = vadd.f32 %v5343, %v5557
    %v5598 = vadd.f32 %v5344, %v5562
    %v5599 = vadd.f32 %v5345, %v5567
    %v5600 = vadd.f32 %v5346, %v5572
    %v5601 = vadd.f32 %v5347, %v5577
    %v5602 = vadd.f32 %v5348, %v5582
    %v5603 = vmul.f32 %v5585, %v2371
    %v5604 = vmul.f32 %v5586, %v2376
    %v5605 = vmul.f32 %v5587, %v2381
    %v5606 = vmul.f32 %v5588, %v2386
    %v5607 = vmul.f32 %v5589, %v2391
    %v5608 = vmul.f32 %v5590, %v2396
    %v5609 = vmul.f32 %v5591, %v2401
    %v5610 = vmul.f32 %v5592, %v2406
    %v5611 = vmul.f32 %v5593, %v2411
    %v5612 = vmul.f32 %v5594, %v2416
    %v5613 = vmul.f32 %v5595, %v2421
    %v5614 = vmul.f32 %v5596, %v2426
    %v5615 = vmul.f32 %v5597, %v2431
    %v5616 = vmul.f32 %v5598, %v2436
    %v5617 = vmul.f32 %v5599, %v2441
    %v5618 = vmul.f32 %v5600, %v2446
    %v5619 = vmul.f32 %v5601, %v2451
    %v5620 = vmul.f32 %v5602, %v2456
    %v5621 = vsel %vm98, %v5603, 0.0
    %v5622 = vsel %vm98, %v5604, 0.0
    %v5623 = vadd.f32 %v5621, %v5622
    %v5624 = vsel %vm98, %v5605, 0.0
    %v5625 = vadd.f32 %v5623, %v5624
    %v5626 = vsel %vm98, %v5606, 0.0
    %v5627 = vadd.f32 %v5625, %v5626
    %v5628 = vsel %vm98, %v5607, 0.0
    %v5629 = vadd.f32 %v5627, %v5628
    %v5630 = vsel %vm98, %v5608, 0.0
    %v5631 = vadd.f32 %v5629, %v5630
    %v5632 = vsel %vm98, %v5609, 0.0
    %v5633 = vadd.f32 %v5631, %v5632
    %v5634 = vsel %vm98, %v5610, 0.0
    %v5635 = vadd.f32 %v5633, %v5634
    %v5636 = vsel %vm98, %v5611, 0.0
    %v5637 = vadd.f32 %v5635, %v5636
    %v5638 = vsel %vm98, %v5612, 0.0
    %v5639 = vadd.f32 %v5637, %v5638
    %v5640 = vsel %vm98, %v5613, 0.0
    %v5641 = vadd.f32 %v5639, %v5640
    %v5642 = vsel %vm98, %v5614, 0.0
    %v5643 = vadd.f32 %v5641, %v5642
    %v5644 = vsel %vm98, %v5615, 0.0
    %v5645 = vadd.f32 %v5643, %v5644
    %v5646 = vsel %vm98, %v5616, 0.0
    %v5647 = vadd.f32 %v5645, %v5646
    %v5648 = vsel %vm98, %v5617, 0.0
    %v5649 = vadd.f32 %v5647, %v5648
    %v5650 = vsel %vm98, %v5618, 0.0
    %v5651 = vadd.f32 %v5649, %v5650
    %v5652 = vsel %vm98, %v5619, 0.0
    %v5653 = vadd.f32 %v5651, %v5652
    %v5654 = vsel %vm2509, %v5620, 0.0
    %v5655 = vadd.f32 %v5653, %v5654
    %v5656 = vrot.slane %v5655, 4
    %v5657 = vadd.f32 %v5655, %v5656
    %v5658 = vrot.slane %v5657, 2
    %v5659 = vadd.f32 %v5657, %v5658
    %v5660 = vrot.slane %v5659, 1
    %v5661 = vadd.f32 %v5659, %v5660
    %v5662 = vmul.f32 %v5603, %v5585
    %v5663 = vmul.f32 %v5604, %v5586
    %v5664 = vmul.f32 %v5605, %v5587
    %v5665 = vmul.f32 %v5606, %v5588
    %v5666 = vmul.f32 %v5607, %v5589
    %v5667 = vmul.f32 %v5608, %v5590
    %v5668 = vmul.f32 %v5609, %v5591
    %v5669 = vmul.f32 %v5610, %v5592
    %v5670 = vmul.f32 %v5611, %v5593
    %v5671 = vmul.f32 %v5612, %v5594
    %v5672 = vmul.f32 %v5613, %v5595
    %v5673 = vmul.f32 %v5614, %v5596
    %v5674 = vmul.f32 %v5615, %v5597
    %v5675 = vmul.f32 %v5616, %v5598
    %v5676 = vmul.f32 %v5617, %v5599
    %v5677 = vmul.f32 %v5618, %v5600
    %v5678 = vmul.f32 %v5619, %v5601
    %v5679 = vmul.f32 %v5620, %v5602
    %v5680 = vsel %vm98, %v5662, 0.0
    %v5681 = vsel %vm98, %v5663, 0.0
    %v5682 = vadd.f32 %v5680, %v5681
    %v5683 = vsel %vm98, %v5664, 0.0
    %v5684 = vadd.f32 %v5682, %v5683
    %v5685 = vsel %vm98, %v5665, 0.0
    %v5686 = vadd.f32 %v5684, %v5685
    %v5687 = vsel %vm98, %v5666, 0.0
    %v5688 = vadd.f32 %v5686, %v5687
    %v5689 = vsel %vm98, %v5667, 0.0
    %v5690 = vadd.f32 %v5688, %v5689
    %v5691 = vsel %vm98, %v5668, 0.0
    %v5692 = vadd.f32 %v5690, %v5691
    %v5693 = vsel %vm98, %v5669, 0.0
    %v5694 = vadd.f32 %v5692, %v5693
    %v5695 = vsel %vm98, %v5670, 0.0
    %v5696 = vadd.f32 %v5694, %v5695
    %v5697 = vsel %vm98, %v5671, 0.0
    %v5698 = vadd.f32 %v5696, %v5697
    %v5699 = vsel %vm98, %v5672, 0.0
    %v5700 = vadd.f32 %v5698, %v5699
    %v5701 = vsel %vm98, %v5673, 0.0
    %v5702 = vadd.f32 %v5700, %v5701
    %v5703 = vsel %vm98, %v5674, 0.0
    %v5704 = vadd.f32 %v5702, %v5703
    %v5705 = vsel %vm98, %v5675, 0.0
    %v5706 = vadd.f32 %v5704, %v5705
    %v5707 = vsel %vm98, %v5676, 0.0
    %v5708 = vadd.f32 %v5706, %v5707
    %v5709 = vsel %vm98, %v5677, 0.0
    %v5710 = vadd.f32 %v5708, %v5709
    %v5711 = vsel %vm98, %v5678, 0.0
    %v5712 = vadd.f32 %v5710, %v5711
    %v5713 = vsel %vm2509, %v5679, 0.0
    %v5714 = vadd.f32 %v5712, %v5713
    %v5715 = vrot.slane %v5714, 4
    %v5716 = vadd.f32 %v5714, %v5715
    %v5717 = vrot.slane %v5716, 2
    %v5718 = vadd.f32 %v5716, %v5717
    %v5719 = vrot.slane %v5718, 1
    %v5720 = vadd.f32 %v5718, %v5719
    %v5721 = vld [vmem:[%s8] sm:$0xff]
    %v5722 = vld [vmem:[%s8 + $0x8] sm:$0xff]
    %v5723 = vld [vmem:[%s8 + $0x10] sm:$0xff]
    %v5724 = vld [vmem:[%s8 + $0x18] sm:$0xff]
    %v5725 = vld [vmem:[%s8 + $0x20] sm:$0xff]
    %v5726 = vld [vmem:[%s8 + $0x28] sm:$0xff]
    %v5727 = vld [vmem:[%s8 + $0x30] sm:$0xff]
    %v5728 = vld [vmem:[%s8 + $0x38] sm:$0xff]
    %v5730 = vsel %vm98, %v5661, 0
    %5732 = vmatprep.subr.mxu0 0.0
    %5733 = vmatpush1.msra.mxu0 0.0
    %5734 = vmatprep.subr.mxu0 0.0
    %5735 = vmatpush1.msra.mxu0 0.0
    %5736 = vmatprep.subr.mxu0 0.0
    %5737 = vmatpush1.msra.mxu0 0.0
    %5738 = vmatprep.subr.mxu0 0.0
    %5739 = vmatpush1.msra.mxu0 0.0
    %5740 = vmatprep.subr.mxu0 0.0
    %5741 = vmatpush1.msra.mxu0 0.0
    %5742 = vmatprep.subr.mxu0 0.0
    %5743 = vmatpush1.msra.mxu0 0.0
    %5744 = vmatprep.subr.mxu0 0.0
    %5745 = vmatpush1.msra.mxu0 0.0
    %5746 = vmatprep.subr.mxu0 0.0
    %5747 = vmatpush1.msra.mxu0 0.0
    %5748 = vmatprep.subr.mxu0 0.0
    %5749 = vmatpush1.msra.mxu0 %v5728
    %5750 = vmatprep.subr.mxu0 0.0
    %5751 = vmatpush1.msra.mxu0 %v5727
    %5752 = vmatprep.subr.mxu0 0.0
    %5753 = vmatpush1.msra.mxu0 %v5726
    %5754 = vmatprep.subr.mxu0 0.0
    %5755 = vmatpush1.msra.mxu0 %v5725
    %5756 = vmatprep.subr.mxu0 0.0
    %5757 = vmatpush1.msra.mxu0 %v5724
    %5758 = vmatprep.subr.mxu0 0.0
    %5759 = vmatpush1.msra.mxu0 %v5723
    %5760 = vmatprep.subr.mxu0 0.0
    %5761 = vmatpush1.msra.mxu0 %v5722
    %5762 = vmatprep.subr.mxu0 0.0
    %5763 = vmatpush1.msra.mxu0 %v5721
    %5764 = vmatprep.subr.mxu0 0.0
    %5765 = vmatpush2.msra.mxu0 0.0
    %5766 = vmatprep.subr.mxu0 0.0
    %5767 = vmatpush2.msra.mxu0 0.0
    %5768 = vmatprep.subr.mxu0 0.0
    %5769 = vmatpush2.msra.mxu0 0.0
    %5770 = vmatprep.subr.mxu0 0.0
    %5771 = vmatpush2.msra.mxu0 0.0
    %5772 = vmatprep.subr.mxu0 0.0
    %5773 = vmatpush2.msra.mxu0 0.0
    %5774 = vmatprep.subr.mxu0 0.0
    %5775 = vmatpush2.msra.mxu0 0.0
    %5776 = vmatprep.subr.mxu0 0.0
    %5777 = vmatpush2.msra.mxu0 0.0
    %5778 = vmatprep.subr.mxu0 0.0
    %5779 = vmatpush2.msra.mxu0 0.0
    %5780 = vmatprep.subr.mxu0 0.0
    %5781 = vmatpush2.msra.mxu0 0.0
    %5782 = vmatprep.subr.mxu0 0.0
    %5783 = vmatpush2.msra.mxu0 0.0
    %5784 = vmatprep.subr.mxu0 0.0
    %5785 = vmatpush2.msra.mxu0 0.0
    %5786 = vmatprep.subr.mxu0 0.0
    %5787 = vmatpush2.msra.mxu0 0.0
    %5788 = vmatprep.subr.mxu0 0.0
    %5789 = vmatpush2.msra.mxu0 0.0
    %5790 = vmatprep.subr.mxu0 0.0
    %5791 = vmatpush2.msra.mxu0 0.0
    %5792 = vmatprep.subr.mxu0 0.0
    %5793 = vmatpush2.msra.mxu0 0.0
    %5794 = vmatprep.subr.mxu0 0.0
    %5795 = vmatpush2.msra.mxu0 0.0
    %5796 = vmatprep.mubr.f32.mxu0 0.0
    %5797 = vmatmul.mubr.f32.gmra.mxu0 %v5730
    %v5798 = vpop.f32.mrf.mxu0
    %v5799 = vadd.f32 0.0, %v5798
    %v5800 = vpop.f32.mrf.mxu0
    %5801 = vdwg.mxu0
    %v5803 = vsel %vm98, %v5720, 0
    %5805 = vmatprep.subr.mxu0 0.0
    %5806 = vmatpush1.msra.mxu0 0.0
    %5807 = vmatprep.subr.mxu0 0.0
    %5808 = vmatpush1.msra.mxu0 0.0
    %5809 = vmatprep.subr.mxu0 0.0
    %5810 = vmatpush1.msra.mxu0 0.0
    %5811 = vmatprep.subr.mxu0 0.0
    %5812 = vmatpush1.msra.mxu0 0.0
    %5813 = vmatprep.subr.mxu0 0.0
    %5814 = vmatpush1.msra.mxu0 0.0
    %5815 = vmatprep.subr.mxu0 0.0
    %5816 = vmatpush1.msra.mxu0 0.0
    %5817 = vmatprep.subr.mxu0 0.0
    %5818 = vmatpush1.msra.mxu0 0.0
    %5819 = vmatprep.subr.mxu0 0.0
    %5820 = vmatpush1.msra.mxu0 0.0
    %5821 = vmatprep.subr.mxu0 0.0
    %5822 = vmatpush1.msra.mxu0 %v5728
    %5823 = vmatprep.subr.mxu0 0.0
    %5824 = vmatpush1.msra.mxu0 %v5727
    %5825 = vmatprep.subr.mxu0 0.0
    %5826 = vmatpush1.msra.mxu0 %v5726
    %5827 = vmatprep.subr.mxu0 0.0
    %5828 = vmatpush1.msra.mxu0 %v5725
    %5829 = vmatprep.subr.mxu0 0.0
    %5830 = vmatpush1.msra.mxu0 %v5724
    %5831 = vmatprep.subr.mxu0 0.0
    %5832 = vmatpush1.msra.mxu0 %v5723
    %5833 = vmatprep.subr.mxu0 0.0
    %5834 = vmatpush1.msra.mxu0 %v5722
    %5835 = vmatprep.subr.mxu0 0.0
    %5836 = vmatpush1.msra.mxu0 %v5721
    %5837 = vmatprep.subr.mxu0 0.0
    %5838 = vmatpush2.msra.mxu0 0.0
    %5839 = vmatprep.subr.mxu0 0.0
    %5840 = vmatpush2.msra.mxu0 0.0
    %5841 = vmatprep.subr.mxu0 0.0
    %5842 = vmatpush2.msra.mxu0 0.0
    %5843 = vmatprep.subr.mxu0 0.0
    %5844 = vmatpush2.msra.mxu0 0.0
    %5845 = vmatprep.subr.mxu0 0.0
    %5846 = vmatpush2.msra.mxu0 0.0
    %5847 = vmatprep.subr.mxu0 0.0
    %5848 = vmatpush2.msra.mxu0 0.0
    %5849 = vmatprep.subr.mxu0 0.0
    %5850 = vmatpush2.msra.mxu0 0.0
    %5851 = vmatprep.subr.mxu0 0.0
    %5852 = vmatpush2.msra.mxu0 0.0
    %5853 = vmatprep.subr.mxu0 0.0
    %5854 = vmatpush2.msra.mxu0 0.0
    %5855 = vmatprep.subr.mxu0 0.0
    %5856 = vmatpush2.msra.mxu0 0.0
    %5857 = vmatprep.subr.mxu0 0.0
    %5858 = vmatpush2.msra.mxu0 0.0
    %5859 = vmatprep.subr.mxu0 0.0
    %5860 = vmatpush2.msra.mxu0 0.0
    %5861 = vmatprep.subr.mxu0 0.0
    %5862 = vmatpush2.msra.mxu0 0.0
    %5863 = vmatprep.subr.mxu0 0.0
    %5864 = vmatpush2.msra.mxu0 0.0
    %5865 = vmatprep.subr.mxu0 0.0
    %5866 = vmatpush2.msra.mxu0 0.0
    %5867 = vmatprep.subr.mxu0 0.0
    %5868 = vmatpush2.msra.mxu0 0.0
    %5869 = vmatprep.mubr.f32.mxu0 0.0
    %5870 = vmatmul.mubr.f32.gmra.mxu0 %v5803
    %v5871 = vpop.f32.mrf.mxu0
    %v5872 = vadd.f32 0.0, %v5871
    %v5873 = vpop.f32.mrf.mxu0
    %5874 = vdwg.mxu0
    %v5875 = vmul.f32 %v5799, 0.0013020834
    %v5876 = vmul.f32 %v5872, 0.0013020834
    %v5877 = vmul.f32 %v5875, %v5875
    %v5878 = vsub.f32 %v5876, %v5877
    %v5879 = vmax.f32 %v5878, 0.0
    %v5880 = vld [vmem:[%s5] sm:$0x1]
    %v5881 = vadd.f32 %v5879, 1e-05
    %v5882 = vrsqrt.pop %v5881
    %v5883 = vmul.f32 %v5880, %v5882
    %v5884 = vld [vmem:[%s6] sm:$0x1]
    %v5885 = vmul.f32 %v5875, %v5883
    %v5886 = vsub.f32 %v5884, %v5885
    %v5887 = vld [vmem:[%s0 + $0xb] sm:$0xff]
    %v5888 = vld [vmem:[%s0 + $0x13] sm:$0xff]
    %v5889 = vld [vmem:[%s0 + $0x1b] sm:$0xff]
    %v5890 = vld [vmem:[%s0 + $0x23] sm:$0xff]
    %v5891 = vld [vmem:[%s0 + $0x2b] sm:$0xff]
    %v5892 = vld [vmem:[%s0 + $0x33] sm:$0xff]
    %v5893 = vld [vmem:[%s0 + $0x3b] sm:$0xff]
    %v5894 = vld [vmem:[%s0 + $0x43] sm:$0xff]
    %v5895 = vld [vmem:[%s0 + $0x4b] sm:$0xff]
    %v5896 = vld [vmem:[%s0 + $0x53] sm:$0xff]
    %v5897 = vld [vmem:[%s0 + $0x5b] sm:$0xff]
    %v5898 = vld [vmem:[%s0 + $0x63] sm:$0xff]
    %v5899 = vld [vmem:[%s0 + $0x6b] sm:$0xff]
    %v5900 = vld [vmem:[%s0 + $0x73] sm:$0xff]
    %v5901 = vld [vmem:[%s0 + $0x7b] sm:$0xff]
    %v5902 = vld [vmem:[%s0 + $0x83] sm:$0xff]
    %v5903 = vld [vmem:[%s0 + $0x8b] sm:$0xff]
    %v5904 = vld [vmem:[%s0 + $0x93] sm:$0x3]
    %v5906 = vlaneseq
    %v5907 = vshrl.u32 %v5906, 7
    %v5908 = vsub.s32 0, %v5907
    %v5909 = vrot.slane %v5883, %v5908
    %v5911 = vmul.f32 %v5585, %v5909
    %v5912 = vmul.f32 %v5586, %v5909
    %v5913 = vmul.f32 %v5587, %v5909
    %v5914 = vmul.f32 %v5588, %v5909
    %v5915 = vmul.f32 %v5589, %v5909
    %v5916 = vmul.f32 %v5590, %v5909
    %v5917 = vmul.f32 %v5591, %v5909
    %v5918 = vmul.f32 %v5592, %v5909
    %v5919 = vmul.f32 %v5593, %v5909
    %v5920 = vmul.f32 %v5594, %v5909
    %v5921 = vmul.f32 %v5595, %v5909
    %v5922 = vmul.f32 %v5596, %v5909
    %v5923 = vmul.f32 %v5597, %v5909
    %v5924 = vmul.f32 %v5598, %v5909
    %v5925 = vmul.f32 %v5599, %v5909
    %v5926 = vmul.f32 %v5600, %v5909
    %v5927 = vmul.f32 %v5601, %v5909
    %v5928 = vmul.f32 %v5602, %v5909
    %v5930 = vlaneseq
    %v5931 = vshrl.u32 %v5930, 7
    %v5932 = vsub.s32 0, %v5931
    %v5933 = vrot.slane %v5886, %v5932
    %v5935 = vadd.f32 %v5911, %v5933
    %v5936 = vadd.f32 %v5912, %v5933
    %v5937 = vadd.f32 %v5913, %v5933
    %v5938 = vadd.f32 %v5914, %v5933
    %v5939 = vadd.f32 %v5915, %v5933
    %v5940 = vadd.f32 %v5916, %v5933
    %v5941 = vadd.f32 %v5917, %v5933
    %v5942 = vadd.f32 %v5918, %v5933
    %v5943 = vadd.f32 %v5919, %v5933
    %v5944 = vadd.f32 %v5920, %v5933
    %v5945 = vadd.f32 %v5921, %v5933
    %v5946 = vadd.f32 %v5922, %v5933
    %v5947 = vadd.f32 %v5923, %v5933
    %v5948 = vadd.f32 %v5924, %v5933
    %v5949 = vadd.f32 %v5925, %v5933
    %v5950 = vadd.f32 %v5926, %v5933
    %v5951 = vadd.f32 %v5927, %v5933
    %v5952 = vadd.f32 %v5928, %v5933
    %v5953 = vadd.f32 %v5887, %v5935
    %v5954 = vadd.f32 %v5888, %v5936
    %v5955 = vadd.f32 %v5889, %v5937
    %v5956 = vadd.f32 %v5890, %v5938
    %v5957 = vadd.f32 %v5891, %v5939
    %v5958 = vadd.f32 %v5892, %v5940
    %v5959 = vadd.f32 %v5893, %v5941
    %v5960 = vadd.f32 %v5894, %v5942
    %v5961 = vadd.f32 %v5895, %v5943
    %v5962 = vadd.f32 %v5896, %v5944
    %v5963 = vadd.f32 %v5897, %v5945
    %v5964 = vadd.f32 %v5898, %v5946
    %v5965 = vadd.f32 %v5899, %v5947
    %v5966 = vadd.f32 %v5900, %v5948
    %v5967 = vadd.f32 %v5901, %v5949
    %v5968 = vadd.f32 %v5902, %v5950
    %v5969 = vadd.f32 %v5903, %v5951
    %v5970 = vadd.f32 %v5904, %v5952
    %5971 = vst.msk [vmem:[%s9 + $0xb] sm:$0xff] %vm98, %v5953
    %5972 = vst.msk [vmem:[%s9 + $0x13] sm:$0xff] %vm98, %v5954
    %5973 = vst.msk [vmem:[%s9 + $0x1b] sm:$0xff] %vm98, %v5955
    %5974 = vst.msk [vmem:[%s9 + $0x23] sm:$0xff] %vm98, %v5956
    %5975 = vst.msk [vmem:[%s9 + $0x2b] sm:$0xff] %vm98, %v5957
    %5976 = vst.msk [vmem:[%s9 + $0x33] sm:$0xff] %vm98, %v5958
    %5977 = vst.msk [vmem:[%s9 + $0x3b] sm:$0xff] %vm98, %v5959
    %5978 = vst.msk [vmem:[%s9 + $0x43] sm:$0xff] %vm98, %v5960
    %5979 = vst.msk [vmem:[%s9 + $0x4b] sm:$0xff] %vm98, %v5961
    %5980 = vst.msk [vmem:[%s9 + $0x53] sm:$0xff] %vm98, %v5962
    %5981 = vst.msk [vmem:[%s9 + $0x5b] sm:$0xff] %vm98, %v5963
    %5982 = vst.msk [vmem:[%s9 + $0x63] sm:$0xff] %vm98, %v5964
    %5983 = vst.msk [vmem:[%s9 + $0x6b] sm:$0xff] %vm98, %v5965
    %5984 = vst.msk [vmem:[%s9 + $0x73] sm:$0xff] %vm98, %v5966
    %5985 = vst.msk [vmem:[%s9 + $0x7b] sm:$0xff] %vm98, %v5967
    %5986 = vst.msk [vmem:[%s9 + $0x83] sm:$0xff] %vm98, %v5968
    %5987 = vst.msk [vmem:[%s9 + $0x8b] sm:$0xff] %vm98, %v5969
    %5988 = vst.msk [vmem:[%s9 + $0x93] sm:$0x3] %vm2509, %v5970
    // Predicated region
    $region46: #{tpu_custom_call.1} parent=1 // pred_check
      _
    $region47: #{tpu_custom_call.1} parent=1 // pred_check_branch
      %5990 = sbr.rel (0) target = $region49
    $region48: #{tpu_custom_call.1} parent=1 // pred_region
      _
    $region49: #{tpu_custom_call.1} parent=1 // pred_fallthru
      _
    // Predicated region
    $region50: #{tpu_custom_call.1} parent=1 // pred_check
      _
    $region51: #{tpu_custom_call.1} parent=1 // pred_check_branch
      %5992 = sbr.rel (0) target = $region53
    $region52: #{tpu_custom_call.1} parent=1 // pred_region
      _
    $region53: #{tpu_custom_call.1} parent=1 // pred_fallthru
      _
    %5993 = vsyncpa [#allocation4], 1
    %5994 = vsyncpa [#allocation6], 1

</llo_original>
